<compile_context>
chip_gen: v7x
topology: tpu7x:2x2x1
jax: 0.10.0
libtpu: 0.0.40
codegen_flags: <defaults>
</compile_context>

<pallas_src>
import functools

import jax
import jax.numpy as jnp
from jax import lax
from jax.experimental import pallas as pl
from jax.experimental.pallas import tpu as pltpu


def _silu(x):
    # x * sigmoid(x), written explicitly so kernel and reference use the same formula.
    return x * (1.0 / (1.0 + jnp.exp(-x)))


def _compute_angle(v1, v2, eps=1e-8):
    # Faithful port of compute_angle (F.normalize uses eps=1e-12).
    n1 = jnp.maximum(jnp.linalg.norm(v1, axis=-1, keepdims=True), 1e-12)
    n2 = jnp.maximum(jnp.linalg.norm(v2, axis=-1, keepdims=True), 1e-12)
    cos = jnp.sum((v1 / n1) * (v2 / n2), axis=-1)
    cos = jnp.clip(cos, -1.0 + eps, 1.0 - eps)
    return jnp.arccos(cos)[..., None]


def _dimenet_kernel(ef_ref, row_ref, x0_ref, nmask_ref,
                    w1_ref, b1_ref, w2_ref, b2_ref,
                    u1_ref, c1_ref, u2_ref, c2_ref,
                    x_out_ref,
                    agg_sc, h1_sc, msg_sc,
                    *, num_layers, dim):
    L, D = num_layers, dim
    f32 = jnp.float32
    t = pl.program_id(1)                       # edge-tile index within this molecule

    @pl.when(t == 0)
    def _init():
        agg_sc[...] = jnp.zeros_like(agg_sc)

    # ---- fused first edge-linear of ALL layers: one [TE, K] @ [K, L*D] MXU matmul ----
    # Result goes straight into VMEM scratch so the wide slab never sits in vregs.
    h1_sc[...] = jnp.dot(ef_ref[...], w1_ref[...], preferred_element_type=f32)

    # ---- per-layer bias + SiLU + second edge-linear, 128-lane slices from the scratch ----
    for l in range(L):
        h = _silu(h1_sc[:, l * D:(l + 1) * D] + b1_ref[:, l * D:(l + 1) * D])
        msg_sc[:, l * D:(l + 1) * D] = (
            jnp.dot(h, w2_ref[l], preferred_element_type=f32) + b2_ref[l])

    # ---- fused masked scatter-add of all layers: one [N, TE] @ [TE, L*D] MXU matmul ----
    # Edge validity is folded into the row indices (-1 never matches a node id).
    N = agg_sc.shape[0]
    TE = ef_ref.shape[0]
    node_ids = lax.broadcasted_iota(jnp.int32, (N, TE), 0)
    ohT = (node_ids == row_ref[...]).astype(f32)                   # [N, TE]
    agg_sc[...] += jnp.dot(ohT, msg_sc[...], preferred_element_type=f32)

    # ---- finalize once per molecule: per-layer update MLPs + padding mask ----
    @pl.when(t == pl.num_programs(1) - 1)
    def _finalize():
        x = x0_ref[...]                                            # [N, D] embedded tokens
        agg = agg_sc[...]
        for l in range(L):
            u = _silu(jnp.dot(agg[:, l * D:(l + 1) * D], u1_ref[l],
                              preferred_element_type=f32) + c1_ref[l])
            x = x + jnp.dot(u, u2_ref[l], preferred_element_type=f32) + c2_ref[l]
        x_out_ref[...] = (x * nmask_ref[...]).astype(x_out_ref.dtype)


def dimenet_forward(src_tokens, padded_coordinates, src_distance, src_edge_type, params, *,
                    num_layers, embed_dim, rbf_dim, cutoff=6.0, gamma=10.0,
                    padding_idx=0, edge_tile=256):
    """Pallas implementation of SimpleDimeNetPlusPlusModel.forward.

    src_distance / src_edge_type are accepted for signature fidelity but (like the PyTorch
    module) unused: distances are recomputed from the coordinates via the radius graph.
    """
    del src_distance, src_edge_type
    B, N = src_tokens.shape
    BN = B * N
    D, R, L = embed_dim, rbf_dim, num_layers
    assert N % 8 == 0, "N must be a multiple of 8 (sublane tiling of the node dimension)"
    assert D % 128 == 0, "embed_dim must be a multiple of 128 (lane tiling)"
    assert edge_tile % 128 == 0, "edge_tile must be a multiple of 128"

    f32 = jnp.float32
    tokens = src_tokens.astype(jnp.int32)
    padding_mask = src_tokens == padding_idx
    valid_node = tokens != padding_idx                                   # [B, N]
    coord = padded_coordinates.reshape(B, N, 3).astype(f32)

    # --- fixed-size masked per-molecule radius graph (replaces torch_cluster.radius_graph) ---
    li = jnp.repeat(jnp.arange(N, dtype=jnp.int32), N)                   # [N*N] local row
    lj = jnp.tile(jnp.arange(N, dtype=jnp.int32), N)                     # [N*N] local col
    v_ij = coord[:, li] - coord[:, lj]                                   # [B, N*N, 3]
    dist = jnp.sqrt(jnp.sum(v_ij * v_ij, axis=-1))                       # [B, N*N]
    valid = ((li != lj)[None, :] & valid_node[:, li] & valid_node[:, lj]
             & (dist < cutoff))                                          # [B, N*N]

    # --- lane-aligned edge features: [rbf | angle | zero-pad] to K (K-dim is free in the MXU) ---
    K = max(128, ((R + 1 + 127) // 128) * 128)
    centers = jnp.linspace(0.0, cutoff, R, dtype=f32)
    rbf = jnp.exp(-gamma * (dist[..., None] - centers) ** 2)             # [B, N*N, R]
    angle = _compute_angle(v_ij, -v_ij)                                  # [B, N*N, 1]
    ef = jnp.concatenate(
        [rbf, angle, jnp.zeros((B, N * N, K - R - 1), f32)], axis=-1)    # [B, N*N, K]

    # fold validity into the row index (-1 never scatters anywhere)
    row_local = jnp.where(valid, li[None, :], -1).astype(jnp.int32)      # [B, N*N]

    # pad per-molecule edge count to a multiple of the edge tile (padded edges have row = -1)
    TE = edge_tile
    E_b = ((N * N + TE - 1) // TE) * TE
    pad = E_b - N * N
    ef = jnp.pad(ef, ((0, 0), (0, pad), (0, 0)))
    row_local = jnp.pad(row_local, ((0, 0), (0, pad)), constant_values=-1)
    n_tiles = E_b // TE
    ef_flat = ef.reshape(B * E_b, K)
    row_flat = row_local.reshape(1, B * E_b)

    # --- stack per-layer weights for the fused wide (lane-dense L*D) matmuls ---
    layers = params["layers"]
    w1 = jnp.zeros((K, L * D), f32).at[:R + 1].set(
        jnp.concatenate([p["w1"] for p in layers], axis=1))              # [K, L*D]
    b1 = jnp.concatenate([p["b1"] for p in layers], axis=0).reshape(1, L * D)
    w2 = jnp.stack([p["w2"] for p in layers])                            # [L, D, D]
    b2 = jnp.stack([p["b2"] for p in layers]).reshape(L, 1, D)
    u1 = jnp.stack([p["u1"] for p in layers])
    c1 = jnp.stack([p["c1"] for p in layers]).reshape(L, 1, D)
    u2 = jnp.stack([p["u2"] for p in layers])
    c2 = jnp.stack([p["c2"] for p in layers]).reshape(L, 1, D)

    # embedding gather in plain JAX (drops the in-kernel [BN, V] one-hot matmul)
    x0 = params["embed"][tokens.reshape(BN)].astype(f32)                 # [BN, D]
    nmask = valid_node.reshape(BN, 1).astype(f32)                        # [BN, 1]

    kernel = functools.partial(_dimenet_kernel, num_layers=L, dim=D)

    grid_spec = pltpu.PrefetchScalarGridSpec(
        num_scalar_prefetch=0,
        grid=(B, n_tiles),
        in_specs=[
            pl.BlockSpec((TE, K), lambda b, t: (b * n_tiles + t, 0)),    # edge features
            pl.BlockSpec((1, TE), lambda b, t: (0, b * n_tiles + t)),    # masked local row idx
            pl.BlockSpec((N, D), lambda b, t: (b, 0)),                   # embedded tokens
            pl.BlockSpec((N, 1), lambda b, t: (b, 0)),                   # node padding mask
            pl.BlockSpec((K, L * D), lambda b, t: (0, 0)),               # w1 (all layers)
            pl.BlockSpec((1, L * D), lambda b, t: (0, 0)),               # b1 (all layers)
            pl.BlockSpec((L, D, D), lambda b, t: (0, 0, 0)),             # w2
            pl.BlockSpec((L, 1, D), lambda b, t: (0, 0, 0)),             # b2
            pl.BlockSpec((L, D, D), lambda b, t: (0, 0, 0)),             # u1
            pl.BlockSpec((L, 1, D), lambda b, t: (0, 0, 0)),             # c1
            pl.BlockSpec((L, D, D), lambda b, t: (0, 0, 0)),             # u2
            pl.BlockSpec((L, 1, D), lambda b, t: (0, 0, 0)),             # c2
        ],
        out_specs=pl.BlockSpec((N, D), lambda b, t: (b, 0)),
        scratch_shapes=[pltpu.VMEM((N, L * D), f32),      # per-molecule scatter accumulator
                        pltpu.VMEM((TE, L * D), f32),     # pre-activation h1 slab
                        pltpu.VMEM((TE, L * D), f32)],    # fused edge-message slab
    )

    x_flat = pl.pallas_call(
        kernel,
        out_shape=jax.ShapeDtypeStruct((BN, D), f32),
        grid_spec=grid_spec,
        compiler_params=pltpu.CompilerParams(
            dimension_semantics=("parallel", "arbitrary"),
            vmem_limit_bytes=32 * 1024 * 1024),
    )(ef_flat, row_flat, x0, nmask, w1, b1, w2, b2, u1, c1, u2, c2)

    encoder_rep = x_flat.reshape(B, N, D)
    return encoder_rep, padding_mask


def dimenet_forward_reference(src_tokens, padded_coordinates, src_distance, src_edge_type,
                              params, *, num_layers, embed_dim, rbf_dim, cutoff=6.0,
                              gamma=10.0, padding_idx=0):
    """Pure-JAX reference mirroring the PyTorch module semantics."""
    del src_distance, src_edge_type
    B, N = src_tokens.shape
    BN = B * N
    D, R, L = embed_dim, rbf_dim, num_layers
    tokens = src_tokens.reshape(BN).astype(jnp.int32)
    coord = padded_coordinates.reshape(BN, 3).astype(jnp.float32)
    valid_node = tokens != padding_idx
    batch = jnp.repeat(jnp.arange(B, dtype=jnp.int32), N)

    row = jnp.repeat(jnp.arange(BN, dtype=jnp.int32), BN)
    col = jnp.tile(jnp.arange(BN, dtype=jnp.int32), BN)
    v_ij = coord[row] - coord[col]
    dist = jnp.sqrt(jnp.sum(v_ij * v_ij, axis=-1))
    valid = ((batch[row] == batch[col]) & (row != col)
             & valid_node[row] & valid_node[col] & (dist < cutoff))

    centers = jnp.linspace(0.0, cutoff, R, dtype=jnp.float32)
    rbf = jnp.exp(-gamma * (dist[:, None] - centers[None, :]) ** 2)      # [E, R]
    angle = _compute_angle(v_ij, -v_ij)                                  # [E, 1]
    edge_feat = jnp.concatenate([rbf, angle], axis=-1)                   # [E, R+1]

    x = params["embed"][tokens]                                          # [BN, D]
    vmask = valid.astype(jnp.float32)[:, None]
    for p in params["layers"]:
        h = _silu(edge_feat @ p["w1"] + p["b1"])
        msg = (h @ p["w2"] + p["b2"]) * vmask
        out = jnp.zeros((BN, D), jnp.float32).at[row].add(msg)
        u = _silu(out @ p["u1"] + p["c1"])
        x = x + u @ p["u2"] + p["c2"]
    x = x * valid_node.astype(jnp.float32)[:, None]
    return x.reshape(B, N, D), (src_tokens == padding_idx)


def init_params(key, vocab_size, embed_dim, rbf_dim, num_layers, padding_idx):
    D, R, L = embed_dim, rbf_dim, num_layers
    keys = jax.random.split(key, 1 + 4 * L)
    emb = jax.random.normal(keys[0], (vocab_size, D), jnp.float32)
    emb = emb.at[padding_idx].set(0.0)                       # nn.Embedding padding_idx row

    def linear(k, fan_in, fan_out):
        kw, kb = jax.random.split(k)
        bound = 1.0 / (float(fan_in) ** 0.5)
        w = jax.random.uniform(kw, (fan_in, fan_out), jnp.float32, -bound, bound)
        b = jax.random.uniform(kb, (fan_out,), jnp.float32, -bound, bound)
        return w, b

    layers = []
    for l in range(L):
        kk = keys[1 + 4 * l: 1 + 4 * (l + 1)]
        w1, b1 = linear(kk[0], R + 1, D)     # edge_mlp[0]: Linear(rbf_dim + angle_dim, D)
        w2, b2 = linear(kk[1], D, D)         # edge_mlp[2]: Linear(D, D)
        u1, c1 = linear(kk[2], D, D)         # update_mlp[0]
        u2, c2 = linear(kk[3], D, D)         # update_mlp[2]
        layers.append(dict(w1=w1, b1=b1, w2=w2, b2=b2, u1=u1, c1=c1, u2=u2, c2=c2))
    return dict(embed=emb, layers=layers)


if __name__ == "__main__":
    B, N = 2, 16                 # batch, max atoms per molecule
    VOCAB = 16                   # dictionary size, padding_idx = 0
    D, R, L = 128, 64, 4         # embed_dim, rbf_dim, num_layers (scaled-down embed_dim)
    PAD = 0

    key = jax.random.PRNGKey(0)
    k_par, k_tok, k_coord = jax.random.split(key, 3)
    params = init_params(k_par, VOCAB, D, R, L, PAD)

    src_tokens = jax.random.randint(k_tok, (B, N), 1, VOCAB, jnp.int32)
    src_tokens = src_tokens.at[0, 13:].set(PAD).at[1, 10:].set(PAD)   # some padded positions
    padded_coordinates = 2.0 * jax.random.normal(k_coord, (B, N, 3), jnp.float32)
    src_distance = jnp.zeros((B, N, N), jnp.float32)                  # unused by the module
    src_edge_type = jnp.zeros((B, N, N), jnp.int32)                   # unused by the module

    fwd = jax.jit(functools.partial(dimenet_forward, num_layers=L, embed_dim=D,
                                    rbf_dim=R, padding_idx=PAD))
    enc, pmask = fwd(src_tokens, padded_coordinates, src_distance, src_edge_type, params)
    jax.block_until_ready((enc, pmask))

    enc_ref, pmask_ref = dimenet_forward_reference(
        src_tokens, padded_coordinates, src_distance, src_edge_type, params,
        num_layers=L, embed_dim=D, rbf_dim=R, padding_idx=PAD)

    assert enc.shape == (B, N, D) and pmask.shape == (B, N)
    assert bool(jnp.all(pmask == pmask_ref))
    max_err = float(jnp.max(jnp.abs(enc - enc_ref)))
    assert jnp.allclose(enc, enc_ref, atol=2e-3, rtol=2e-3), max_err

    print("KERNEL_OK")
</pallas_src>

<mosaic_0001>
module attributes {stable_mosaic.version = 11 : i64} {
  func.func @_dimenet_kernel(%arg0: i32, %arg1: i32, %arg2: memref<256x128xf32, #tpu.memory_space<vmem>>, %arg3: memref<1x256xi32, #tpu.memory_space<vmem>>, %arg4: memref<16x128xf32, #tpu.memory_space<vmem>>, %arg5: memref<16x1xf32, #tpu.memory_space<vmem>>, %arg6: memref<128x512xf32, #tpu.memory_space<vmem>>, %arg7: memref<1x512xf32, #tpu.memory_space<vmem>>, %arg8: memref<4x128x128xf32, #tpu.memory_space<vmem>>, %arg9: memref<4x1x128xf32, #tpu.memory_space<vmem>>, %arg10: memref<4x128x128xf32, #tpu.memory_space<vmem>>, %arg11: memref<4x1x128xf32, #tpu.memory_space<vmem>>, %arg12: memref<4x128x128xf32, #tpu.memory_space<vmem>>, %arg13: memref<4x1x128xf32, #tpu.memory_space<vmem>>, %arg14: memref<16x128xf32, #tpu.memory_space<vmem>>, %arg15: memref<16x512xf32, #tpu.memory_space<vmem>>, %arg16: memref<256x512xf32, #tpu.memory_space<vmem>>, %arg17: memref<256x512xf32, #tpu.memory_space<vmem>>) attributes {dimension_semantics = [#tpu.dimension_semantics<parallel>, #tpu.dimension_semantics<arbitrary>], iteration_bounds = array<i64: 2, 1>, scalar_prefetch = 0 : i64, scratch_operands = 3 : i64, tpu.core_type = #tpu.core_type<tc>, window_params = [{transform_indices = @transform_0, window_bounds = array<i64: 256, 128>}, {transform_indices = @transform_1, window_bounds = array<i64: 1, 256>}, {transform_indices = @transform_2, window_bounds = array<i64: 16, 128>}, {transform_indices = @transform_3, window_bounds = array<i64: 16, 1>}, {pipeline_mode = #tpu.pipeline_mode<synchronous>, transform_indices = @transform_4, window_bounds = array<i64: 128, 512>}, {pipeline_mode = #tpu.pipeline_mode<synchronous>, transform_indices = @transform_5, window_bounds = array<i64: 1, 512>}, {pipeline_mode = #tpu.pipeline_mode<synchronous>, transform_indices = @transform_6, window_bounds = array<i64: 4, 128, 128>}, {pipeline_mode = #tpu.pipeline_mode<synchronous>, transform_indices = @transform_7, window_bounds = array<i64: 4, 1, 128>}, {pipeline_mode = #tpu.pipeline_mode<synchronous>, transform_indices = @transform_8, window_bounds = array<i64: 4, 128, 128>}, {pipeline_mode = #tpu.pipeline_mode<synchronous>, transform_indices = @transform_9, window_bounds = array<i64: 4, 1, 128>}, {pipeline_mode = #tpu.pipeline_mode<synchronous>, transform_indices = @transform_10, window_bounds = array<i64: 4, 128, 128>}, {pipeline_mode = #tpu.pipeline_mode<synchronous>, transform_indices = @transform_11, window_bounds = array<i64: 4, 1, 128>}, {transform_indices = @transform_12, window_bounds = array<i64: 16, 128>}]} {
    %c0_i32 = arith.constant 0 : i32
    %0 = arith.cmpi eq, %arg1, %c0_i32 : i32
    %1 = arith.extui %0 : i1 to i32
    %c0_i32_0 = arith.constant 0 : i32
    %2 = arith.cmpi ne, %1, %c0_i32_0 : i32
    scf.if %2 {
      %cst_75 = arith.constant 0.000000e+00 : f32
      %101 = vector.broadcast %cst_75 : f32 to vector<16x512xf32>
      %c0_76 = arith.constant 0 : index
      %c0_77 = arith.constant 0 : index
      %102 = vector.load %arg15[%c0_76, %c0_77] : memref<16x512xf32, #tpu.memory_space<vmem>>, vector<16x512xf32>
      tpu.vector_store %arg15[%c0_76, %c0_77], %101 {strides = array<i32>} : memref<16x512xf32, #tpu.memory_space<vmem>>, vector<16x512xf32>,
    } else {
    }
    %c0 = arith.constant 0 : index
    %c0_1 = arith.constant 0 : index
    %3 = vector.load %arg2[%c0, %c0_1] : memref<256x128xf32, #tpu.memory_space<vmem>>, vector<256x128xf32>
    %c0_2 = arith.constant 0 : index
    %c0_3 = arith.constant 0 : index
    %4 = vector.load %arg6[%c0_2, %c0_3] : memref<128x512xf32, #tpu.memory_space<vmem>>, vector<128x512xf32>
    %cst = arith.constant dense<0.000000e+00> : vector<256x512xf32>
    %5 = tpu.matmul %3, %4, %cst {dimension_numbers = #tpu.dot_dimension_numbers<[1], [0], [0], [1], [0, 0, 1, 1], [], []>} : vector<256x128xf32>, vector<128x512xf32>, vector<256x512xf32> -> vector<256x512xf32>
    %c0_4 = arith.constant 0 : index
    %c0_5 = arith.constant 0 : index
    %6 = vector.load %arg16[%c0_4, %c0_5] : memref<256x512xf32, #tpu.memory_space<vmem>>, vector<256x512xf32>
    tpu.vector_store %arg16[%c0_4, %c0_5], %5 {strides = array<i32>} : memref<256x512xf32, #tpu.memory_space<vmem>>, vector<256x512xf32>,
    %c0_6 = arith.constant 0 : index
    %c0_7 = arith.constant 0 : index
    %7 = vector.load %arg16[%c0_6, %c0_7] : memref<256x512xf32, #tpu.memory_space<vmem>>, vector<256x128xf32>
    %c0_8 = arith.constant 0 : index
    %c0_9 = arith.constant 0 : index
    %8 = vector.load %arg7[%c0_8, %c0_9] : memref<1x512xf32, #tpu.memory_space<vmem>>, vector<1x128xf32>
    %9 = vector.broadcast %8 : vector<1x128xf32> to vector<256x128xf32>
    %10 = arith.addf %7, %9 : vector<256x128xf32>
    %cst_10 = arith.constant 0.000000e+00 : f32
    %11 = vector.broadcast %cst_10 : f32 to vector<256x128xf32>
    %12 = arith.subf %11, %10 : vector<256x128xf32>
    %13 = math.exp %12 : vector<256x128xf32>
    %cst_11 = arith.constant 1.000000e+00 : f32
    %14 = vector.broadcast %cst_11 : f32 to vector<256x128xf32>
    %15 = arith.addf %14, %13 : vector<256x128xf32>
    %cst_12 = arith.constant 1.000000e+00 : f32
    %16 = vector.broadcast %cst_12 : f32 to vector<256x128xf32>
    %17 = arith.divf %16, %15 : vector<256x128xf32>
    %18 = arith.mulf %10, %17 : vector<256x128xf32>
    %c0_13 = arith.constant 0 : index
    %c0_14 = arith.constant 0 : index
    %c0_15 = arith.constant 0 : index
    %19 = vector.load %arg8[%c0_13, %c0_14, %c0_15] : memref<4x128x128xf32, #tpu.memory_space<vmem>>, vector<1x128x128xf32>
    %20 = vector.shape_cast %19 : vector<1x128x128xf32> to vector<128x128xf32>
    %cst_16 = arith.constant dense<0.000000e+00> : vector<256x128xf32>
    %21 = tpu.matmul %18, %20, %cst_16 {dimension_numbers = #tpu.dot_dimension_numbers<[1], [0], [0], [1], [0, 0, 1, 1], [], []>} : vector<256x128xf32>, vector<128x128xf32>, vector<256x128xf32> -> vector<256x128xf32>
    %c0_17 = arith.constant 0 : index
    %c0_18 = arith.constant 0 : index
    %c0_19 = arith.constant 0 : index
    %22 = vector.load %arg9[%c0_17, %c0_18, %c0_19] : memref<4x1x128xf32, #tpu.memory_space<vmem>>, vector<1x1x128xf32>
    %23 = vector.shape_cast %22 : vector<1x1x128xf32> to vector<1x128xf32>
    %24 = vector.broadcast %23 : vector<1x128xf32> to vector<256x128xf32>
    %25 = arith.addf %21, %24 : vector<256x128xf32>
    %c0_20 = arith.constant 0 : index
    %c0_21 = arith.constant 0 : index
    %26 = vector.load %arg17[%c0_20, %c0_21] : memref<256x512xf32, #tpu.memory_space<vmem>>, vector<256x128xf32>
    tpu.vector_store %arg17[%c0_20, %c0_21], %25 {strides = array<i32>} : memref<256x512xf32, #tpu.memory_space<vmem>>, vector<256x128xf32>,
    %c0_22 = arith.constant 0 : index
    %c128 = arith.constant 128 : index
    %27 = vector.load %arg16[%c0_22, %c128] : memref<256x512xf32, #tpu.memory_space<vmem>>, vector<256x128xf32>
    %c0_23 = arith.constant 0 : index
    %c128_24 = arith.constant 128 : index
    %28 = vector.load %arg7[%c0_23, %c128_24] : memref<1x512xf32, #tpu.memory_space<vmem>>, vector<1x128xf32>
    %29 = vector.broadcast %28 : vector<1x128xf32> to vector<256x128xf32>
    %30 = arith.addf %27, %29 : vector<256x128xf32>
    %cst_25 = arith.constant 0.000000e+00 : f32
    %31 = vector.broadcast %cst_25 : f32 to vector<256x128xf32>
    %32 = arith.subf %31, %30 : vector<256x128xf32>
    %33 = math.exp %32 : vector<256x128xf32>
    %cst_26 = arith.constant 1.000000e+00 : f32
    %34 = vector.broadcast %cst_26 : f32 to vector<256x128xf32>
    %35 = arith.addf %34, %33 : vector<256x128xf32>
    %cst_27 = arith.constant 1.000000e+00 : f32
    %36 = vector.broadcast %cst_27 : f32 to vector<256x128xf32>
    %37 = arith.divf %36, %35 : vector<256x128xf32>
    %38 = arith.mulf %30, %37 : vector<256x128xf32>
    %c1 = arith.constant 1 : index
    %c0_28 = arith.constant 0 : index
    %c0_29 = arith.constant 0 : index
    %39 = vector.load %arg8[%c1, %c0_28, %c0_29] : memref<4x128x128xf32, #tpu.memory_space<vmem>>, vector<1x128x128xf32>
    %40 = vector.shape_cast %39 : vector<1x128x128xf32> to vector<128x128xf32>
    %cst_30 = arith.constant dense<0.000000e+00> : vector<256x128xf32>
    %41 = tpu.matmul %38, %40, %cst_30 {dimension_numbers = #tpu.dot_dimension_numbers<[1], [0], [0], [1], [0, 0, 1, 1], [], []>} : vector<256x128xf32>, vector<128x128xf32>, vector<256x128xf32> -> vector<256x128xf32>
    %c1_31 = arith.constant 1 : index
    %c0_32 = arith.constant 0 : index
    %c0_33 = arith.constant 0 : index
    %42 = vector.load %arg9[%c1_31, %c0_32, %c0_33] : memref<4x1x128xf32, #tpu.memory_space<vmem>>, vector<1x1x128xf32>
    %43 = vector.shape_cast %42 : vector<1x1x128xf32> to vector<1x128xf32>
    %44 = vector.broadcast %43 : vector<1x128xf32> to vector<256x128xf32>
    %45 = arith.addf %41, %44 : vector<256x128xf32>
    %c0_34 = arith.constant 0 : index
    %c128_35 = arith.constant 128 : index
    %46 = vector.load %arg17[%c0_34, %c128_35] : memref<256x512xf32, #tpu.memory_space<vmem>>, vector<256x128xf32>
    tpu.vector_store %arg17[%c0_34, %c128_35], %45 {strides = array<i32>} : memref<256x512xf32, #tpu.memory_space<vmem>>, vector<256x128xf32>,
    %c0_36 = arith.constant 0 : index
    %c256 = arith.constant 256 : index
    %47 = vector.load %arg16[%c0_36, %c256] : memref<256x512xf32, #tpu.memory_space<vmem>>, vector<256x128xf32>
    %c0_37 = arith.constant 0 : index
    %c256_38 = arith.constant 256 : index
    %48 = vector.load %arg7[%c0_37, %c256_38] : memref<1x512xf32, #tpu.memory_space<vmem>>, vector<1x128xf32>
    %49 = vector.broadcast %48 : vector<1x128xf32> to vector<256x128xf32>
    %50 = arith.addf %47, %49 : vector<256x128xf32>
    %cst_39 = arith.constant 0.000000e+00 : f32
    %51 = vector.broadcast %cst_39 : f32 to vector<256x128xf32>
    %52 = arith.subf %51, %50 : vector<256x128xf32>
    %53 = math.exp %52 : vector<256x128xf32>
    %cst_40 = arith.constant 1.000000e+00 : f32
    %54 = vector.broadcast %cst_40 : f32 to vector<256x128xf32>
    %55 = arith.addf %54, %53 : vector<256x128xf32>
    %cst_41 = arith.constant 1.000000e+00 : f32
    %56 = vector.broadcast %cst_41 : f32 to vector<256x128xf32>
    %57 = arith.divf %56, %55 : vector<256x128xf32>
    %58 = arith.mulf %50, %57 : vector<256x128xf32>
    %c2 = arith.constant 2 : index
    %c0_42 = arith.constant 0 : index
    %c0_43 = arith.constant 0 : index
    %59 = vector.load %arg8[%c2, %c0_42, %c0_43] : memref<4x128x128xf32, #tpu.memory_space<vmem>>, vector<1x128x128xf32>
    %60 = vector.shape_cast %59 : vector<1x128x128xf32> to vector<128x128xf32>
    %cst_44 = arith.constant dense<0.000000e+00> : vector<256x128xf32>
    %61 = tpu.matmul %58, %60, %cst_44 {dimension_numbers = #tpu.dot_dimension_numbers<[1], [0], [0], [1], [0, 0, 1, 1], [], []>} : vector<256x128xf32>, vector<128x128xf32>, vector<256x128xf32> -> vector<256x128xf32>
    %c2_45 = arith.constant 2 : index
    %c0_46 = arith.constant 0 : index
    %c0_47 = arith.constant 0 : index
    %62 = vector.load %arg9[%c2_45, %c0_46, %c0_47] : memref<4x1x128xf32, #tpu.memory_space<vmem>>, vector<1x1x128xf32>
    %63 = vector.shape_cast %62 : vector<1x1x128xf32> to vector<1x128xf32>
    %64 = vector.broadcast %63 : vector<1x128xf32> to vector<256x128xf32>
    %65 = arith.addf %61, %64 : vector<256x128xf32>
    %c0_48 = arith.constant 0 : index
    %c256_49 = arith.constant 256 : index
    %66 = vector.load %arg17[%c0_48, %c256_49] : memref<256x512xf32, #tpu.memory_space<vmem>>, vector<256x128xf32>
    tpu.vector_store %arg17[%c0_48, %c256_49], %65 {strides = array<i32>} : memref<256x512xf32, #tpu.memory_space<vmem>>, vector<256x128xf32>,
    %c0_50 = arith.constant 0 : index
    %c384 = arith.constant 384 : index
    %67 = vector.load %arg16[%c0_50, %c384] : memref<256x512xf32, #tpu.memory_space<vmem>>, vector<256x128xf32>
    %c0_51 = arith.constant 0 : index
    %c384_52 = arith.constant 384 : index
    %68 = vector.load %arg7[%c0_51, %c384_52] : memref<1x512xf32, #tpu.memory_space<vmem>>, vector<1x128xf32>
    %69 = vector.broadcast %68 : vector<1x128xf32> to vector<256x128xf32>
    %70 = arith.addf %67, %69 : vector<256x128xf32>
    %cst_53 = arith.constant 0.000000e+00 : f32
    %71 = vector.broadcast %cst_53 : f32 to vector<256x128xf32>
    %72 = arith.subf %71, %70 : vector<256x128xf32>
    %73 = math.exp %72 : vector<256x128xf32>
    %cst_54 = arith.constant 1.000000e+00 : f32
    %74 = vector.broadcast %cst_54 : f32 to vector<256x128xf32>
    %75 = arith.addf %74, %73 : vector<256x128xf32>
    %cst_55 = arith.constant 1.000000e+00 : f32
    %76 = vector.broadcast %cst_55 : f32 to vector<256x128xf32>
    %77 = arith.divf %76, %75 : vector<256x128xf32>
    %78 = arith.mulf %70, %77 : vector<256x128xf32>
    %c3 = arith.constant 3 : index
    %c0_56 = arith.constant 0 : index
    %c0_57 = arith.constant 0 : index
    %79 = vector.load %arg8[%c3, %c0_56, %c0_57] : memref<4x128x128xf32, #tpu.memory_space<vmem>>, vector<1x128x128xf32>
    %80 = vector.shape_cast %79 : vector<1x128x128xf32> to vector<128x128xf32>
    %cst_58 = arith.constant dense<0.000000e+00> : vector<256x128xf32>
    %81 = tpu.matmul %78, %80, %cst_58 {dimension_numbers = #tpu.dot_dimension_numbers<[1], [0], [0], [1], [0, 0, 1, 1], [], []>} : vector<256x128xf32>, vector<128x128xf32>, vector<256x128xf32> -> vector<256x128xf32>
    %c3_59 = arith.constant 3 : index
    %c0_60 = arith.constant 0 : index
    %c0_61 = arith.constant 0 : index
    %82 = vector.load %arg9[%c3_59, %c0_60, %c0_61] : memref<4x1x128xf32, #tpu.memory_space<vmem>>, vector<1x1x128xf32>
    %83 = vector.shape_cast %82 : vector<1x1x128xf32> to vector<1x128xf32>
    %84 = vector.broadcast %83 : vector<1x128xf32> to vector<256x128xf32>
    %85 = arith.addf %81, %84 : vector<256x128xf32>
    %c0_62 = arith.constant 0 : index
    %c384_63 = arith.constant 384 : index
    %86 = vector.load %arg17[%c0_62, %c384_63] : memref<256x512xf32, #tpu.memory_space<vmem>>, vector<256x128xf32>
    tpu.vector_store %arg17[%c0_62, %c384_63], %85 {strides = array<i32>} : memref<256x512xf32, #tpu.memory_space<vmem>>, vector<256x128xf32>,
    %87 = tpu.iota {dimensions = array<i32: 0>} : vector<16x256xi32>
    %c0_64 = arith.constant 0 : index
    %c0_65 = arith.constant 0 : index
    %88 = vector.load %arg3[%c0_64, %c0_65] : memref<1x256xi32, #tpu.memory_space<vmem>>, vector<1x256xi32>
    %89 = vector.broadcast %88 : vector<1x256xi32> to vector<16x256xi32>
    %90 = arith.cmpi eq, %87, %89 : vector<16x256xi32>
    %91 = arith.extui %90 : vector<16x256xi1> to vector<16x256xi32>
    %92 = arith.sitofp %91 : vector<16x256xi32> to vector<16x256xf32>
    %c0_66 = arith.constant 0 : index
    %c0_67 = arith.constant 0 : index
    %93 = vector.load %arg15[%c0_66, %c0_67] : memref<16x512xf32, #tpu.memory_space<vmem>>, vector<16x512xf32>
    %c0_68 = arith.constant 0 : index
    %c0_69 = arith.constant 0 : index
    %94 = vector.load %arg17[%c0_68, %c0_69] : memref<256x512xf32, #tpu.memory_space<vmem>>, vector<256x512xf32>
    %cst_70 = arith.constant dense<0.000000e+00> : vector<16x512xf32>
    %95 = tpu.matmul %92, %94, %cst_70 {dimension_numbers = #tpu.dot_dimension_numbers<[1], [0], [0], [1], [0, 0, 1, 1], [], []>} : vector<16x256xf32>, vector<256x512xf32>, vector<16x512xf32> -> vector<16x512xf32>
    %96 = arith.addf %93, %95 : vector<16x512xf32>
    %c0_71 = arith.constant 0 : index
    %c0_72 = arith.constant 0 : index
    %97 = vector.load %arg15[%c0_71, %c0_72] : memref<16x512xf32, #tpu.memory_space<vmem>>, vector<16x512xf32>
    tpu.vector_store %arg15[%c0_71, %c0_72], %96 {strides = array<i32>} : memref<16x512xf32, #tpu.memory_space<vmem>>, vector<16x512xf32>,
    %c0_i32_73 = arith.constant 0 : i32
    %98 = arith.cmpi eq, %arg1, %c0_i32_73 : i32
    %99 = arith.extui %98 : i1 to i32
    %c0_i32_74 = arith.constant 0 : i32
    %100 = arith.cmpi ne, %99, %c0_i32_74 : i32
    scf.if %100 {
      %c0_75 = arith.constant 0 : index
      %c0_76 = arith.constant 0 : index
      %101 = vector.load %arg4[%c0_75, %c0_76] : memref<16x128xf32, #tpu.memory_space<vmem>>, vector<16x128xf32>
      %c0_77 = arith.constant 0 : index
      %c0_78 = arith.constant 0 : index
      %102 = vector.load %arg15[%c0_77, %c0_78] : memref<16x512xf32, #tpu.memory_space<vmem>>, vector<16x512xf32>
      %103 = vector.extract_strided_slice %102 {offsets = [0, 0], sizes = [16, 128], strides = [1, 1]} : vector<16x512xf32> to vector<16x128xf32>
      %c0_79 = arith.constant 0 : index
      %c0_80 = arith.constant 0 : index
      %c0_81 = arith.constant 0 : index
      %104 = vector.load %arg10[%c0_79, %c0_80, %c0_81] : memref<4x128x128xf32, #tpu.memory_space<vmem>>, vector<1x128x128xf32>
      %105 = vector.shape_cast %104 : vector<1x128x128xf32> to vector<128x128xf32>
      %cst_82 = arith.constant dense<0.000000e+00> : vector<16x128xf32>
      %106 = tpu.matmul %103, %105, %cst_82 {dimension_numbers = #tpu.dot_dimension_numbers<[1], [0], [0], [1], [0, 0, 1, 1], [], []>} : vector<16x128xf32>, vector<128x128xf32>, vector<16x128xf32> -> vector<16x128xf32>
      %c0_83 = arith.constant 0 : index
      %c0_84 = arith.constant 0 : index
      %c0_85 = arith.constant 0 : index
      %107 = vector.load %arg11[%c0_83, %c0_84, %c0_85] : memref<4x1x128xf32, #tpu.memory_space<vmem>>, vector<1x1x128xf32>
      %108 = vector.shape_cast %107 : vector<1x1x128xf32> to vector<1x128xf32>
      %109 = vector.broadcast %108 : vector<1x128xf32> to vector<16x128xf32>
      %110 = arith.addf %106, %109 : vector<16x128xf32>
      %cst_86 = arith.constant 0.000000e+00 : f32
      %111 = vector.broadcast %cst_86 : f32 to vector<16x128xf32>
      %112 = arith.subf %111, %110 : vector<16x128xf32>
      %113 = math.exp %112 : vector<16x128xf32>
      %cst_87 = arith.constant 1.000000e+00 : f32
      %114 = vector.broadcast %cst_87 : f32 to vector<16x128xf32>
      %115 = arith.addf %114, %113 : vector<16x128xf32>
      %cst_88 = arith.constant 1.000000e+00 : f32
      %116 = vector.broadcast %cst_88 : f32 to vector<16x128xf32>
      %117 = arith.divf %116, %115 : vector<16x128xf32>
      %118 = arith.mulf %110, %117 : vector<16x128xf32>
      %c0_89 = arith.constant 0 : index
      %c0_90 = arith.constant 0 : index
      %c0_91 = arith.constant 0 : index
      %119 = vector.load %arg12[%c0_89, %c0_90, %c0_91] : memref<4x128x128xf32, #tpu.memory_space<vmem>>, vector<1x128x128xf32>
      %120 = vector.shape_cast %119 : vector<1x128x128xf32> to vector<128x128xf32>
      %cst_92 = arith.constant dense<0.000000e+00> : vector<16x128xf32>
      %121 = tpu.matmul %118, %120, %cst_92 {dimension_numbers = #tpu.dot_dimension_numbers<[1], [0], [0], [1], [0, 0, 1, 1], [], []>} : vector<16x128xf32>, vector<128x128xf32>, vector<16x128xf32> -> vector<16x128xf32>
      %122 = arith.addf %101, %121 : vector<16x128xf32>
      %c0_93 = arith.constant 0 : index
      %c0_94 = arith.constant 0 : index
      %c0_95 = arith.constant 0 : index
      %123 = vector.load %arg13[%c0_93, %c0_94, %c0_95] : memref<4x1x128xf32, #tpu.memory_space<vmem>>, vector<1x1x128xf32>
      %124 = vector.shape_cast %123 : vector<1x1x128xf32> to vector<1x128xf32>
      %125 = vector.broadcast %124 : vector<1x128xf32> to vector<16x128xf32>
      %126 = arith.addf %122, %125 : vector<16x128xf32>
      %127 = vector.extract_strided_slice %102 {offsets = [0, 128], sizes = [16, 128], strides = [1, 1]} : vector<16x512xf32> to vector<16x128xf32>
      %c1_96 = arith.constant 1 : index
      %c0_97 = arith.constant 0 : index
      %c0_98 = arith.constant 0 : index
      %128 = vector.load %arg10[%c1_96, %c0_97, %c0_98] : memref<4x128x128xf32, #tpu.memory_space<vmem>>, vector<1x128x128xf32>
      %129 = vector.shape_cast %128 : vector<1x128x128xf32> to vector<128x128xf32>
      %cst_99 = arith.constant dense<0.000000e+00> : vector<16x128xf32>
      %130 = tpu.matmul %127, %129, %cst_99 {dimension_numbers = #tpu.dot_dimension_numbers<[1], [0], [0], [1], [0, 0, 1, 1], [], []>} : vector<16x128xf32>, vector<128x128xf32>, vector<16x128xf32> -> vector<16x128xf32>
      %c1_100 = arith.constant 1 : index
      %c0_101 = arith.constant 0 : index
      %c0_102 = arith.constant 0 : index
      %131 = vector.load %arg11[%c1_100, %c0_101, %c0_102] : memref<4x1x128xf32, #tpu.memory_space<vmem>>, vector<1x1x128xf32>
      %132 = vector.shape_cast %131 : vector<1x1x128xf32> to vector<1x128xf32>
      %133 = vector.broadcast %132 : vector<1x128xf32> to vector<16x128xf32>
      %134 = arith.addf %130, %133 : vector<16x128xf32>
      %cst_103 = arith.constant 0.000000e+00 : f32
      %135 = vector.broadcast %cst_103 : f32 to vector<16x128xf32>
      %136 = arith.subf %135, %134 : vector<16x128xf32>
      %137 = math.exp %136 : vector<16x128xf32>
      %cst_104 = arith.constant 1.000000e+00 : f32
      %138 = vector.broadcast %cst_104 : f32 to vector<16x128xf32>
      %139 = arith.addf %138, %137 : vector<16x128xf32>
      %cst_105 = arith.constant 1.000000e+00 : f32
      %140 = vector.broadcast %cst_105 : f32 to vector<16x128xf32>
      %141 = arith.divf %140, %139 : vector<16x128xf32>
      %142 = arith.mulf %134, %141 : vector<16x128xf32>
      %c1_106 = arith.constant 1 : index
      %c0_107 = arith.constant 0 : index
      %c0_108 = arith.constant 0 : index
      %143 = vector.load %arg12[%c1_106, %c0_107, %c0_108] : memref<4x128x128xf32, #tpu.memory_space<vmem>>, vector<1x128x128xf32>
      %144 = vector.shape_cast %143 : vector<1x128x128xf32> to vector<128x128xf32>
      %cst_109 = arith.constant dense<0.000000e+00> : vector<16x128xf32>
      %145 = tpu.matmul %142, %144, %cst_109 {dimension_numbers = #tpu.dot_dimension_numbers<[1], [0], [0], [1], [0, 0, 1, 1], [], []>} : vector<16x128xf32>, vector<128x128xf32>, vector<16x128xf32> -> vector<16x128xf32>
      %146 = arith.addf %126, %145 : vector<16x128xf32>
      %c1_110 = arith.constant 1 : index
      %c0_111 = arith.constant 0 : index
      %c0_112 = arith.constant 0 : index
      %147 = vector.load %arg13[%c1_110, %c0_111, %c0_112] : memref<4x1x128xf32, #tpu.memory_space<vmem>>, vector<1x1x128xf32>
      %148 = vector.shape_cast %147 : vector<1x1x128xf32> to vector<1x128xf32>
      %149 = vector.broadcast %148 : vector<1x128xf32> to vector<16x128xf32>
      %150 = arith.addf %146, %149 : vector<16x128xf32>
      %151 = vector.extract_strided_slice %102 {offsets = [0, 256], sizes = [16, 128], strides = [1, 1]} : vector<16x512xf32> to vector<16x128xf32>
      %c2_113 = arith.constant 2 : index
      %c0_114 = arith.constant 0 : index
      %c0_115 = arith.constant 0 : index
      %152 = vector.load %arg10[%c2_113, %c0_114, %c0_115] : memref<4x128x128xf32, #tpu.memory_space<vmem>>, vector<1x128x128xf32>
      %153 = vector.shape_cast %152 : vector<1x128x128xf32> to vector<128x128xf32>
      %cst_116 = arith.constant dense<0.000000e+00> : vector<16x128xf32>
      %154 = tpu.matmul %151, %153, %cst_116 {dimension_numbers = #tpu.dot_dimension_numbers<[1], [0], [0], [1], [0, 0, 1, 1], [], []>} : vector<16x128xf32>, vector<128x128xf32>, vector<16x128xf32> -> vector<16x128xf32>
      %c2_117 = arith.constant 2 : index
      %c0_118 = arith.constant 0 : index
      %c0_119 = arith.constant 0 : index
      %155 = vector.load %arg11[%c2_117, %c0_118, %c0_119] : memref<4x1x128xf32, #tpu.memory_space<vmem>>, vector<1x1x128xf32>
      %156 = vector.shape_cast %155 : vector<1x1x128xf32> to vector<1x128xf32>
      %157 = vector.broadcast %156 : vector<1x128xf32> to vector<16x128xf32>
      %158 = arith.addf %154, %157 : vector<16x128xf32>
      %cst_120 = arith.constant 0.000000e+00 : f32
      %159 = vector.broadcast %cst_120 : f32 to vector<16x128xf32>
      %160 = arith.subf %159, %158 : vector<16x128xf32>
      %161 = math.exp %160 : vector<16x128xf32>
      %cst_121 = arith.constant 1.000000e+00 : f32
      %162 = vector.broadcast %cst_121 : f32 to vector<16x128xf32>
      %163 = arith.addf %162, %161 : vector<16x128xf32>
      %cst_122 = arith.constant 1.000000e+00 : f32
      %164 = vector.broadcast %cst_122 : f32 to vector<16x128xf32>
      %165 = arith.divf %164, %163 : vector<16x128xf32>
      %166 = arith.mulf %158, %165 : vector<16x128xf32>
      %c2_123 = arith.constant 2 : index
      %c0_124 = arith.constant 0 : index
      %c0_125 = arith.constant 0 : index
      %167 = vector.load %arg12[%c2_123, %c0_124, %c0_125] : memref<4x128x128xf32, #tpu.memory_space<vmem>>, vector<1x128x128xf32>
      %168 = vector.shape_cast %167 : vector<1x128x128xf32> to vector<128x128xf32>
      %cst_126 = arith.constant dense<0.000000e+00> : vector<16x128xf32>
      %169 = tpu.matmul %166, %168, %cst_126 {dimension_numbers = #tpu.dot_dimension_numbers<[1], [0], [0], [1], [0, 0, 1, 1], [], []>} : vector<16x128xf32>, vector<128x128xf32>, vector<16x128xf32> -> vector<16x128xf32>
      %170 = arith.addf %150, %169 : vector<16x128xf32>
      %c2_127 = arith.constant 2 : index
      %c0_128 = arith.constant 0 : index
      %c0_129 = arith.constant 0 : index
      %171 = vector.load %arg13[%c2_127, %c0_128, %c0_129] : memref<4x1x128xf32, #tpu.memory_space<vmem>>, vector<1x1x128xf32>
      %172 = vector.shape_cast %171 : vector<1x1x128xf32> to vector<1x128xf32>
      %173 = vector.broadcast %172 : vector<1x128xf32> to vector<16x128xf32>
      %174 = arith.addf %170, %173 : vector<16x128xf32>
      %175 = vector.extract_strided_slice %102 {offsets = [0, 384], sizes = [16, 128], strides = [1, 1]} : vector<16x512xf32> to vector<16x128xf32>
      %c3_130 = arith.constant 3 : index
      %c0_131 = arith.constant 0 : index
      %c0_132 = arith.constant 0 : index
      %176 = vector.load %arg10[%c3_130, %c0_131, %c0_132] : memref<4x128x128xf32, #tpu.memory_space<vmem>>, vector<1x128x128xf32>
      %177 = vector.shape_cast %176 : vector<1x128x128xf32> to vector<128x128xf32>
      %cst_133 = arith.constant dense<0.000000e+00> : vector<16x128xf32>
      %178 = tpu.matmul %175, %177, %cst_133 {dimension_numbers = #tpu.dot_dimension_numbers<[1], [0], [0], [1], [0, 0, 1, 1], [], []>} : vector<16x128xf32>, vector<128x128xf32>, vector<16x128xf32> -> vector<16x128xf32>
      %c3_134 = arith.constant 3 : index
      %c0_135 = arith.constant 0 : index
      %c0_136 = arith.constant 0 : index
      %179 = vector.load %arg11[%c3_134, %c0_135, %c0_136] : memref<4x1x128xf32, #tpu.memory_space<vmem>>, vector<1x1x128xf32>
      %180 = vector.shape_cast %179 : vector<1x1x128xf32> to vector<1x128xf32>
      %181 = vector.broadcast %180 : vector<1x128xf32> to vector<16x128xf32>
      %182 = arith.addf %178, %181 : vector<16x128xf32>
      %cst_137 = arith.constant 0.000000e+00 : f32
      %183 = vector.broadcast %cst_137 : f32 to vector<16x128xf32>
      %184 = arith.subf %183, %182 : vector<16x128xf32>
      %185 = math.exp %184 : vector<16x128xf32>
      %cst_138 = arith.constant 1.000000e+00 : f32
      %186 = vector.broadcast %cst_138 : f32 to vector<16x128xf32>
      %187 = arith.addf %186, %185 : vector<16x128xf32>
      %cst_139 = arith.constant 1.000000e+00 : f32
      %188 = vector.broadcast %cst_139 : f32 to vector<16x128xf32>
      %189 = arith.divf %188, %187 : vector<16x128xf32>
      %190 = arith.mulf %182, %189 : vector<16x128xf32>
      %c3_140 = arith.constant 3 : index
      %c0_141 = arith.constant 0 : index
      %c0_142 = arith.constant 0 : index
      %191 = vector.load %arg12[%c3_140, %c0_141, %c0_142] : memref<4x128x128xf32, #tpu.memory_space<vmem>>, vector<1x128x128xf32>
      %192 = vector.shape_cast %191 : vector<1x128x128xf32> to vector<128x128xf32>
      %cst_143 = arith.constant dense<0.000000e+00> : vector<16x128xf32>
      %193 = tpu.matmul %190, %192, %cst_143 {dimension_numbers = #tpu.dot_dimension_numbers<[1], [0], [0], [1], [0, 0, 1, 1], [], []>} : vector<16x128xf32>, vector<128x128xf32>, vector<16x128xf32> -> vector<16x128xf32>
      %194 = arith.addf %174, %193 : vector<16x128xf32>
      %c3_144 = arith.constant 3 : index
      %c0_145 = arith.constant 0 : index
      %c0_146 = arith.constant 0 : index
      %195 = vector.load %arg13[%c3_144, %c0_145, %c0_146] : memref<4x1x128xf32, #tpu.memory_space<vmem>>, vector<1x1x128xf32>
      %196 = vector.shape_cast %195 : vector<1x1x128xf32> to vector<1x128xf32>
      %197 = vector.broadcast %196 : vector<1x128xf32> to vector<16x128xf32>
      %198 = arith.addf %194, %197 : vector<16x128xf32>
      %c0_147 = arith.constant 0 : index
      %c0_148 = arith.constant 0 : index
      %199 = vector.load %arg5[%c0_147, %c0_148] : memref<16x1xf32, #tpu.memory_space<vmem>>, vector<16x1xf32>
      %200 = vector.broadcast %199 : vector<16x1xf32> to vector<16x128xf32>
      %201 = arith.mulf %198, %200 : vector<16x128xf32>
      %c0_149 = arith.constant 0 : index
      %c0_150 = arith.constant 0 : index
      %202 = vector.load %arg14[%c0_149, %c0_150] : memref<16x128xf32, #tpu.memory_space<vmem>>, vector<16x128xf32>
      tpu.vector_store %arg14[%c0_149, %c0_150], %201 {strides = array<i32>} : memref<16x128xf32, #tpu.memory_space<vmem>>, vector<16x128xf32>,
    } else {
    }
    return
  }
  func.func @transform_0(%arg0: i32, %arg1: i32) -> (i32, i32) {
    %c1_i32 = arith.constant 1 : i32
    %0 = arith.muli %arg0, %c1_i32 : i32
    %1 = arith.addi %0, %arg1 : i32
    %c0_i32 = arith.constant 0 : i32
    %c0_i32_0 = arith.constant 0 : i32
    return %1, %c0_i32 : i32, i32
  }
  func.func @transform_1(%arg0: i32, %arg1: i32) -> (i32, i32) {
    %c1_i32 = arith.constant 1 : i32
    %0 = arith.muli %arg0, %c1_i32 : i32
    %1 = arith.addi %0, %arg1 : i32
    %c0_i32 = arith.constant 0 : i32
    %c0_i32_0 = arith.constant 0 : i32
    return %c0_i32, %1 : i32, i32
  }
  func.func @transform_2(%arg0: i32, %arg1: i32) -> (i32, i32) {
    %c0_i32 = arith.constant 0 : i32
    %c0_i32_0 = arith.constant 0 : i32
    return %arg0, %c0_i32 : i32, i32
  }
  func.func @transform_3(%arg0: i32, %arg1: i32) -> (i32, i32) {
    %c0_i32 = arith.constant 0 : i32
    %c0_i32_0 = arith.constant 0 : i32
    return %arg0, %c0_i32 : i32, i32
  }
  func.func @transform_4(%arg0: i32, %arg1: i32) -> (i32, i32) {
    %c0_i32 = arith.constant 0 : i32
    %c0_i32_0 = arith.constant 0 : i32
    %c0_i32_1 = arith.constant 0 : i32
    return %c0_i32, %c0_i32_0 : i32, i32
  }
  func.func @transform_5(%arg0: i32, %arg1: i32) -> (i32, i32) {
    %c0_i32 = arith.constant 0 : i32
    %c0_i32_0 = arith.constant 0 : i32
    %c0_i32_1 = arith.constant 0 : i32
    return %c0_i32, %c0_i32_0 : i32, i32
  }
  func.func @transform_6(%arg0: i32, %arg1: i32) -> (i32, i32, i32) {
    %c0_i32 = arith.constant 0 : i32
    %c0_i32_0 = arith.constant 0 : i32
    %c0_i32_1 = arith.constant 0 : i32
    %c0_i32_2 = arith.constant 0 : i32
    return %c0_i32, %c0_i32_0, %c0_i32_1 : i32, i32, i32
  }
  func.func @transform_7(%arg0: i32, %arg1: i32) -> (i32, i32, i32) {
    %c0_i32 = arith.constant 0 : i32
    %c0_i32_0 = arith.constant 0 : i32
    %c0_i32_1 = arith.constant 0 : i32
    %c0_i32_2 = arith.constant 0 : i32
    return %c0_i32, %c0_i32_0, %c0_i32_1 : i32, i32, i32
  }
  func.func @transform_8(%arg0: i32, %arg1: i32) -> (i32, i32, i32) {
    %c0_i32 = arith.constant 0 : i32
    %c0_i32_0 = arith.constant 0 : i32
    %c0_i32_1 = arith.constant 0 : i32
    %c0_i32_2 = arith.constant 0 : i32
    return %c0_i32, %c0_i32_0, %c0_i32_1 : i32, i32, i32
  }
  func.func @transform_9(%arg0: i32, %arg1: i32) -> (i32, i32, i32) {
    %c0_i32 = arith.constant 0 : i32
    %c0_i32_0 = arith.constant 0 : i32
    %c0_i32_1 = arith.constant 0 : i32
    %c0_i32_2 = arith.constant 0 : i32
    return %c0_i32, %c0_i32_0, %c0_i32_1 : i32, i32, i32
  }
  func.func @transform_10(%arg0: i32, %arg1: i32) -> (i32, i32, i32) {
    %c0_i32 = arith.constant 0 : i32
    %c0_i32_0 = arith.constant 0 : i32
    %c0_i32_1 = arith.constant 0 : i32
    %c0_i32_2 = arith.constant 0 : i32
    return %c0_i32, %c0_i32_0, %c0_i32_1 : i32, i32, i32
  }
  func.func @transform_11(%arg0: i32, %arg1: i32) -> (i32, i32, i32) {
    %c0_i32 = arith.constant 0 : i32
    %c0_i32_0 = arith.constant 0 : i32
    %c0_i32_1 = arith.constant 0 : i32
    %c0_i32_2 = arith.constant 0 : i32
    return %c0_i32, %c0_i32_0, %c0_i32_1 : i32, i32, i32
  }
  func.func @transform_12(%arg0: i32, %arg1: i32) -> (i32, i32) {
    %c0_i32 = arith.constant 0 : i32
    %c0_i32_0 = arith.constant 0 : i32
    return %arg0, %c0_i32 : i32, i32
  }
}

</mosaic_0001>

<llo_original>
// kernel: mul.2
$region0: #{mul.2}
  #allocation0 [shape = 's32[1]{0}', space=sflag, size = 0x4, scoped, tag = 'scoped memory for mul.2']
  %s0 = inlined_call_operand.<no memory space> [shape: f32[], index: 0, kind: input, shape index: {}]
  %s1 = inlined_call_operand.vmem [shape: f32[63], index: 1, kind: output, shape index: {}]
  %v2 = vstv %s0
  %3 = vst [vmem:[%s1] sm:$0x1] %v2

// kernel: ne.5
$region0: #{ne.5}
  #allocation0 [shape = 's32[1]{0}', space=sflag, size = 0x4, scoped, tag = 'scoped memory for ne.5']
  %s0 = inlined_call_operand.vmem [shape: s32[256], index: 0, kind: input, shape index: {}]
  %s1 = inlined_call_operand.vmem [shape: s32[256], index: 1, kind: input, shape index: {}]
  %s2 = inlined_call_operand.vmem [shape: pred[256], index: 2, kind: output, shape index: {}]
  %v3 = vld [vmem:[%s0] sm:$0x3]
  %v4 = vld [vmem:[%s1] sm:$0x3]
  %5 = xla_tuple %v3, %v4
  %6 = xla_tuple %5
  %vm7 = vcmp.ne.s32.totalorder %v3, %v4
  %v8 = vsel %vm7, 1, 0
  %9 = xla_tuple %v8
  %v10 = vpack.c.b16 0, %v8
  %v11 = vpack.c.b8 0, %v10
  %13 = vst [vmem:[%s2] sm:$0x1] %v11

// kernel: dimenet_forward.1
$region0: #{dimenet_forward.1}
  #allocation0 [shape = 'u32[]', space=smem, size = 0x4, offset = 0x4, fixed_abs, tag = 'smem constant byte address 0x4 - core index']
  #allocation1 [shape = 'u32[144,128]{1,0:T(1,128)}', space=vmem, size = 0x12000, scoped, tag = 'internal scratch']
  #allocation2 [shape = 'f32[16,512]{1,0:T(8,128)}', space=vmem, size = 0x8000, scoped, tag = 'scratch operand']
  #allocation3 [shape = 'f32[256,512]{1,0:T(8,128)}', space=vmem, size = 0x80000, scoped, tag = 'scratch operand']
  #allocation4 [shape = 'f32[256,512]{1,0:T(8,128)}', space=vmem, size = 0x80000, scoped, tag = 'scratch operand']
  %s0 = inlined_call_operand.vmem [shape: f32[512,128], index: 0, kind: input, shape index: {}]
  %s1 = inlined_call_operand.vmem [shape: s32[1,512], index: 1, kind: input, shape index: {}]
  %s2 = inlined_call_operand.vmem [shape: f32[32,128], index: 2, kind: input, shape index: {}]
  %s3 = inlined_call_operand.vmem [shape: f32[32,1], index: 3, kind: input, shape index: {}]
  %s4 = inlined_call_operand.vmem [shape: f32[128,512], index: 4, kind: input, shape index: {}]
  %s5 = inlined_call_operand.vmem [shape: f32[1,512], index: 5, kind: input, shape index: {}]
  %s6 = inlined_call_operand.vmem [shape: f32[4,128,128], index: 6, kind: input, shape index: {}]
  %s7 = inlined_call_operand.vmem [shape: f32[4,1,128], index: 7, kind: input, shape index: {}]
  %s8 = inlined_call_operand.vmem [shape: f32[4,128,128], index: 8, kind: input, shape index: {}]
  %s9 = inlined_call_operand.vmem [shape: f32[4,1,128], index: 9, kind: input, shape index: {}]
  %s10 = inlined_call_operand.vmem [shape: f32[4,128,128], index: 10, kind: input, shape index: {}]
  %s11 = inlined_call_operand.vmem [shape: f32[4,1,128], index: 11, kind: input, shape index: {}]
  %s12 = inlined_call_operand.hbm [shape: f32[32,128], index: 12, kind: output, shape index: {}]
  %s13 = sld [smem:[#allocation0]]
  $region89: #{dimenet_forward.1} parent=0
    _
  %s15 = ssub.s32 1, %s13
  %s16 = scalar_select 0, %s15, %s13
  $region1: #{dimenet_forward.1} parent=0
    #allocation5 [shape = 'u8[16384]{0}', space=vmem, size = 0x4000, scoped, tag = 'output window, operand 0']
    #allocation6 [shape = 's32[2]{0}', space=sflag, size = 0x8, scoped, tag = 'scoped memory for dimenet_forward.1']
    %17 = vsyncpa [#allocation6], 0
    %s18 = scalar_lea.sflag [#allocation6], 1
    %19 = vsyncpa %s18, 0
    loop: start=0, step=1, limit=4
    $region2: #{dimenet_forward.1} parent=1 // loop_pre_header
      _
    $region3: #{dimenet_forward.1} parent=1 // loop_header
      %s21 = sphi 0, %s25
      %p22 = scmp.ge.s32.totalorder %s21, 4
      %s28 = sphi 0, %s40
      %s29 = sphi 0, %s36
      %s30 = sphi 0, %s28
      %s31 = sphi 0, %s29
      %s32 = sphi 0, %s30
      %s33 = sphi 0, %s31
      %s45 = sphi 0, %s47
      %s48 = sphi 0, %s45
      %s49 = sphi 0, %s48
      %s65 = sphi 0, %s49
      %s73 = sphi 0, %s75
      %s76 = sphi 0, %s73
      %s77 = sphi 0, %s76
      %s93 = sphi 0, %s77
      %s99 = sphi 0, %s101
      %s102 = sphi 0, %s99
      %s103 = sphi 0, %s102
      %s119 = sphi 0, %s103
      %s125 = sphi 0, %s127
      %s128 = sphi 0, %s125
      %s129 = sphi 0, %s128
      %s145 = sphi 0, %s129
      %s149 = sphi 0, %s149
      %s151 = sphi 0, %s149
      %s152 = sphi 0, %s151
      %s166 = sphi 0, %s152
      %s170 = sphi 0, %s170
      %s172 = sphi 0, %s170
      %s173 = sphi 0, %s172
      %s187 = sphi 0, %s173
      %s191 = sphi 0, %s191
      %s193 = sphi 0, %s191
      %s194 = sphi 0, %s193
      %s208 = sphi 0, %s194
      %s212 = sphi 0, %s212
      %s214 = sphi 0, %s212
      %s215 = sphi 0, %s214
      %s229 = sphi 0, %s215
      %s233 = sphi 0, %s233
      %s235 = sphi 0, %s233
      %s236 = sphi 0, %s235
      %s250 = sphi 0, %s236
      %s254 = sphi 0, %s254
      %s256 = sphi 0, %s254
      %s257 = sphi 0, %s256
      %s271 = sphi 0, %s257
      %s275 = sphi 0, %s275
      %s277 = sphi 0, %s275
      %s278 = sphi 0, %s277
      %s292 = sphi 0, %s278
      %s296 = sphi 0, %s296
      %s298 = sphi 0, %s296
      %s299 = sphi 0, %s298
      %s313 = sphi 0, %s299
      %s319 = sphi 0, %s321
      %s322 = sphi 0, %s319
      %s323 = sphi 0, %s322
      %s339 = sphi 0, %s323
    $region4: #{dimenet_forward.1} parent=1 // loop_header_branch
      %24 = sbr.rel (%p22) target = $region8
    $region5: #{dimenet_forward.1} parent=1 // loop_body
      %s26 = ssub.s32 %s21, 1
      %s27 = ssub.s32 %s21, 2
      %s34 = sadd.s32 1, %s29
      %p35 = scmp.ge.s32.totalorder %s34, 1
      %s36 = scalar_select %p35, 0, %s34
      %s37 = sadd.s32 1, %s28
      %s38 = scalar_select %p35, %s37, %s28
      %p39 = scmp.ge.s32.totalorder %s38, 2
      %s40 = scalar_select %p39, 0, %s38
      %s41 = sadd.s32 %s28, %s29
      %s42 = sadd.s32 %s40, %s36
      %s43 = ssub.s32 %s41, %s42
      %p44 = scmp.eq.s32.totalorder %s43, 0
      %s46 = sadd.s32 %s45, 1
      %s47 = scalar_select %p44, %s45, %s46
      %p50 = pneg %p44
      %p51 = scmp.eq.s32.totalorder %s21, 1
      %p52 = por %p50, %p51
      %p53 = scmp.ne.s32.totalorder %s45, %s48
      %p54 = scmp.eq.s32.totalorder %s21, 0
      %p55 = por %p53, %p54
      %p56 = scmp.ne.s32.totalorder %s45, %s48
      %p57 = scmp.eq.s32.totalorder %s26, 1
      %p58 = por %p56, %p57
      %p59 = scmp.ne.s32.totalorder %s48, %s49
      %p60 = scmp.eq.s32.totalorder %s26, 0
      %p61 = por %p59, %p60
      %p62 = scmp.ne.s32.totalorder %s48, %s49
      %p63 = scmp.eq.s32.totalorder %s27, 1
      %p64 = por %p62, %p63
      %p66 = scmp.ne.s32.totalorder %s49, %s65
      %p67 = scmp.eq.s32.totalorder %s27, 0
      %p68 = por %p66, %p67
      %s69 = sadd.s32 %s28, %s29
      %s70 = sadd.s32 %s40, %s36
      %s71 = ssub.s32 %s69, %s70
      %p72 = scmp.eq.s32.totalorder %s71, 0
      %s74 = sadd.s32 %s73, 1
      %s75 = scalar_select %p72, %s73, %s74
      %p78 = pneg %p72
      %p79 = scmp.eq.s32.totalorder %s21, 1
      %p80 = por %p78, %p79
      %p81 = scmp.ne.s32.totalorder %s73, %s76
      %p82 = scmp.eq.s32.totalorder %s21, 0
      %p83 = por %p81, %p82
      %p84 = scmp.ne.s32.totalorder %s73, %s76
      %p85 = scmp.eq.s32.totalorder %s26, 1
      %p86 = por %p84, %p85
      %p87 = scmp.ne.s32.totalorder %s76, %s77
      %p88 = scmp.eq.s32.totalorder %s26, 0
      %p89 = por %p87, %p88
      %p90 = scmp.ne.s32.totalorder %s76, %s77
      %p91 = scmp.eq.s32.totalorder %s27, 1
      %p92 = por %p90, %p91
      %p94 = scmp.ne.s32.totalorder %s77, %s93
      %p95 = scmp.eq.s32.totalorder %s27, 0
      %p96 = por %p94, %p95
      %s97 = ssub.s32 %s28, %s40
      %p98 = scmp.eq.s32.totalorder %s97, 0
      %s100 = sadd.s32 %s99, 1
      %s101 = scalar_select %p98, %s99, %s100
      %p104 = pneg %p98
      %p105 = scmp.eq.s32.totalorder %s21, 1
      %p106 = por %p104, %p105
      %p107 = scmp.ne.s32.totalorder %s99, %s102
      %p108 = scmp.eq.s32.totalorder %s21, 0
      %p109 = por %p107, %p108
      %p110 = scmp.ne.s32.totalorder %s99, %s102
      %p111 = scmp.eq.s32.totalorder %s26, 1
      %p112 = por %p110, %p111
      %p113 = scmp.ne.s32.totalorder %s102, %s103
      %p114 = scmp.eq.s32.totalorder %s26, 0
      %p115 = por %p113, %p114
      %p116 = scmp.ne.s32.totalorder %s102, %s103
      %p117 = scmp.eq.s32.totalorder %s27, 1
      %p118 = por %p116, %p117
      %p120 = scmp.ne.s32.totalorder %s103, %s119
      %p121 = scmp.eq.s32.totalorder %s27, 0
      %p122 = por %p120, %p121
      %s123 = ssub.s32 %s28, %s40
      %p124 = scmp.eq.s32.totalorder %s123, 0
      %s126 = sadd.s32 %s125, 1
      %s127 = scalar_select %p124, %s125, %s126
      %p130 = pneg %p124
      %p131 = scmp.eq.s32.totalorder %s21, 1
      %p132 = por %p130, %p131
      %p133 = scmp.ne.s32.totalorder %s125, %s128
      %p134 = scmp.eq.s32.totalorder %s21, 0
      %p135 = por %p133, %p134
      %p136 = scmp.ne.s32.totalorder %s125, %s128
      %p137 = scmp.eq.s32.totalorder %s26, 1
      %p138 = por %p136, %p137
      %p139 = scmp.ne.s32.totalorder %s128, %s129
      %p140 = scmp.eq.s32.totalorder %s26, 0
      %p141 = por %p139, %p140
      %p142 = scmp.ne.s32.totalorder %s128, %s129
      %p143 = scmp.eq.s32.totalorder %s27, 1
      %p144 = por %p142, %p143
      %p146 = scmp.ne.s32.totalorder %s129, %s145
      %p147 = scmp.eq.s32.totalorder %s27, 0
      %p148 = por %p146, %p147
      %s150 = sadd.s32 %s149, 1
      %p153 = scmp.eq.s32.totalorder %s21, 1
      %p154 = scmp.ne.s32.totalorder %s149, %s151
      %p155 = scmp.eq.s32.totalorder %s21, 0
      %p156 = por %p154, %p155
      %p157 = scmp.ne.s32.totalorder %s149, %s151
      %p158 = scmp.eq.s32.totalorder %s26, 1
      %p159 = por %p157, %p158
      %p160 = scmp.ne.s32.totalorder %s151, %s152
      %p161 = scmp.eq.s32.totalorder %s26, 0
      %p162 = por %p160, %p161
      %p163 = scmp.ne.s32.totalorder %s151, %s152
      %p164 = scmp.eq.s32.totalorder %s27, 1
      %p165 = por %p163, %p164
      %p167 = scmp.ne.s32.totalorder %s152, %s166
      %p168 = scmp.eq.s32.totalorder %s27, 0
      %p169 = por %p167, %p168
      %s171 = sadd.s32 %s170, 1
      %p174 = scmp.eq.s32.totalorder %s21, 1
      %p175 = scmp.ne.s32.totalorder %s170, %s172
      %p176 = scmp.eq.s32.totalorder %s21, 0
      %p177 = por %p175, %p176
      %p178 = scmp.ne.s32.totalorder %s170, %s172
      %p179 = scmp.eq.s32.totalorder %s26, 1
      %p180 = por %p178, %p179
      %p181 = scmp.ne.s32.totalorder %s172, %s173
      %p182 = scmp.eq.s32.totalorder %s26, 0
      %p183 = por %p181, %p182
      %p184 = scmp.ne.s32.totalorder %s172, %s173
      %p185 = scmp.eq.s32.totalorder %s27, 1
      %p186 = por %p184, %p185
      %p188 = scmp.ne.s32.totalorder %s173, %s187
      %p189 = scmp.eq.s32.totalorder %s27, 0
      %p190 = por %p188, %p189
      %s192 = sadd.s32 %s191, 1
      %p195 = scmp.eq.s32.totalorder %s21, 1
      %p196 = scmp.ne.s32.totalorder %s191, %s193
      %p197 = scmp.eq.s32.totalorder %s21, 0
      %p198 = por %p196, %p197
      %p199 = scmp.ne.s32.totalorder %s191, %s193
      %p200 = scmp.eq.s32.totalorder %s26, 1
      %p201 = por %p199, %p200
      %p202 = scmp.ne.s32.totalorder %s193, %s194
      %p203 = scmp.eq.s32.totalorder %s26, 0
      %p204 = por %p202, %p203
      %p205 = scmp.ne.s32.totalorder %s193, %s194
      %p206 = scmp.eq.s32.totalorder %s27, 1
      %p207 = por %p205, %p206
      %p209 = scmp.ne.s32.totalorder %s194, %s208
      %p210 = scmp.eq.s32.totalorder %s27, 0
      %p211 = por %p209, %p210
      %s213 = sadd.s32 %s212, 1
      %p216 = scmp.eq.s32.totalorder %s21, 1
      %p217 = scmp.ne.s32.totalorder %s212, %s214
      %p218 = scmp.eq.s32.totalorder %s21, 0
      %p219 = por %p217, %p218
      %p220 = scmp.ne.s32.totalorder %s212, %s214
      %p221 = scmp.eq.s32.totalorder %s26, 1
      %p222 = por %p220, %p221
      %p223 = scmp.ne.s32.totalorder %s214, %s215
      %p224 = scmp.eq.s32.totalorder %s26, 0
      %p225 = por %p223, %p224
      %p226 = scmp.ne.s32.totalorder %s214, %s215
      %p227 = scmp.eq.s32.totalorder %s27, 1
      %p228 = por %p226, %p227
      %p230 = scmp.ne.s32.totalorder %s215, %s229
      %p231 = scmp.eq.s32.totalorder %s27, 0
      %p232 = por %p230, %p231
      %s234 = sadd.s32 %s233, 1
      %p237 = scmp.eq.s32.totalorder %s21, 1
      %p238 = scmp.ne.s32.totalorder %s233, %s235
      %p239 = scmp.eq.s32.totalorder %s21, 0
      %p240 = por %p238, %p239
      %p241 = scmp.ne.s32.totalorder %s233, %s235
      %p242 = scmp.eq.s32.totalorder %s26, 1
      %p243 = por %p241, %p242
      %p244 = scmp.ne.s32.totalorder %s235, %s236
      %p245 = scmp.eq.s32.totalorder %s26, 0
      %p246 = por %p244, %p245
      %p247 = scmp.ne.s32.totalorder %s235, %s236
      %p248 = scmp.eq.s32.totalorder %s27, 1
      %p249 = por %p247, %p248
      %p251 = scmp.ne.s32.totalorder %s236, %s250
      %p252 = scmp.eq.s32.totalorder %s27, 0
      %p253 = por %p251, %p252
      %s255 = sadd.s32 %s254, 1
      %p258 = scmp.eq.s32.totalorder %s21, 1
      %p259 = scmp.ne.s32.totalorder %s254, %s256
      %p260 = scmp.eq.s32.totalorder %s21, 0
      %p261 = por %p259, %p260
      %p262 = scmp.ne.s32.totalorder %s254, %s256
      %p263 = scmp.eq.s32.totalorder %s26, 1
      %p264 = por %p262, %p263
      %p265 = scmp.ne.s32.totalorder %s256, %s257
      %p266 = scmp.eq.s32.totalorder %s26, 0
      %p267 = por %p265, %p266
      %p268 = scmp.ne.s32.totalorder %s256, %s257
      %p269 = scmp.eq.s32.totalorder %s27, 1
      %p270 = por %p268, %p269
      %p272 = scmp.ne.s32.totalorder %s257, %s271
      %p273 = scmp.eq.s32.totalorder %s27, 0
      %p274 = por %p272, %p273
      %s276 = sadd.s32 %s275, 1
      %p279 = scmp.eq.s32.totalorder %s21, 1
      %p280 = scmp.ne.s32.totalorder %s275, %s277
      %p281 = scmp.eq.s32.totalorder %s21, 0
      %p282 = por %p280, %p281
      %p283 = scmp.ne.s32.totalorder %s275, %s277
      %p284 = scmp.eq.s32.totalorder %s26, 1
      %p285 = por %p283, %p284
      %p286 = scmp.ne.s32.totalorder %s277, %s278
      %p287 = scmp.eq.s32.totalorder %s26, 0
      %p288 = por %p286, %p287
      %p289 = scmp.ne.s32.totalorder %s277, %s278
      %p290 = scmp.eq.s32.totalorder %s27, 1
      %p291 = por %p289, %p290
      %p293 = scmp.ne.s32.totalorder %s278, %s292
      %p294 = scmp.eq.s32.totalorder %s27, 0
      %p295 = por %p293, %p294
      %s297 = sadd.s32 %s296, 1
      %p300 = scmp.eq.s32.totalorder %s21, 1
      %p301 = scmp.ne.s32.totalorder %s296, %s298
      %p302 = scmp.eq.s32.totalorder %s21, 0
      %p303 = por %p301, %p302
      %p304 = scmp.ne.s32.totalorder %s296, %s298
      %p305 = scmp.eq.s32.totalorder %s26, 1
      %p306 = por %p304, %p305
      %p307 = scmp.ne.s32.totalorder %s298, %s299
      %p308 = scmp.eq.s32.totalorder %s26, 0
      %p309 = por %p307, %p308
      %p310 = scmp.ne.s32.totalorder %s298, %s299
      %p311 = scmp.eq.s32.totalorder %s27, 1
      %p312 = por %p310, %p311
      %p314 = scmp.ne.s32.totalorder %s299, %s313
      %p315 = scmp.eq.s32.totalorder %s27, 0
      %p316 = por %p314, %p315
      %s317 = ssub.s32 %s28, %s40
      %p318 = scmp.eq.s32.totalorder %s317, 0
      %s320 = sadd.s32 %s319, 1
      %s321 = scalar_select %p318, %s319, %s320
      %p324 = pneg %p318
      %p325 = scmp.eq.s32.totalorder %s21, 1
      %p326 = por %p324, %p325
      %p327 = scmp.ne.s32.totalorder %s319, %s322
      %p328 = scmp.eq.s32.totalorder %s21, 0
      %p329 = por %p327, %p328
      %p330 = scmp.ne.s32.totalorder %s319, %s322
      %p331 = scmp.eq.s32.totalorder %s26, 1
      %p332 = por %p330, %p331
      %p333 = scmp.ne.s32.totalorder %s322, %s323
      %p334 = scmp.eq.s32.totalorder %s26, 0
      %p335 = por %p333, %p334
      %p336 = scmp.ne.s32.totalorder %s322, %s323
      %p337 = scmp.eq.s32.totalorder %s27, 1
      %p338 = por %p336, %p337
      %p340 = scmp.ne.s32.totalorder %s323, %s339
      %p341 = scmp.eq.s32.totalorder %s27, 0
      %p342 = por %p340, %p341
      %p343 = scmp.le.s32.totalorder 1, %s21
      %p344 = scmp.lt.s32.totalorder %s21, 3
      %p345 = pnand %p343, %p344
      %p346 = pneg %p345
      // Predicated region
      $region9: #{dimenet_forward.1} parent=5 // pred_check
        _
      $region10: #{dimenet_forward.1} parent=5 // pred_check_branch
        %348 = sbr.rel (%p345) target = $region12
      $region11: #{dimenet_forward.1} parent=5 // pred_region
        %s349 = ssub.s32 %s21, 1
        // Predicated region
        $region13: #{dimenet_forward.1} parent=11 // pred_check
          %p350 = pneg %p162
        $region14: #{dimenet_forward.1} parent=11 // pred_check_branch
          %352 = sbr.rel (%p350) target = $region16
        $region15: #{dimenet_forward.1} parent=11 // pred_region
          _
        $region16: #{dimenet_forward.1} parent=11 // pred_fallthru
          _
        // Predicated region
        $region17: #{dimenet_forward.1} parent=11 // pred_check
          %p353 = pneg %p183
        $region18: #{dimenet_forward.1} parent=11 // pred_check_branch
          %355 = sbr.rel (%p353) target = $region20
        $region19: #{dimenet_forward.1} parent=11 // pred_region
          _
        $region20: #{dimenet_forward.1} parent=11 // pred_fallthru
          _
        // Predicated region
        $region21: #{dimenet_forward.1} parent=11 // pred_check
          %p356 = pneg %p204
        $region22: #{dimenet_forward.1} parent=11 // pred_check_branch
          %358 = sbr.rel (%p356) target = $region24
        $region23: #{dimenet_forward.1} parent=11 // pred_region
          _
        $region24: #{dimenet_forward.1} parent=11 // pred_fallthru
          _
        // Predicated region
        $region25: #{dimenet_forward.1} parent=11 // pred_check
          %p359 = pneg %p225
        $region26: #{dimenet_forward.1} parent=11 // pred_check_branch
          %361 = sbr.rel (%p359) target = $region28
        $region27: #{dimenet_forward.1} parent=11 // pred_region
          _
        $region28: #{dimenet_forward.1} parent=11 // pred_fallthru
          _
        // Predicated region
        $region29: #{dimenet_forward.1} parent=11 // pred_check
          %p362 = pneg %p246
        $region30: #{dimenet_forward.1} parent=11 // pred_check_branch
          %364 = sbr.rel (%p362) target = $region32
        $region31: #{dimenet_forward.1} parent=11 // pred_region
          _
        $region32: #{dimenet_forward.1} parent=11 // pred_fallthru
          _
        // Predicated region
        $region33: #{dimenet_forward.1} parent=11 // pred_check
          %p365 = pneg %p267
        $region34: #{dimenet_forward.1} parent=11 // pred_check_branch
          %367 = sbr.rel (%p365) target = $region36
        $region35: #{dimenet_forward.1} parent=11 // pred_region
          _
        $region36: #{dimenet_forward.1} parent=11 // pred_fallthru
          _
        // Predicated region
        $region37: #{dimenet_forward.1} parent=11 // pred_check
          %p368 = pneg %p288
        $region38: #{dimenet_forward.1} parent=11 // pred_check_branch
          %370 = sbr.rel (%p368) target = $region40
        $region39: #{dimenet_forward.1} parent=11 // pred_region
          _
        $region40: #{dimenet_forward.1} parent=11 // pred_fallthru
          _
        // Predicated region
        $region41: #{dimenet_forward.1} parent=11 // pred_check
          %p371 = pneg %p309
        $region42: #{dimenet_forward.1} parent=11 // pred_check_branch
          %373 = sbr.rel (%p371) target = $region44
        $region43: #{dimenet_forward.1} parent=11 // pred_region
          _
        $region44: #{dimenet_forward.1} parent=11 // pred_fallthru
          _
      $region12: #{dimenet_forward.1} parent=5 // pred_fallthru
        _
      %p374 = scmp.lt.s32.totalorder %s21, 2
      // Predicated region
      $region45: #{dimenet_forward.1} parent=5 // pred_check
        %p375 = pneg %p374
      $region46: #{dimenet_forward.1} parent=5 // pred_check_branch
        %377 = sbr.rel (%p375) target = $region48
      $region47: #{dimenet_forward.1} parent=5 // pred_region
        // Predicated region
        $region49: #{dimenet_forward.1} parent=47 // pred_check
          %p378 = pneg %p55
        $region50: #{dimenet_forward.1} parent=47 // pred_check_branch
          %380 = sbr.rel (%p378) target = $region52
        $region51: #{dimenet_forward.1} parent=47 // pred_region
          %s381 = sadd.s32 %s28, %s29
          %s382 = smul.u32 32, %s381
          %p383 = scmp.lt.s32.totalorder %s382, 63
          %s384 = scalar_select %p383, %s382, 63
          %s385 = smul.addr %s384, 8
          %s386 = scalar_lea.vmem %s0, %s385
          %s387 = sadd.s32 %s28, %s29
          %s388 = smul.u32 32, %s387
        $region52: #{dimenet_forward.1} parent=47 // pred_fallthru
          _
        // Predicated region
        $region53: #{dimenet_forward.1} parent=47 // pred_check
          %p389 = pneg %p83
        $region54: #{dimenet_forward.1} parent=47 // pred_check_branch
          %391 = sbr.rel (%p389) target = $region56
        $region55: #{dimenet_forward.1} parent=47 // pred_region
          %s392 = sadd.s32 %s28, %s29
          %s393 = smul.u32 2, %s392
          %p394 = scmp.lt.s32.totalorder %s393, 3
          %s395 = scalar_select %p394, %s393, 3
          %s396 = scalar_lea.vmem %s1, %s395
          %s397 = sadd.s32 %s28, %s29
          %s398 = smul.u32 2, %s397
        $region56: #{dimenet_forward.1} parent=47 // pred_fallthru
          _
        // Predicated region
        $region57: #{dimenet_forward.1} parent=47 // pred_check
          %p399 = pneg %p109
        $region58: #{dimenet_forward.1} parent=47 // pred_check_branch
          %401 = sbr.rel (%p399) target = $region60
        $region59: #{dimenet_forward.1} parent=47 // pred_region
          %s402 = smul.u32 2, %s28
          %p403 = scmp.lt.s32.totalorder %s402, 3
          %s404 = scalar_select %p403, %s402, 3
          %s405 = smul.addr %s404, 8
          %s406 = scalar_lea.vmem %s2, %s405
          %s407 = smul.u32 2, %s28
        $region60: #{dimenet_forward.1} parent=47 // pred_fallthru
          _
        // Predicated region
        $region61: #{dimenet_forward.1} parent=47 // pred_check
          %p408 = pneg %p135
        $region62: #{dimenet_forward.1} parent=47 // pred_check_branch
          %410 = sbr.rel (%p408) target = $region64
        $region63: #{dimenet_forward.1} parent=47 // pred_region
          %s411 = smul.u32 2, %s28
          %p412 = scmp.lt.s32.totalorder %s411, 3
          %s413 = scalar_select %p412, %s411, 3
          %s414 = smul.addr %s413, 8
          %s415 = scalar_lea.vmem %s3, %s414
          %s416 = smul.u32 2, %s28
        $region64: #{dimenet_forward.1} parent=47 // pred_fallthru
          _
      $region48: #{dimenet_forward.1} parent=5 // pred_fallthru
        _
      %p417 = scmp.le.s32.totalorder 1, %s21
      %p418 = scmp.lt.s32.totalorder %s21, 3
      %p419 = pnand %p417, %p418
      %p420 = pneg %p419
      // Predicated region
      $region65: #{dimenet_forward.1} parent=5 // pred_check
        _
      $region66: #{dimenet_forward.1} parent=5 // pred_check_branch
        %422 = sbr.rel (%p419) target = $region68
      $region67: #{dimenet_forward.1} parent=5 // pred_region
        %s423 = ssub.s32 %s21, 1
        %s424 = sadd.s32 %s30, %s31
        %s425 = smul.u32 32, %s424
        %p426 = scmp.lt.s32.totalorder %s425, 63
        %s427 = scalar_select %p426, %s425, 63
        %s428 = smul.addr %s427, 8
        %s429 = scalar_lea.vmem %s0, %s428
        %p430 = pneg %p61
        %p431 = pneg %p58
        %s432 = sadd.s32 %s30, %s31
        %s433 = smul.u32 2, %s432
        %p434 = scmp.lt.s32.totalorder %s433, 3
        %s435 = scalar_select %p434, %s433, 3
        %s436 = scalar_lea.vmem %s1, %s435
        %p437 = pneg %p89
        %p438 = pneg %p86
        %s439 = smul.u32 2, %s30
        %p440 = scmp.lt.s32.totalorder %s439, 3
        %s441 = scalar_select %p440, %s439, 3
        %s442 = smul.addr %s441, 8
        %s443 = scalar_lea.vmem %s2, %s442
        %p444 = pneg %p115
        %p445 = pneg %p112
        %s446 = smul.u32 2, %s30
        %p447 = scmp.lt.s32.totalorder %s446, 3
        %s448 = scalar_select %p447, %s446, 3
        %s449 = smul.addr %s448, 8
        %s450 = scalar_lea.vmem %s3, %s449
        %p451 = pneg %p141
        %p452 = pneg %p138
        %p453 = pneg %p162
        %p454 = pneg %p159
        %p455 = pneg %p183
        %p456 = pneg %p180
        %p457 = pneg %p204
        %p458 = pneg %p201
        %p459 = pneg %p225
        %p460 = pneg %p222
        %p461 = pneg %p246
        %p462 = pneg %p243
        %p463 = pneg %p267
        %p464 = pneg %p264
        %p465 = pneg %p288
        %p466 = pneg %p285
        %p467 = pneg %p309
        %p468 = pneg %p306
        %p469 = pneg %p335
        %p470 = pneg %p332
        %s471 = sand.u32 %s322, 1
        %s472 = scalar_lea.sflag [#allocation6], %s471
        %s473 = sand.u32 %s322, 1
        %s474 = smul.addr %s473, 16
        %s475 = scalar_lea.vmem [#allocation5], %s474
        %s476 = sadd.s32 %s30, %s31
        %s477 = smul.u32 32, %s476
        %p478 = scmp.lt.s32.totalorder %s477, 63
        %s479 = scalar_select %p478, %s477, 63
        %s480 = smul.addr %s479, 8
        %s481 = scalar_lea.vmem %s0, %s480
        %s482 = sadd.s32 %s30, %s31
        %s483 = smul.u32 32, %s482
        %s484 = sadd.s32 %s30, %s31
        %s485 = smul.u32 2, %s484
        %p486 = scmp.lt.s32.totalorder %s485, 3
        %s487 = scalar_select %p486, %s485, 3
        %s488 = scalar_lea.vmem %s1, %s487
        %s489 = sadd.s32 %s30, %s31
        %s490 = smul.u32 2, %s489
        %s491 = smul.u32 2, %s30
        %p492 = scmp.lt.s32.totalorder %s491, 3
        %s493 = scalar_select %p492, %s491, 3
        %s494 = smul.addr %s493, 8
        %s495 = scalar_lea.vmem %s2, %s494
        %s496 = smul.u32 2, %s30
        %s497 = smul.u32 2, %s30
        %p498 = scmp.lt.s32.totalorder %s497, 3
        %s499 = scalar_select %p498, %s497, 3
        %s500 = smul.addr %s499, 8
        %s501 = scalar_lea.vmem %s3, %s500
        %s502 = smul.u32 2, %s30
        %s503 = smul.u32 2, %s30
        %p504 = scmp.eq.s32.totalorder %s31, 0
        // Predicated region
        $region69: #{dimenet_forward.1} parent=67 // pred_check
          %p505 = pneg %p504
        $region70: #{dimenet_forward.1} parent=67 // pred_check_branch
          %507 = sbr.rel (%p505) target = $region72
        $region71: #{dimenet_forward.1} parent=67 // pred_region
          %508 = vst [vmem:[#allocation2] sm:$0xff] 0.0
          %509 = vst [vmem:[#allocation2 + $0x8] sm:$0xff] 0.0
          %510 = vst [vmem:[#allocation2 + $0x10] sm:$0xff] 0.0
          %511 = vst [vmem:[#allocation2 + $0x18] sm:$0xff] 0.0
          %512 = vst [vmem:[#allocation2 + $0x20] sm:$0xff] 0.0
          %513 = vst [vmem:[#allocation2 + $0x28] sm:$0xff] 0.0
          %514 = vst [vmem:[#allocation2 + $0x30] sm:$0xff] 0.0
          %515 = vst [vmem:[#allocation2 + $0x38] sm:$0xff] 0.0
        $region72: #{dimenet_forward.1} parent=67 // pred_fallthru
          _
        %v516 = vld [vmem:[%s481] sm:$0xff]
        %v517 = vld [vmem:[%s481 + $0x8] sm:$0xff]
        %v518 = vld [vmem:[%s481 + $0x10] sm:$0xff]
        %v519 = vld [vmem:[%s481 + $0x18] sm:$0xff]
        %v520 = vld [vmem:[%s481 + $0x20] sm:$0xff]
        %v521 = vld [vmem:[%s481 + $0x28] sm:$0xff]
        %v522 = vld [vmem:[%s481 + $0x30] sm:$0xff]
        %v523 = vld [vmem:[%s481 + $0x38] sm:$0xff]
        %v524 = vld [vmem:[%s481 + $0x40] sm:$0xff]
        %v525 = vld [vmem:[%s481 + $0x48] sm:$0xff]
        %v526 = vld [vmem:[%s481 + $0x50] sm:$0xff]
        %v527 = vld [vmem:[%s481 + $0x58] sm:$0xff]
        %v528 = vld [vmem:[%s481 + $0x60] sm:$0xff]
        %v529 = vld [vmem:[%s481 + $0x68] sm:$0xff]
        %v530 = vld [vmem:[%s481 + $0x70] sm:$0xff]
        %v531 = vld [vmem:[%s481 + $0x78] sm:$0xff]
        %v532 = vld [vmem:[%s481 + $0x80] sm:$0xff]
        %v533 = vld [vmem:[%s481 + $0x88] sm:$0xff]
        %v534 = vld [vmem:[%s481 + $0x90] sm:$0xff]
        %v535 = vld [vmem:[%s481 + $0x98] sm:$0xff]
        %v536 = vld [vmem:[%s481 + $0xa0] sm:$0xff]
        %v537 = vld [vmem:[%s481 + $0xa8] sm:$0xff]
        %v538 = vld [vmem:[%s481 + $0xb0] sm:$0xff]
        %v539 = vld [vmem:[%s481 + $0xb8] sm:$0xff]
        %v540 = vld [vmem:[%s481 + $0xc0] sm:$0xff]
        %v541 = vld [vmem:[%s481 + $0xc8] sm:$0xff]
        %v542 = vld [vmem:[%s481 + $0xd0] sm:$0xff]
        %v543 = vld [vmem:[%s481 + $0xd8] sm:$0xff]
        %v544 = vld [vmem:[%s481 + $0xe0] sm:$0xff]
        %v545 = vld [vmem:[%s481 + $0xe8] sm:$0xff]
        %v546 = vld [vmem:[%s481 + $0xf0] sm:$0xff]
        %v547 = vld [vmem:[%s481 + $0xf8] sm:$0xff]
        %v548 = vld [vmem:[%s4] sm:$0xff]
        %v549 = vld [vmem:[%s4 + $0x8] sm:$0xff]
        %v550 = vld [vmem:[%s4 + $0x10] sm:$0xff]
        %v551 = vld [vmem:[%s4 + $0x18] sm:$0xff]
        %v552 = vld [vmem:[%s4 + $0x20] sm:$0xff]
        %v553 = vld [vmem:[%s4 + $0x28] sm:$0xff]
        %v554 = vld [vmem:[%s4 + $0x30] sm:$0xff]
        %v555 = vld [vmem:[%s4 + $0x38] sm:$0xff]
        %v556 = vld [vmem:[%s4 + $0x40] sm:$0xff]
        %v557 = vld [vmem:[%s4 + $0x48] sm:$0xff]
        %v558 = vld [vmem:[%s4 + $0x50] sm:$0xff]
        %v559 = vld [vmem:[%s4 + $0x58] sm:$0xff]
        %v560 = vld [vmem:[%s4 + $0x60] sm:$0xff]
        %v561 = vld [vmem:[%s4 + $0x68] sm:$0xff]
        %v562 = vld [vmem:[%s4 + $0x70] sm:$0xff]
        %v563 = vld [vmem:[%s4 + $0x78] sm:$0xff]
        %v564 = vld [vmem:[%s4 + $0x80] sm:$0xff]
        %v565 = vld [vmem:[%s4 + $0x88] sm:$0xff]
        %v566 = vld [vmem:[%s4 + $0x90] sm:$0xff]
        %v567 = vld [vmem:[%s4 + $0x98] sm:$0xff]
        %v568 = vld [vmem:[%s4 + $0xa0] sm:$0xff]
        %v569 = vld [vmem:[%s4 + $0xa8] sm:$0xff]
        %v570 = vld [vmem:[%s4 + $0xb0] sm:$0xff]
        %v571 = vld [vmem:[%s4 + $0xb8] sm:$0xff]
        %v572 = vld [vmem:[%s4 + $0xc0] sm:$0xff]
        %v573 = vld [vmem:[%s4 + $0xc8] sm:$0xff]
        %v574 = vld [vmem:[%s4 + $0xd0] sm:$0xff]
        %v575 = vld [vmem:[%s4 + $0xd8] sm:$0xff]
        %v576 = vld [vmem:[%s4 + $0xe0] sm:$0xff]
        %v577 = vld [vmem:[%s4 + $0xe8] sm:$0xff]
        %v578 = vld [vmem:[%s4 + $0xf0] sm:$0xff]
        %v579 = vld [vmem:[%s4 + $0xf8] sm:$0xff]
        %v580 = vld [vmem:[%s4 + $0x100] sm:$0xff]
        %v581 = vld [vmem:[%s4 + $0x108] sm:$0xff]
        %v582 = vld [vmem:[%s4 + $0x110] sm:$0xff]
        %v583 = vld [vmem:[%s4 + $0x118] sm:$0xff]
        %v584 = vld [vmem:[%s4 + $0x120] sm:$0xff]
        %v585 = vld [vmem:[%s4 + $0x128] sm:$0xff]
        %v586 = vld [vmem:[%s4 + $0x130] sm:$0xff]
        %v587 = vld [vmem:[%s4 + $0x138] sm:$0xff]
        %v588 = vld [vmem:[%s4 + $0x140] sm:$0xff]
        %v589 = vld [vmem:[%s4 + $0x148] sm:$0xff]
        %v590 = vld [vmem:[%s4 + $0x150] sm:$0xff]
        %v591 = vld [vmem:[%s4 + $0x158] sm:$0xff]
        %v592 = vld [vmem:[%s4 + $0x160] sm:$0xff]
        %v593 = vld [vmem:[%s4 + $0x168] sm:$0xff]
        %v594 = vld [vmem:[%s4 + $0x170] sm:$0xff]
        %v595 = vld [vmem:[%s4 + $0x178] sm:$0xff]
        %v596 = vld [vmem:[%s4 + $0x180] sm:$0xff]
        %v597 = vld [vmem:[%s4 + $0x188] sm:$0xff]
        %v598 = vld [vmem:[%s4 + $0x190] sm:$0xff]
        %v599 = vld [vmem:[%s4 + $0x198] sm:$0xff]
        %v600 = vld [vmem:[%s4 + $0x1a0] sm:$0xff]
        %v601 = vld [vmem:[%s4 + $0x1a8] sm:$0xff]
        %v602 = vld [vmem:[%s4 + $0x1b0] sm:$0xff]
        %v603 = vld [vmem:[%s4 + $0x1b8] sm:$0xff]
        %v604 = vld [vmem:[%s4 + $0x1c0] sm:$0xff]
        %v605 = vld [vmem:[%s4 + $0x1c8] sm:$0xff]
        %v606 = vld [vmem:[%s4 + $0x1d0] sm:$0xff]
        %v607 = vld [vmem:[%s4 + $0x1d8] sm:$0xff]
        %v608 = vld [vmem:[%s4 + $0x1e0] sm:$0xff]
        %v609 = vld [vmem:[%s4 + $0x1e8] sm:$0xff]
        %v610 = vld [vmem:[%s4 + $0x1f0] sm:$0xff]
        %v611 = vld [vmem:[%s4 + $0x1f8] sm:$0xff]
        %612 = vmatprep.subr.mxu0 %v549
        %613 = vmatpush1.msra.mxu0 %v548
        %614 = vmatprep.subr.mxu0 %v553
        %615 = vmatpush1.msra.mxu0 %v552
        %616 = vmatprep.subr.mxu0 %v557
        %617 = vmatpush1.msra.mxu0 %v556
        %618 = vmatprep.subr.mxu0 %v561
        %619 = vmatpush1.msra.mxu0 %v560
        %620 = vmatprep.subr.mxu0 %v565
        %621 = vmatpush1.msra.mxu0 %v564
        %622 = vmatprep.subr.mxu0 %v569
        %623 = vmatpush1.msra.mxu0 %v568
        %624 = vmatprep.subr.mxu0 %v573
        %625 = vmatpush1.msra.mxu0 %v572
        %626 = vmatprep.subr.mxu0 %v577
        %627 = vmatpush1.msra.mxu0 %v576
        %628 = vmatprep.subr.mxu0 %v581
        %629 = vmatpush1.msra.mxu0 %v580
        %630 = vmatprep.subr.mxu0 %v585
        %631 = vmatpush1.msra.mxu0 %v584
        %632 = vmatprep.subr.mxu0 %v589
        %633 = vmatpush1.msra.mxu0 %v588
        %634 = vmatprep.subr.mxu0 %v593
        %635 = vmatpush1.msra.mxu0 %v592
        %636 = vmatprep.subr.mxu0 %v597
        %637 = vmatpush1.msra.mxu0 %v596
        %638 = vmatprep.subr.mxu0 %v601
        %639 = vmatpush1.msra.mxu0 %v600
        %640 = vmatprep.subr.mxu0 %v605
        %641 = vmatpush1.msra.mxu0 %v604
        %642 = vmatprep.subr.mxu0 %v609
        %643 = vmatpush1.msra.mxu0 %v608
        %644 = vmatprep.subr.mxu0 0.0
        %645 = vmatpush1.msra.mxu0 0.0
        %646 = vmatprep.subr.mxu0 0.0
        %647 = vmatpush1.msra.mxu0 0.0
        %648 = vmatprep.subr.mxu0 0.0
        %649 = vmatpush1.msra.mxu0 0.0
        %650 = vmatprep.subr.mxu0 0.0
        %651 = vmatpush1.msra.mxu0 0.0
        %652 = vmatprep.subr.mxu0 0.0
        %653 = vmatpush1.msra.mxu0 0.0
        %654 = vmatprep.subr.mxu0 0.0
        %655 = vmatpush1.msra.mxu0 0.0
        %656 = vmatprep.subr.mxu0 0.0
        %657 = vmatpush1.msra.mxu0 0.0
        %658 = vmatprep.subr.mxu0 0.0
        %659 = vmatpush1.msra.mxu0 0.0
        %660 = vmatprep.subr.mxu0 0.0
        %661 = vmatpush1.msra.mxu0 0.0
        %662 = vmatprep.subr.mxu0 0.0
        %663 = vmatpush1.msra.mxu0 0.0
        %664 = vmatprep.subr.mxu0 0.0
        %665 = vmatpush1.msra.mxu0 0.0
        %666 = vmatprep.subr.mxu0 0.0
        %667 = vmatpush1.msra.mxu0 0.0
        %668 = vmatprep.subr.mxu0 0.0
        %669 = vmatpush1.msra.mxu0 0.0
        %670 = vmatprep.subr.mxu0 0.0
        %671 = vmatpush1.msra.mxu0 0.0
        %672 = vmatprep.subr.mxu0 0.0
        %673 = vmatpush1.msra.mxu0 0.0
        %674 = vmatprep.subr.mxu0 0.0
        %675 = vmatpush1.msra.mxu0 0.0
        %676 = vmatprep.mubr.f32.mxu0 0.0
        %677 = vmatmul.mubr.f32.gmra.mrb[0].mxu0 %v516
        %v678 = vpop.f32.mrb[0].mxu0
        %v679 = vadd.f32 0.0, %v678
        %v680 = vpop.f32.mrb[0].mxu0
        %v681 = vadd.f32 0.0, %v680
        %682 = vmatprep.mubr.f32.mxu0 0.0
        %683 = vmatmul.mubr.f32.gmra.mrb[0].mxu0 %v517
        %v684 = vpop.f32.mrb[0].mxu0
        %v685 = vadd.f32 0.0, %v684
        %v686 = vpop.f32.mrb[0].mxu0
        %v687 = vadd.f32 0.0, %v686
        %688 = vmatprep.mubr.f32.mxu0 0.0
        %689 = vmatmul.mubr.f32.gmra.mrb[0].mxu0 %v518
        %v690 = vpop.f32.mrb[0].mxu0
        %v691 = vadd.f32 0.0, %v690
        %v692 = vpop.f32.mrb[0].mxu0
        %v693 = vadd.f32 0.0, %v692
        %694 = vmatprep.mubr.f32.mxu0 0.0
        %695 = vmatmul.mubr.f32.gmra.mrb[0].mxu0 %v519
        %v696 = vpop.f32.mrb[0].mxu0
        %v697 = vadd.f32 0.0, %v696
        %v698 = vpop.f32.mrb[0].mxu0
        %v699 = vadd.f32 0.0, %v698
        %700 = vmatprep.mubr.f32.mxu0 0.0
        %701 = vmatmul.mubr.f32.gmra.mrb[0].mxu0 %v520
        %v702 = vpop.f32.mrb[0].mxu0
        %v703 = vadd.f32 0.0, %v702
        %v704 = vpop.f32.mrb[0].mxu0
        %v705 = vadd.f32 0.0, %v704
        %706 = vmatprep.mubr.f32.mxu0 0.0
        %707 = vmatmul.mubr.f32.gmra.mrb[0].mxu0 %v521
        %v708 = vpop.f32.mrb[0].mxu0
        %v709 = vadd.f32 0.0, %v708
        %v710 = vpop.f32.mrb[0].mxu0
        %v711 = vadd.f32 0.0, %v710
        %712 = vmatprep.mubr.f32.mxu0 0.0
        %713 = vmatmul.mubr.f32.gmra.mrb[0].mxu0 %v522
        %v714 = vpop.f32.mrb[0].mxu0
        %v715 = vadd.f32 0.0, %v714
        %v716 = vpop.f32.mrb[0].mxu0
        %v717 = vadd.f32 0.0, %v716
        %718 = vmatprep.mubr.f32.mxu0 0.0
        %719 = vmatmul.mubr.f32.gmra.mrb[0].mxu0 %v523
        %v720 = vpop.f32.mrb[0].mxu0
        %v721 = vadd.f32 0.0, %v720
        %v722 = vpop.f32.mrb[0].mxu0
        %v723 = vadd.f32 0.0, %v722
        %724 = vmatprep.mubr.f32.mxu0 0.0
        %725 = vmatmul.mubr.f32.gmra.mrb[0].mxu0 %v524
        %v726 = vpop.f32.mrb[0].mxu0
        %v727 = vadd.f32 0.0, %v726
        %v728 = vpop.f32.mrb[0].mxu0
        %v729 = vadd.f32 0.0, %v728
        %730 = vmatprep.mubr.f32.mxu0 0.0
        %731 = vmatmul.mubr.f32.gmra.mrb[0].mxu0 %v525
        %v732 = vpop.f32.mrb[0].mxu0
        %v733 = vadd.f32 0.0, %v732
        %v734 = vpop.f32.mrb[0].mxu0
        %v735 = vadd.f32 0.0, %v734
        %736 = vmatprep.mubr.f32.mxu0 0.0
        %737 = vmatmul.mubr.f32.gmra.mrb[0].mxu0 %v526
        %v738 = vpop.f32.mrb[0].mxu0
        %v739 = vadd.f32 0.0, %v738
        %v740 = vpop.f32.mrb[0].mxu0
        %v741 = vadd.f32 0.0, %v740
        %742 = vmatprep.mubr.f32.mxu0 0.0
        %743 = vmatmul.mubr.f32.gmra.mrb[0].mxu0 %v527
        %v744 = vpop.f32.mrb[0].mxu0
        %v745 = vadd.f32 0.0, %v744
        %v746 = vpop.f32.mrb[0].mxu0
        %v747 = vadd.f32 0.0, %v746
        %748 = vmatprep.mubr.f32.mxu0 0.0
        %749 = vmatmul.mubr.f32.gmra.mrb[0].mxu0 %v528
        %v750 = vpop.f32.mrb[0].mxu0
        %v751 = vadd.f32 0.0, %v750
        %v752 = vpop.f32.mrb[0].mxu0
        %v753 = vadd.f32 0.0, %v752
        %754 = vmatprep.mubr.f32.mxu0 0.0
        %755 = vmatmul.mubr.f32.gmra.mrb[0].mxu0 %v529
        %v756 = vpop.f32.mrb[0].mxu0
        %v757 = vadd.f32 0.0, %v756
        %v758 = vpop.f32.mrb[0].mxu0
        %v759 = vadd.f32 0.0, %v758
        %760 = vmatprep.mubr.f32.mxu0 0.0
        %761 = vmatmul.mubr.f32.gmra.mrb[0].mxu0 %v530
        %v762 = vpop.f32.mrb[0].mxu0
        %v763 = vadd.f32 0.0, %v762
        %v764 = vpop.f32.mrb[0].mxu0
        %v765 = vadd.f32 0.0, %v764
        %766 = vmatprep.mubr.f32.mxu0 0.0
        %767 = vmatmul.mubr.f32.gmra.mrb[0].mxu0 %v531
        %v768 = vpop.f32.mrb[0].mxu0
        %v769 = vadd.f32 0.0, %v768
        %v770 = vpop.f32.mrb[0].mxu0
        %v771 = vadd.f32 0.0, %v770
        %772 = vmatprep.mubr.f32.mxu0 0.0
        %773 = vmatmul.mubr.f32.gmra.mrb[0].mxu0 %v532
        %v774 = vpop.f32.mrb[0].mxu0
        %v775 = vadd.f32 0.0, %v774
        %v776 = vpop.f32.mrb[0].mxu0
        %v777 = vadd.f32 0.0, %v776
        %778 = vmatprep.mubr.f32.mxu0 0.0
        %779 = vmatmul.mubr.f32.gmra.mrb[0].mxu0 %v533
        %v780 = vpop.f32.mrb[0].mxu0
        %v781 = vadd.f32 0.0, %v780
        %v782 = vpop.f32.mrb[0].mxu0
        %v783 = vadd.f32 0.0, %v782
        %784 = vmatprep.mubr.f32.mxu0 0.0
        %785 = vmatmul.mubr.f32.gmra.mrb[0].mxu0 %v534
        %v786 = vpop.f32.mrb[0].mxu0
        %v787 = vadd.f32 0.0, %v786
        %v788 = vpop.f32.mrb[0].mxu0
        %v789 = vadd.f32 0.0, %v788
        %790 = vmatprep.mubr.f32.mxu0 0.0
        %791 = vmatmul.mubr.f32.gmra.mrb[0].mxu0 %v535
        %v792 = vpop.f32.mrb[0].mxu0
        %v793 = vadd.f32 0.0, %v792
        %v794 = vpop.f32.mrb[0].mxu0
        %v795 = vadd.f32 0.0, %v794
        %796 = vmatprep.mubr.f32.mxu0 0.0
        %797 = vmatmul.mubr.f32.gmra.mrb[0].mxu0 %v536
        %v798 = vpop.f32.mrb[0].mxu0
        %v799 = vadd.f32 0.0, %v798
        %v800 = vpop.f32.mrb[0].mxu0
        %v801 = vadd.f32 0.0, %v800
        %802 = vmatprep.mubr.f32.mxu0 0.0
        %803 = vmatmul.mubr.f32.gmra.mrb[0].mxu0 %v537
        %v804 = vpop.f32.mrb[0].mxu0
        %v805 = vadd.f32 0.0, %v804
        %v806 = vpop.f32.mrb[0].mxu0
        %v807 = vadd.f32 0.0, %v806
        %808 = vmatprep.mubr.f32.mxu0 0.0
        %809 = vmatmul.mubr.f32.gmra.mrb[0].mxu0 %v538
        %v810 = vpop.f32.mrb[0].mxu0
        %v811 = vadd.f32 0.0, %v810
        %v812 = vpop.f32.mrb[0].mxu0
        %v813 = vadd.f32 0.0, %v812
        %814 = vmatprep.mubr.f32.mxu0 0.0
        %815 = vmatmul.mubr.f32.gmra.mrb[0].mxu0 %v539
        %v816 = vpop.f32.mrb[0].mxu0
        %v817 = vadd.f32 0.0, %v816
        %v818 = vpop.f32.mrb[0].mxu0
        %v819 = vadd.f32 0.0, %v818
        %820 = vmatprep.mubr.f32.mxu0 0.0
        %821 = vmatmul.mubr.f32.gmra.mrb[0].mxu0 %v540
        %v822 = vpop.f32.mrb[0].mxu0
        %v823 = vadd.f32 0.0, %v822
        %v824 = vpop.f32.mrb[0].mxu0
        %v825 = vadd.f32 0.0, %v824
        %826 = vmatprep.mubr.f32.mxu0 0.0
        %827 = vmatmul.mubr.f32.gmra.mrb[0].mxu0 %v541
        %v828 = vpop.f32.mrb[0].mxu0
        %v829 = vadd.f32 0.0, %v828
        %v830 = vpop.f32.mrb[0].mxu0
        %v831 = vadd.f32 0.0, %v830
        %832 = vmatprep.mubr.f32.mxu0 0.0
        %833 = vmatmul.mubr.f32.gmra.mrb[0].mxu0 %v542
        %v834 = vpop.f32.mrb[0].mxu0
        %v835 = vadd.f32 0.0, %v834
        %v836 = vpop.f32.mrb[0].mxu0
        %v837 = vadd.f32 0.0, %v836
        %838 = vmatprep.mubr.f32.mxu0 0.0
        %839 = vmatmul.mubr.f32.gmra.mrb[0].mxu0 %v543
        %v840 = vpop.f32.mrb[0].mxu0
        %v841 = vadd.f32 0.0, %v840
        %v842 = vpop.f32.mrb[0].mxu0
        %v843 = vadd.f32 0.0, %v842
        %844 = vmatprep.mubr.f32.mxu0 0.0
        %845 = vmatmul.mubr.f32.gmra.mrb[0].mxu0 %v544
        %v846 = vpop.f32.mrb[0].mxu0
        %v847 = vadd.f32 0.0, %v846
        %v848 = vpop.f32.mrb[0].mxu0
        %v849 = vadd.f32 0.0, %v848
        %850 = vmatprep.mubr.f32.mxu0 0.0
        %851 = vmatmul.mubr.f32.gmra.mrb[0].mxu0 %v545
        %v852 = vpop.f32.mrb[0].mxu0
        %v853 = vadd.f32 0.0, %v852
        %v854 = vpop.f32.mrb[0].mxu0
        %v855 = vadd.f32 0.0, %v854
        %856 = vmatprep.mubr.f32.mxu0 0.0
        %857 = vmatmul.mubr.f32.gmra.mrb[0].mxu0 %v546
        %v858 = vpop.f32.mrb[0].mxu0
        %v859 = vadd.f32 0.0, %v858
        %v860 = vpop.f32.mrb[0].mxu0
        %v861 = vadd.f32 0.0, %v860
        %862 = vmatprep.mubr.f32.mxu0 0.0
        %863 = vmatmul.mubr.f32.gmra.mrb[0].mxu0 %v547
        %v864 = vpop.f32.mrb[0].mxu0
        %v865 = vadd.f32 0.0, %v864
        %v866 = vpop.f32.mrb[0].mxu0
        %v867 = vadd.f32 0.0, %v866
        %868 = vdwg.mxu0
        %869 = vmatprep.subr.mxu0 %v551
        %870 = vmatpush1.msra.mxu0 %v550
        %871 = vmatprep.subr.mxu0 %v555
        %872 = vmatpush1.msra.mxu0 %v554
        %873 = vmatprep.subr.mxu0 %v559
        %874 = vmatpush1.msra.mxu0 %v558
        %875 = vmatprep.subr.mxu0 %v563
        %876 = vmatpush1.msra.mxu0 %v562
        %877 = vmatprep.subr.mxu0 %v567
        %878 = vmatpush1.msra.mxu0 %v566
        %879 = vmatprep.subr.mxu0 %v571
        %880 = vmatpush1.msra.mxu0 %v570
        %881 = vmatprep.subr.mxu0 %v575
        %882 = vmatpush1.msra.mxu0 %v574
        %883 = vmatprep.subr.mxu0 %v579
        %884 = vmatpush1.msra.mxu0 %v578
        %885 = vmatprep.subr.mxu0 %v583
        %886 = vmatpush1.msra.mxu0 %v582
        %887 = vmatprep.subr.mxu0 %v587
        %888 = vmatpush1.msra.mxu0 %v586
        %889 = vmatprep.subr.mxu0 %v591
        %890 = vmatpush1.msra.mxu0 %v590
        %891 = vmatprep.subr.mxu0 %v595
        %892 = vmatpush1.msra.mxu0 %v594
        %893 = vmatprep.subr.mxu0 %v599
        %894 = vmatpush1.msra.mxu0 %v598
        %895 = vmatprep.subr.mxu0 %v603
        %896 = vmatpush1.msra.mxu0 %v602
        %897 = vmatprep.subr.mxu0 %v607
        %898 = vmatpush1.msra.mxu0 %v606
        %899 = vmatprep.subr.mxu0 %v611
        %900 = vmatpush1.msra.mxu0 %v610
        %901 = vmatprep.subr.mxu0 0.0
        %902 = vmatpush1.msra.mxu0 0.0
        %903 = vmatprep.subr.mxu0 0.0
        %904 = vmatpush1.msra.mxu0 0.0
        %905 = vmatprep.subr.mxu0 0.0
        %906 = vmatpush1.msra.mxu0 0.0
        %907 = vmatprep.subr.mxu0 0.0
        %908 = vmatpush1.msra.mxu0 0.0
        %909 = vmatprep.subr.mxu0 0.0
        %910 = vmatpush1.msra.mxu0 0.0
        %911 = vmatprep.subr.mxu0 0.0
        %912 = vmatpush1.msra.mxu0 0.0
        %913 = vmatprep.subr.mxu0 0.0
        %914 = vmatpush1.msra.mxu0 0.0
        %915 = vmatprep.subr.mxu0 0.0
        %916 = vmatpush1.msra.mxu0 0.0
        %917 = vmatprep.subr.mxu0 0.0
        %918 = vmatpush1.msra.mxu0 0.0
        %919 = vmatprep.subr.mxu0 0.0
        %920 = vmatpush1.msra.mxu0 0.0
        %921 = vmatprep.subr.mxu0 0.0
        %922 = vmatpush1.msra.mxu0 0.0
        %923 = vmatprep.subr.mxu0 0.0
        %924 = vmatpush1.msra.mxu0 0.0
        %925 = vmatprep.subr.mxu0 0.0
        %926 = vmatpush1.msra.mxu0 0.0
        %927 = vmatprep.subr.mxu0 0.0
        %928 = vmatpush1.msra.mxu0 0.0
        %929 = vmatprep.subr.mxu0 0.0
        %930 = vmatpush1.msra.mxu0 0.0
        %931 = vmatprep.subr.mxu0 0.0
        %932 = vmatpush1.msra.mxu0 0.0
        %933 = vmatprep.mubr.f32.mxu0 0.0
        %934 = vmatmul.mubr.f32.gmra.mrb[0].mxu0 %v516
        %v935 = vpop.f32.mrb[0].mxu0
        %v936 = vadd.f32 0.0, %v935
        %v937 = vpop.f32.mrb[0].mxu0
        %v938 = vadd.f32 0.0, %v937
        %939 = vmatprep.mubr.f32.mxu0 0.0
        %940 = vmatmul.mubr.f32.gmra.mrb[0].mxu0 %v517
        %v941 = vpop.f32.mrb[0].mxu0
        %v942 = vadd.f32 0.0, %v941
        %v943 = vpop.f32.mrb[0].mxu0
        %v944 = vadd.f32 0.0, %v943
        %945 = vmatprep.mubr.f32.mxu0 0.0
        %946 = vmatmul.mubr.f32.gmra.mrb[0].mxu0 %v518
        %v947 = vpop.f32.mrb[0].mxu0
        %v948 = vadd.f32 0.0, %v947
        %v949 = vpop.f32.mrb[0].mxu0
        %v950 = vadd.f32 0.0, %v949
        %951 = vmatprep.mubr.f32.mxu0 0.0
        %952 = vmatmul.mubr.f32.gmra.mrb[0].mxu0 %v519
        %v953 = vpop.f32.mrb[0].mxu0
        %v954 = vadd.f32 0.0, %v953
        %v955 = vpop.f32.mrb[0].mxu0
        %v956 = vadd.f32 0.0, %v955
        %957 = vmatprep.mubr.f32.mxu0 0.0
        %958 = vmatmul.mubr.f32.gmra.mrb[0].mxu0 %v520
        %v959 = vpop.f32.mrb[0].mxu0
        %v960 = vadd.f32 0.0, %v959
        %v961 = vpop.f32.mrb[0].mxu0
        %v962 = vadd.f32 0.0, %v961
        %963 = vmatprep.mubr.f32.mxu0 0.0
        %964 = vmatmul.mubr.f32.gmra.mrb[0].mxu0 %v521
        %v965 = vpop.f32.mrb[0].mxu0
        %v966 = vadd.f32 0.0, %v965
        %v967 = vpop.f32.mrb[0].mxu0
        %v968 = vadd.f32 0.0, %v967
        %969 = vmatprep.mubr.f32.mxu0 0.0
        %970 = vmatmul.mubr.f32.gmra.mrb[0].mxu0 %v522
        %v971 = vpop.f32.mrb[0].mxu0
        %v972 = vadd.f32 0.0, %v971
        %v973 = vpop.f32.mrb[0].mxu0
        %v974 = vadd.f32 0.0, %v973
        %975 = vmatprep.mubr.f32.mxu0 0.0
        %976 = vmatmul.mubr.f32.gmra.mrb[0].mxu0 %v523
        %v977 = vpop.f32.mrb[0].mxu0
        %v978 = vadd.f32 0.0, %v977
        %v979 = vpop.f32.mrb[0].mxu0
        %v980 = vadd.f32 0.0, %v979
        %981 = vmatprep.mubr.f32.mxu0 0.0
        %982 = vmatmul.mubr.f32.gmra.mrb[0].mxu0 %v524
        %v983 = vpop.f32.mrb[0].mxu0
        %v984 = vadd.f32 0.0, %v983
        %v985 = vpop.f32.mrb[0].mxu0
        %v986 = vadd.f32 0.0, %v985
        %987 = vmatprep.mubr.f32.mxu0 0.0
        %988 = vmatmul.mubr.f32.gmra.mrb[0].mxu0 %v525
        %v989 = vpop.f32.mrb[0].mxu0
        %v990 = vadd.f32 0.0, %v989
        %v991 = vpop.f32.mrb[0].mxu0
        %v992 = vadd.f32 0.0, %v991
        %993 = vmatprep.mubr.f32.mxu0 0.0
        %994 = vmatmul.mubr.f32.gmra.mrb[0].mxu0 %v526
        %v995 = vpop.f32.mrb[0].mxu0
        %v996 = vadd.f32 0.0, %v995
        %v997 = vpop.f32.mrb[0].mxu0
        %v998 = vadd.f32 0.0, %v997
        %999 = vmatprep.mubr.f32.mxu0 0.0
        %1000 = vmatmul.mubr.f32.gmra.mrb[0].mxu0 %v527
        %v1001 = vpop.f32.mrb[0].mxu0
        %v1002 = vadd.f32 0.0, %v1001
        %v1003 = vpop.f32.mrb[0].mxu0
        %v1004 = vadd.f32 0.0, %v1003
        %1005 = vmatprep.mubr.f32.mxu0 0.0
        %1006 = vmatmul.mubr.f32.gmra.mrb[0].mxu0 %v528
        %v1007 = vpop.f32.mrb[0].mxu0
        %v1008 = vadd.f32 0.0, %v1007
        %v1009 = vpop.f32.mrb[0].mxu0
        %v1010 = vadd.f32 0.0, %v1009
        %1011 = vmatprep.mubr.f32.mxu0 0.0
        %1012 = vmatmul.mubr.f32.gmra.mrb[0].mxu0 %v529
        %v1013 = vpop.f32.mrb[0].mxu0
        %v1014 = vadd.f32 0.0, %v1013
        %v1015 = vpop.f32.mrb[0].mxu0
        %v1016 = vadd.f32 0.0, %v1015
        %1017 = vmatprep.mubr.f32.mxu0 0.0
        %1018 = vmatmul.mubr.f32.gmra.mrb[0].mxu0 %v530
        %v1019 = vpop.f32.mrb[0].mxu0
        %v1020 = vadd.f32 0.0, %v1019
        %v1021 = vpop.f32.mrb[0].mxu0
        %v1022 = vadd.f32 0.0, %v1021
        %1023 = vmatprep.mubr.f32.mxu0 0.0
        %1024 = vmatmul.mubr.f32.gmra.mrb[0].mxu0 %v531
        %v1025 = vpop.f32.mrb[0].mxu0
        %v1026 = vadd.f32 0.0, %v1025
        %v1027 = vpop.f32.mrb[0].mxu0
        %v1028 = vadd.f32 0.0, %v1027
        %1029 = vmatprep.mubr.f32.mxu0 0.0
        %1030 = vmatmul.mubr.f32.gmra.mrb[0].mxu0 %v532
        %v1031 = vpop.f32.mrb[0].mxu0
        %v1032 = vadd.f32 0.0, %v1031
        %v1033 = vpop.f32.mrb[0].mxu0
        %v1034 = vadd.f32 0.0, %v1033
        %1035 = vmatprep.mubr.f32.mxu0 0.0
        %1036 = vmatmul.mubr.f32.gmra.mrb[0].mxu0 %v533
        %v1037 = vpop.f32.mrb[0].mxu0
        %v1038 = vadd.f32 0.0, %v1037
        %v1039 = vpop.f32.mrb[0].mxu0
        %v1040 = vadd.f32 0.0, %v1039
        %1041 = vmatprep.mubr.f32.mxu0 0.0
        %1042 = vmatmul.mubr.f32.gmra.mrb[0].mxu0 %v534
        %v1043 = vpop.f32.mrb[0].mxu0
        %v1044 = vadd.f32 0.0, %v1043
        %v1045 = vpop.f32.mrb[0].mxu0
        %v1046 = vadd.f32 0.0, %v1045
        %1047 = vmatprep.mubr.f32.mxu0 0.0
        %1048 = vmatmul.mubr.f32.gmra.mrb[0].mxu0 %v535
        %v1049 = vpop.f32.mrb[0].mxu0
        %v1050 = vadd.f32 0.0, %v1049
        %v1051 = vpop.f32.mrb[0].mxu0
        %v1052 = vadd.f32 0.0, %v1051
        %1053 = vmatprep.mubr.f32.mxu0 0.0
        %1054 = vmatmul.mubr.f32.gmra.mrb[0].mxu0 %v536
        %v1055 = vpop.f32.mrb[0].mxu0
        %v1056 = vadd.f32 0.0, %v1055
        %v1057 = vpop.f32.mrb[0].mxu0
        %v1058 = vadd.f32 0.0, %v1057
        %1059 = vmatprep.mubr.f32.mxu0 0.0
        %1060 = vmatmul.mubr.f32.gmra.mrb[0].mxu0 %v537
        %v1061 = vpop.f32.mrb[0].mxu0
        %v1062 = vadd.f32 0.0, %v1061
        %v1063 = vpop.f32.mrb[0].mxu0
        %v1064 = vadd.f32 0.0, %v1063
        %1065 = vmatprep.mubr.f32.mxu0 0.0
        %1066 = vmatmul.mubr.f32.gmra.mrb[0].mxu0 %v538
        %v1067 = vpop.f32.mrb[0].mxu0
        %v1068 = vadd.f32 0.0, %v1067
        %v1069 = vpop.f32.mrb[0].mxu0
        %v1070 = vadd.f32 0.0, %v1069
        %1071 = vmatprep.mubr.f32.mxu0 0.0
        %1072 = vmatmul.mubr.f32.gmra.mrb[0].mxu0 %v539
        %v1073 = vpop.f32.mrb[0].mxu0
        %v1074 = vadd.f32 0.0, %v1073
        %v1075 = vpop.f32.mrb[0].mxu0
        %v1076 = vadd.f32 0.0, %v1075
        %1077 = vmatprep.mubr.f32.mxu0 0.0
        %1078 = vmatmul.mubr.f32.gmra.mrb[0].mxu0 %v540
        %v1079 = vpop.f32.mrb[0].mxu0
        %v1080 = vadd.f32 0.0, %v1079
        %v1081 = vpop.f32.mrb[0].mxu0
        %v1082 = vadd.f32 0.0, %v1081
        %1083 = vmatprep.mubr.f32.mxu0 0.0
        %1084 = vmatmul.mubr.f32.gmra.mrb[0].mxu0 %v541
        %v1085 = vpop.f32.mrb[0].mxu0
        %v1086 = vadd.f32 0.0, %v1085
        %v1087 = vpop.f32.mrb[0].mxu0
        %v1088 = vadd.f32 0.0, %v1087
        %1089 = vmatprep.mubr.f32.mxu0 0.0
        %1090 = vmatmul.mubr.f32.gmra.mrb[0].mxu0 %v542
        %v1091 = vpop.f32.mrb[0].mxu0
        %v1092 = vadd.f32 0.0, %v1091
        %v1093 = vpop.f32.mrb[0].mxu0
        %v1094 = vadd.f32 0.0, %v1093
        %1095 = vmatprep.mubr.f32.mxu0 0.0
        %1096 = vmatmul.mubr.f32.gmra.mrb[0].mxu0 %v543
        %v1097 = vpop.f32.mrb[0].mxu0
        %v1098 = vadd.f32 0.0, %v1097
        %v1099 = vpop.f32.mrb[0].mxu0
        %v1100 = vadd.f32 0.0, %v1099
        %1101 = vmatprep.mubr.f32.mxu0 0.0
        %1102 = vmatmul.mubr.f32.gmra.mrb[0].mxu0 %v544
        %v1103 = vpop.f32.mrb[0].mxu0
        %v1104 = vadd.f32 0.0, %v1103
        %v1105 = vpop.f32.mrb[0].mxu0
        %v1106 = vadd.f32 0.0, %v1105
        %1107 = vmatprep.mubr.f32.mxu0 0.0
        %1108 = vmatmul.mubr.f32.gmra.mrb[0].mxu0 %v545
        %v1109 = vpop.f32.mrb[0].mxu0
        %v1110 = vadd.f32 0.0, %v1109
        %v1111 = vpop.f32.mrb[0].mxu0
        %v1112 = vadd.f32 0.0, %v1111
        %1113 = vmatprep.mubr.f32.mxu0 0.0
        %1114 = vmatmul.mubr.f32.gmra.mrb[0].mxu0 %v546
        %v1115 = vpop.f32.mrb[0].mxu0
        %v1116 = vadd.f32 0.0, %v1115
        %v1117 = vpop.f32.mrb[0].mxu0
        %v1118 = vadd.f32 0.0, %v1117
        %1119 = vmatprep.mubr.f32.mxu0 0.0
        %1120 = vmatmul.mubr.f32.gmra.mrb[0].mxu0 %v547
        %v1121 = vpop.f32.mrb[0].mxu0
        %v1122 = vadd.f32 0.0, %v1121
        %v1123 = vpop.f32.mrb[0].mxu0
        %v1124 = vadd.f32 0.0, %v1123
        %1125 = vdwg.mxu0
        %1126 = vst [vmem:[#allocation3] sm:$0xff] %v679
        %1127 = vst [vmem:[#allocation3 + $0x8] sm:$0xff] %v681
        %1128 = vst [vmem:[#allocation3 + $0x10] sm:$0xff] %v936
        %1129 = vst [vmem:[#allocation3 + $0x18] sm:$0xff] %v938
        %1130 = vst [vmem:[#allocation3 + $0x20] sm:$0xff] %v685
        %1131 = vst [vmem:[#allocation3 + $0x28] sm:$0xff] %v687
        %1132 = vst [vmem:[#allocation3 + $0x30] sm:$0xff] %v942
        %1133 = vst [vmem:[#allocation3 + $0x38] sm:$0xff] %v944
        %1134 = vst [vmem:[#allocation3 + $0x40] sm:$0xff] %v691
        %1135 = vst [vmem:[#allocation3 + $0x48] sm:$0xff] %v693
        %1136 = vst [vmem:[#allocation3 + $0x50] sm:$0xff] %v948
        %1137 = vst [vmem:[#allocation3 + $0x58] sm:$0xff] %v950
        %1138 = vst [vmem:[#allocation3 + $0x60] sm:$0xff] %v697
        %1139 = vst [vmem:[#allocation3 + $0x68] sm:$0xff] %v699
        %1140 = vst [vmem:[#allocation3 + $0x70] sm:$0xff] %v954
        %1141 = vst [vmem:[#allocation3 + $0x78] sm:$0xff] %v956
        %1142 = vst [vmem:[#allocation3 + $0x80] sm:$0xff] %v703
        %1143 = vst [vmem:[#allocation3 + $0x88] sm:$0xff] %v705
        %1144 = vst [vmem:[#allocation3 + $0x90] sm:$0xff] %v960
        %1145 = vst [vmem:[#allocation3 + $0x98] sm:$0xff] %v962
        %1146 = vst [vmem:[#allocation3 + $0xa0] sm:$0xff] %v709
        %1147 = vst [vmem:[#allocation3 + $0xa8] sm:$0xff] %v711
        %1148 = vst [vmem:[#allocation3 + $0xb0] sm:$0xff] %v966
        %1149 = vst [vmem:[#allocation3 + $0xb8] sm:$0xff] %v968
        %1150 = vst [vmem:[#allocation3 + $0xc0] sm:$0xff] %v715
        %1151 = vst [vmem:[#allocation3 + $0xc8] sm:$0xff] %v717
        %1152 = vst [vmem:[#allocation3 + $0xd0] sm:$0xff] %v972
        %1153 = vst [vmem:[#allocation3 + $0xd8] sm:$0xff] %v974
        %1154 = vst [vmem:[#allocation3 + $0xe0] sm:$0xff] %v721
        %1155 = vst [vmem:[#allocation3 + $0xe8] sm:$0xff] %v723
        %1156 = vst [vmem:[#allocation3 + $0xf0] sm:$0xff] %v978
        %1157 = vst [vmem:[#allocation3 + $0xf8] sm:$0xff] %v980
        %1158 = vst [vmem:[#allocation3 + $0x100] sm:$0xff] %v727
        %1159 = vst [vmem:[#allocation3 + $0x108] sm:$0xff] %v729
        %1160 = vst [vmem:[#allocation3 + $0x110] sm:$0xff] %v984
        %1161 = vst [vmem:[#allocation3 + $0x118] sm:$0xff] %v986
        %1162 = vst [vmem:[#allocation3 + $0x120] sm:$0xff] %v733
        %1163 = vst [vmem:[#allocation3 + $0x128] sm:$0xff] %v735
        %1164 = vst [vmem:[#allocation3 + $0x130] sm:$0xff] %v990
        %1165 = vst [vmem:[#allocation3 + $0x138] sm:$0xff] %v992
        %1166 = vst [vmem:[#allocation3 + $0x140] sm:$0xff] %v739
        %1167 = vst [vmem:[#allocation3 + $0x148] sm:$0xff] %v741
        %1168 = vst [vmem:[#allocation3 + $0x150] sm:$0xff] %v996
        %1169 = vst [vmem:[#allocation3 + $0x158] sm:$0xff] %v998
        %1170 = vst [vmem:[#allocation3 + $0x160] sm:$0xff] %v745
        %1171 = vst [vmem:[#allocation3 + $0x168] sm:$0xff] %v747
        %1172 = vst [vmem:[#allocation3 + $0x170] sm:$0xff] %v1002
        %1173 = vst [vmem:[#allocation3 + $0x178] sm:$0xff] %v1004
        %1174 = vst [vmem:[#allocation3 + $0x180] sm:$0xff] %v751
        %1175 = vst [vmem:[#allocation3 + $0x188] sm:$0xff] %v753
        %1176 = vst [vmem:[#allocation3 + $0x190] sm:$0xff] %v1008
        %1177 = vst [vmem:[#allocation3 + $0x198] sm:$0xff] %v1010
        %1178 = vst [vmem:[#allocation3 + $0x1a0] sm:$0xff] %v757
        %1179 = vst [vmem:[#allocation3 + $0x1a8] sm:$0xff] %v759
        %1180 = vst [vmem:[#allocation3 + $0x1b0] sm:$0xff] %v1014
        %1181 = vst [vmem:[#allocation3 + $0x1b8] sm:$0xff] %v1016
        %1182 = vst [vmem:[#allocation3 + $0x1c0] sm:$0xff] %v763
        %1183 = vst [vmem:[#allocation3 + $0x1c8] sm:$0xff] %v765
        %1184 = vst [vmem:[#allocation3 + $0x1d0] sm:$0xff] %v1020
        %1185 = vst [vmem:[#allocation3 + $0x1d8] sm:$0xff] %v1022
        %1186 = vst [vmem:[#allocation3 + $0x1e0] sm:$0xff] %v769
        %1187 = vst [vmem:[#allocation3 + $0x1e8] sm:$0xff] %v771
        %1188 = vst [vmem:[#allocation3 + $0x1f0] sm:$0xff] %v1026
        %1189 = vst [vmem:[#allocation3 + $0x1f8] sm:$0xff] %v1028
        %1190 = vst [vmem:[#allocation3 + $0x200] sm:$0xff] %v775
        %1191 = vst [vmem:[#allocation3 + $0x208] sm:$0xff] %v777
        %1192 = vst [vmem:[#allocation3 + $0x210] sm:$0xff] %v1032
        %1193 = vst [vmem:[#allocation3 + $0x218] sm:$0xff] %v1034
        %1194 = vst [vmem:[#allocation3 + $0x220] sm:$0xff] %v781
        %1195 = vst [vmem:[#allocation3 + $0x228] sm:$0xff] %v783
        %1196 = vst [vmem:[#allocation3 + $0x230] sm:$0xff] %v1038
        %1197 = vst [vmem:[#allocation3 + $0x238] sm:$0xff] %v1040
        %1198 = vst [vmem:[#allocation3 + $0x240] sm:$0xff] %v787
        %1199 = vst [vmem:[#allocation3 + $0x248] sm:$0xff] %v789
        %1200 = vst [vmem:[#allocation3 + $0x250] sm:$0xff] %v1044
        %1201 = vst [vmem:[#allocation3 + $0x258] sm:$0xff] %v1046
        %1202 = vst [vmem:[#allocation3 + $0x260] sm:$0xff] %v793
        %1203 = vst [vmem:[#allocation3 + $0x268] sm:$0xff] %v795
        %1204 = vst [vmem:[#allocation3 + $0x270] sm:$0xff] %v1050
        %1205 = vst [vmem:[#allocation3 + $0x278] sm:$0xff] %v1052
        %1206 = vst [vmem:[#allocation3 + $0x280] sm:$0xff] %v799
        %1207 = vst [vmem:[#allocation3 + $0x288] sm:$0xff] %v801
        %1208 = vst [vmem:[#allocation3 + $0x290] sm:$0xff] %v1056
        %1209 = vst [vmem:[#allocation3 + $0x298] sm:$0xff] %v1058
        %1210 = vst [vmem:[#allocation3 + $0x2a0] sm:$0xff] %v805
        %1211 = vst [vmem:[#allocation3 + $0x2a8] sm:$0xff] %v807
        %1212 = vst [vmem:[#allocation3 + $0x2b0] sm:$0xff] %v1062
        %1213 = vst [vmem:[#allocation3 + $0x2b8] sm:$0xff] %v1064
        %1214 = vst [vmem:[#allocation3 + $0x2c0] sm:$0xff] %v811
        %1215 = vst [vmem:[#allocation3 + $0x2c8] sm:$0xff] %v813
        %1216 = vst [vmem:[#allocation3 + $0x2d0] sm:$0xff] %v1068
        %1217 = vst [vmem:[#allocation3 + $0x2d8] sm:$0xff] %v1070
        %1218 = vst [vmem:[#allocation3 + $0x2e0] sm:$0xff] %v817
        %1219 = vst [vmem:[#allocation3 + $0x2e8] sm:$0xff] %v819
        %1220 = vst [vmem:[#allocation3 + $0x2f0] sm:$0xff] %v1074
        %1221 = vst [vmem:[#allocation3 + $0x2f8] sm:$0xff] %v1076
        %1222 = vst [vmem:[#allocation3 + $0x300] sm:$0xff] %v823
        %1223 = vst [vmem:[#allocation3 + $0x308] sm:$0xff] %v825
        %1224 = vst [vmem:[#allocation3 + $0x310] sm:$0xff] %v1080
        %1225 = vst [vmem:[#allocation3 + $0x318] sm:$0xff] %v1082
        %1226 = vst [vmem:[#allocation3 + $0x320] sm:$0xff] %v829
        %1227 = vst [vmem:[#allocation3 + $0x328] sm:$0xff] %v831
        %1228 = vst [vmem:[#allocation3 + $0x330] sm:$0xff] %v1086
        %1229 = vst [vmem:[#allocation3 + $0x338] sm:$0xff] %v1088
        %1230 = vst [vmem:[#allocation3 + $0x340] sm:$0xff] %v835
        %1231 = vst [vmem:[#allocation3 + $0x348] sm:$0xff] %v837
        %1232 = vst [vmem:[#allocation3 + $0x350] sm:$0xff] %v1092
        %1233 = vst [vmem:[#allocation3 + $0x358] sm:$0xff] %v1094
        %1234 = vst [vmem:[#allocation3 + $0x360] sm:$0xff] %v841
        %1235 = vst [vmem:[#allocation3 + $0x368] sm:$0xff] %v843
        %1236 = vst [vmem:[#allocation3 + $0x370] sm:$0xff] %v1098
        %1237 = vst [vmem:[#allocation3 + $0x378] sm:$0xff] %v1100
        %1238 = vst [vmem:[#allocation3 + $0x380] sm:$0xff] %v847
        %1239 = vst [vmem:[#allocation3 + $0x388] sm:$0xff] %v849
        %1240 = vst [vmem:[#allocation3 + $0x390] sm:$0xff] %v1104
        %1241 = vst [vmem:[#allocation3 + $0x398] sm:$0xff] %v1106
        %1242 = vst [vmem:[#allocation3 + $0x3a0] sm:$0xff] %v853
        %1243 = vst [vmem:[#allocation3 + $0x3a8] sm:$0xff] %v855
        %1244 = vst [vmem:[#allocation3 + $0x3b0] sm:$0xff] %v1110
        %1245 = vst [vmem:[#allocation3 + $0x3b8] sm:$0xff] %v1112
        %1246 = vst [vmem:[#allocation3 + $0x3c0] sm:$0xff] %v859
        %1247 = vst [vmem:[#allocation3 + $0x3c8] sm:$0xff] %v861
        %1248 = vst [vmem:[#allocation3 + $0x3d0] sm:$0xff] %v1116
        %1249 = vst [vmem:[#allocation3 + $0x3d8] sm:$0xff] %v1118
        %1250 = vst [vmem:[#allocation3 + $0x3e0] sm:$0xff] %v865
        %1251 = vst [vmem:[#allocation3 + $0x3e8] sm:$0xff] %v867
        %1252 = vst [vmem:[#allocation3 + $0x3f0] sm:$0xff] %v1122
        %1253 = vst [vmem:[#allocation3 + $0x3f8] sm:$0xff] %v1124
        %v1254 = vld [vmem:[#allocation3] sm:$0xff]
        %v1255 = vld [vmem:[#allocation3 + $0x20] sm:$0xff]
        %v1256 = vld [vmem:[#allocation3 + $0x40] sm:$0xff]
        %v1257 = vld [vmem:[#allocation3 + $0x60] sm:$0xff]
        %v1258 = vld [vmem:[#allocation3 + $0x80] sm:$0xff]
        %v1259 = vld [vmem:[#allocation3 + $0xa0] sm:$0xff]
        %v1260 = vld [vmem:[#allocation3 + $0xc0] sm:$0xff]
        %v1261 = vld [vmem:[#allocation3 + $0xe0] sm:$0xff]
        %v1262 = vld [vmem:[#allocation3 + $0x100] sm:$0xff]
        %v1263 = vld [vmem:[#allocation3 + $0x120] sm:$0xff]
        %v1264 = vld [vmem:[#allocation3 + $0x140] sm:$0xff]
        %v1265 = vld [vmem:[#allocation3 + $0x160] sm:$0xff]
        %v1266 = vld [vmem:[#allocation3 + $0x180] sm:$0xff]
        %v1267 = vld [vmem:[#allocation3 + $0x1a0] sm:$0xff]
        %v1268 = vld [vmem:[#allocation3 + $0x1c0] sm:$0xff]
        %v1269 = vld [vmem:[#allocation3 + $0x1e0] sm:$0xff]
        %v1270 = vld [vmem:[#allocation3 + $0x200] sm:$0xff]
        %v1271 = vld [vmem:[#allocation3 + $0x220] sm:$0xff]
        %v1272 = vld [vmem:[#allocation3 + $0x240] sm:$0xff]
        %v1273 = vld [vmem:[#allocation3 + $0x260] sm:$0xff]
        %v1274 = vld [vmem:[#allocation3 + $0x280] sm:$0xff]
        %v1275 = vld [vmem:[#allocation3 + $0x2a0] sm:$0xff]
        %v1276 = vld [vmem:[#allocation3 + $0x2c0] sm:$0xff]
        %v1277 = vld [vmem:[#allocation3 + $0x2e0] sm:$0xff]
        %v1278 = vld [vmem:[#allocation3 + $0x300] sm:$0xff]
        %v1279 = vld [vmem:[#allocation3 + $0x320] sm:$0xff]
        %v1280 = vld [vmem:[#allocation3 + $0x340] sm:$0xff]
        %v1281 = vld [vmem:[#allocation3 + $0x360] sm:$0xff]
        %v1282 = vld [vmem:[#allocation3 + $0x380] sm:$0xff]
        %v1283 = vld [vmem:[#allocation3 + $0x3a0] sm:$0xff]
        %v1284 = vld [vmem:[#allocation3 + $0x3c0] sm:$0xff]
        %v1285 = vld [vmem:[#allocation3 + $0x3e0] sm:$0xff]
        %v1286 = vld [vmem:[%s5] sm:$0x1]
        %v1288 = vlaneseq
        %v1289 = vshrl.u32 %v1288, 7
        %v1290 = vsub.s32 0, %v1289
        %v1291 = vrot.slane %v1286, %v1290
        %v1293 = vadd.f32 %v1254, %v1291
        %v1294 = vadd.f32 %v1255, %v1291
        %v1295 = vadd.f32 %v1256, %v1291
        %v1296 = vadd.f32 %v1257, %v1291
        %v1297 = vadd.f32 %v1258, %v1291
        %v1298 = vadd.f32 %v1259, %v1291
        %v1299 = vadd.f32 %v1260, %v1291
        %v1300 = vadd.f32 %v1261, %v1291
        %v1301 = vadd.f32 %v1262, %v1291
        %v1302 = vadd.f32 %v1263, %v1291
        %v1303 = vadd.f32 %v1264, %v1291
        %v1304 = vadd.f32 %v1265, %v1291
        %v1305 = vadd.f32 %v1266, %v1291
        %v1306 = vadd.f32 %v1267, %v1291
        %v1307 = vadd.f32 %v1268, %v1291
        %v1308 = vadd.f32 %v1269, %v1291
        %v1309 = vadd.f32 %v1270, %v1291
        %v1310 = vadd.f32 %v1271, %v1291
        %v1311 = vadd.f32 %v1272, %v1291
        %v1312 = vadd.f32 %v1273, %v1291
        %v1313 = vadd.f32 %v1274, %v1291
        %v1314 = vadd.f32 %v1275, %v1291
        %v1315 = vadd.f32 %v1276, %v1291
        %v1316 = vadd.f32 %v1277, %v1291
        %v1317 = vadd.f32 %v1278, %v1291
        %v1318 = vadd.f32 %v1279, %v1291
        %v1319 = vadd.f32 %v1280, %v1291
        %v1320 = vadd.f32 %v1281, %v1291
        %v1321 = vadd.f32 %v1282, %v1291
        %v1322 = vadd.f32 %v1283, %v1291
        %v1323 = vadd.f32 %v1284, %v1291
        %v1324 = vadd.f32 %v1285, %v1291
        %v1325 = vsub.f32 0.0, %v1293
        %v1326 = vsub.f32 0.0, %v1294
        %v1327 = vsub.f32 0.0, %v1295
        %v1328 = vsub.f32 0.0, %v1296
        %v1329 = vsub.f32 0.0, %v1297
        %v1330 = vsub.f32 0.0, %v1298
        %v1331 = vsub.f32 0.0, %v1299
        %v1332 = vsub.f32 0.0, %v1300
        %v1333 = vsub.f32 0.0, %v1301
        %v1334 = vsub.f32 0.0, %v1302
        %v1335 = vsub.f32 0.0, %v1303
        %v1336 = vsub.f32 0.0, %v1304
        %v1337 = vsub.f32 0.0, %v1305
        %v1338 = vsub.f32 0.0, %v1306
        %v1339 = vsub.f32 0.0, %v1307
        %v1340 = vsub.f32 0.0, %v1308
        %v1341 = vsub.f32 0.0, %v1309
        %v1342 = vsub.f32 0.0, %v1310
        %v1343 = vsub.f32 0.0, %v1311
        %v1344 = vsub.f32 0.0, %v1312
        %v1345 = vsub.f32 0.0, %v1313
        %v1346 = vsub.f32 0.0, %v1314
        %v1347 = vsub.f32 0.0, %v1315
        %v1348 = vsub.f32 0.0, %v1316
        %v1349 = vsub.f32 0.0, %v1317
        %v1350 = vsub.f32 0.0, %v1318
        %v1351 = vsub.f32 0.0, %v1319
        %v1352 = vsub.f32 0.0, %v1320
        %v1353 = vsub.f32 0.0, %v1321
        %v1354 = vsub.f32 0.0, %v1322
        %v1355 = vsub.f32 0.0, %v1323
        %v1356 = vsub.f32 0.0, %v1324
        %v1357 = vmul.f32 %v1325, 1.442695
        %v1358 = vpow.pop %v1357
        %v1359 = vmul.f32 %v1326, 1.442695
        %v1360 = vpow.pop %v1359
        %v1361 = vmul.f32 %v1327, 1.442695
        %v1362 = vpow.pop %v1361
        %v1363 = vmul.f32 %v1328, 1.442695
        %v1364 = vpow.pop %v1363
        %v1365 = vmul.f32 %v1329, 1.442695
        %v1366 = vpow.pop %v1365
        %v1367 = vmul.f32 %v1330, 1.442695
        %v1368 = vpow.pop %v1367
        %v1369 = vmul.f32 %v1331, 1.442695
        %v1370 = vpow.pop %v1369
        %v1371 = vmul.f32 %v1332, 1.442695
        %v1372 = vpow.pop %v1371
        %v1373 = vmul.f32 %v1333, 1.442695
        %v1374 = vpow.pop %v1373
        %v1375 = vmul.f32 %v1334, 1.442695
        %v1376 = vpow.pop %v1375
        %v1377 = vmul.f32 %v1335, 1.442695
        %v1378 = vpow.pop %v1377
        %v1379 = vmul.f32 %v1336, 1.442695
        %v1380 = vpow.pop %v1379
        %v1381 = vmul.f32 %v1337, 1.442695
        %v1382 = vpow.pop %v1381
        %v1383 = vmul.f32 %v1338, 1.442695
        %v1384 = vpow.pop %v1383
        %v1385 = vmul.f32 %v1339, 1.442695
        %v1386 = vpow.pop %v1385
        %v1387 = vmul.f32 %v1340, 1.442695
        %v1388 = vpow.pop %v1387
        %v1389 = vmul.f32 %v1341, 1.442695
        %v1390 = vpow.pop %v1389
        %v1391 = vmul.f32 %v1342, 1.442695
        %v1392 = vpow.pop %v1391
        %v1393 = vmul.f32 %v1343, 1.442695
        %v1394 = vpow.pop %v1393
        %v1395 = vmul.f32 %v1344, 1.442695
        %v1396 = vpow.pop %v1395
        %v1397 = vmul.f32 %v1345, 1.442695
        %v1398 = vpow.pop %v1397
        %v1399 = vmul.f32 %v1346, 1.442695
        %v1400 = vpow.pop %v1399
        %v1401 = vmul.f32 %v1347, 1.442695
        %v1402 = vpow.pop %v1401
        %v1403 = vmul.f32 %v1348, 1.442695
        %v1404 = vpow.pop %v1403
        %v1405 = vmul.f32 %v1349, 1.442695
        %v1406 = vpow.pop %v1405
        %v1407 = vmul.f32 %v1350, 1.442695
        %v1408 = vpow.pop %v1407
        %v1409 = vmul.f32 %v1351, 1.442695
        %v1410 = vpow.pop %v1409
        %v1411 = vmul.f32 %v1352, 1.442695
        %v1412 = vpow.pop %v1411
        %v1413 = vmul.f32 %v1353, 1.442695
        %v1414 = vpow.pop %v1413
        %v1415 = vmul.f32 %v1354, 1.442695
        %v1416 = vpow.pop %v1415
        %v1417 = vmul.f32 %v1355, 1.442695
        %v1418 = vpow.pop %v1417
        %v1419 = vmul.f32 %v1356, 1.442695
        %v1420 = vpow.pop %v1419
        %v1421 = vadd.f32 %v1358, 1.0
        %v1422 = vadd.f32 %v1360, 1.0
        %v1423 = vadd.f32 %v1362, 1.0
        %v1424 = vadd.f32 %v1364, 1.0
        %v1425 = vadd.f32 %v1366, 1.0
        %v1426 = vadd.f32 %v1368, 1.0
        %v1427 = vadd.f32 %v1370, 1.0
        %v1428 = vadd.f32 %v1372, 1.0
        %v1429 = vadd.f32 %v1374, 1.0
        %v1430 = vadd.f32 %v1376, 1.0
        %v1431 = vadd.f32 %v1378, 1.0
        %v1432 = vadd.f32 %v1380, 1.0
        %v1433 = vadd.f32 %v1382, 1.0
        %v1434 = vadd.f32 %v1384, 1.0
        %v1435 = vadd.f32 %v1386, 1.0
        %v1436 = vadd.f32 %v1388, 1.0
        %v1437 = vadd.f32 %v1390, 1.0
        %v1438 = vadd.f32 %v1392, 1.0
        %v1439 = vadd.f32 %v1394, 1.0
        %v1440 = vadd.f32 %v1396, 1.0
        %v1441 = vadd.f32 %v1398, 1.0
        %v1442 = vadd.f32 %v1400, 1.0
        %v1443 = vadd.f32 %v1402, 1.0
        %v1444 = vadd.f32 %v1404, 1.0
        %v1445 = vadd.f32 %v1406, 1.0
        %v1446 = vadd.f32 %v1408, 1.0
        %v1447 = vadd.f32 %v1410, 1.0
        %v1448 = vadd.f32 %v1412, 1.0
        %v1449 = vadd.f32 %v1414, 1.0
        %v1450 = vadd.f32 %v1416, 1.0
        %v1451 = vadd.f32 %v1418, 1.0
        %v1452 = vadd.f32 %v1420, 1.0
        %v1453 = vrcp.pop %v1421
        %v1454 = vmul.f32 1.0, %v1453
        %v1455 = vrcp.pop %v1422
        %v1456 = vmul.f32 1.0, %v1455
        %v1457 = vrcp.pop %v1423
        %v1458 = vmul.f32 1.0, %v1457
        %v1459 = vrcp.pop %v1424
        %v1460 = vmul.f32 1.0, %v1459
        %v1461 = vrcp.pop %v1425
        %v1462 = vmul.f32 1.0, %v1461
        %v1463 = vrcp.pop %v1426
        %v1464 = vmul.f32 1.0, %v1463
        %v1465 = vrcp.pop %v1427
        %v1466 = vmul.f32 1.0, %v1465
        %v1467 = vrcp.pop %v1428
        %v1468 = vmul.f32 1.0, %v1467
        %v1469 = vrcp.pop %v1429
        %v1470 = vmul.f32 1.0, %v1469
        %v1471 = vrcp.pop %v1430
        %v1472 = vmul.f32 1.0, %v1471
        %v1473 = vrcp.pop %v1431
        %v1474 = vmul.f32 1.0, %v1473
        %v1475 = vrcp.pop %v1432
        %v1476 = vmul.f32 1.0, %v1475
        %v1477 = vrcp.pop %v1433
        %v1478 = vmul.f32 1.0, %v1477
        %v1479 = vrcp.pop %v1434
        %v1480 = vmul.f32 1.0, %v1479
        %v1481 = vrcp.pop %v1435
        %v1482 = vmul.f32 1.0, %v1481
        %v1483 = vrcp.pop %v1436
        %v1484 = vmul.f32 1.0, %v1483
        %v1485 = vrcp.pop %v1437
        %v1486 = vmul.f32 1.0, %v1485
        %v1487 = vrcp.pop %v1438
        %v1488 = vmul.f32 1.0, %v1487
        %v1489 = vrcp.pop %v1439
        %v1490 = vmul.f32 1.0, %v1489
        %v1491 = vrcp.pop %v1440
        %v1492 = vmul.f32 1.0, %v1491
        %v1493 = vrcp.pop %v1441
        %v1494 = vmul.f32 1.0, %v1493
        %v1495 = vrcp.pop %v1442
        %v1496 = vmul.f32 1.0, %v1495
        %v1497 = vrcp.pop %v1443
        %v1498 = vmul.f32 1.0, %v1497
        %v1499 = vrcp.pop %v1444
        %v1500 = vmul.f32 1.0, %v1499
        %v1501 = vrcp.pop %v1445
        %v1502 = vmul.f32 1.0, %v1501
        %v1503 = vrcp.pop %v1446
        %v1504 = vmul.f32 1.0, %v1503
        %v1505 = vrcp.pop %v1447
        %v1506 = vmul.f32 1.0, %v1505
        %v1507 = vrcp.pop %v1448
        %v1508 = vmul.f32 1.0, %v1507
        %v1509 = vrcp.pop %v1449
        %v1510 = vmul.f32 1.0, %v1509
        %v1511 = vrcp.pop %v1450
        %v1512 = vmul.f32 1.0, %v1511
        %v1513 = vrcp.pop %v1451
        %v1514 = vmul.f32 1.0, %v1513
        %v1515 = vrcp.pop %v1452
        %v1516 = vmul.f32 1.0, %v1515
        %v1517 = vmul.f32 %v1293, %v1454
        %v1518 = vmul.f32 %v1294, %v1456
        %v1519 = vmul.f32 %v1295, %v1458
        %v1520 = vmul.f32 %v1296, %v1460
        %v1521 = vmul.f32 %v1297, %v1462
        %v1522 = vmul.f32 %v1298, %v1464
        %v1523 = vmul.f32 %v1299, %v1466
        %v1524 = vmul.f32 %v1300, %v1468
        %v1525 = vmul.f32 %v1301, %v1470
        %v1526 = vmul.f32 %v1302, %v1472
        %v1527 = vmul.f32 %v1303, %v1474
        %v1528 = vmul.f32 %v1304, %v1476
        %v1529 = vmul.f32 %v1305, %v1478
        %v1530 = vmul.f32 %v1306, %v1480
        %v1531 = vmul.f32 %v1307, %v1482
        %v1532 = vmul.f32 %v1308, %v1484
        %v1533 = vmul.f32 %v1309, %v1486
        %v1534 = vmul.f32 %v1310, %v1488
        %v1535 = vmul.f32 %v1311, %v1490
        %v1536 = vmul.f32 %v1312, %v1492
        %v1537 = vmul.f32 %v1313, %v1494
        %v1538 = vmul.f32 %v1314, %v1496
        %v1539 = vmul.f32 %v1315, %v1498
        %v1540 = vmul.f32 %v1316, %v1500
        %v1541 = vmul.f32 %v1317, %v1502
        %v1542 = vmul.f32 %v1318, %v1504
        %v1543 = vmul.f32 %v1319, %v1506
        %v1544 = vmul.f32 %v1320, %v1508
        %v1545 = vmul.f32 %v1321, %v1510
        %v1546 = vmul.f32 %v1322, %v1512
        %v1547 = vmul.f32 %v1323, %v1514
        %v1548 = vmul.f32 %v1324, %v1516
        %v1549 = vld [vmem:[%s6] sm:$0xff]
        %v1550 = vld [vmem:[%s6 + $0x8] sm:$0xff]
        %v1551 = vld [vmem:[%s6 + $0x10] sm:$0xff]
        %v1552 = vld [vmem:[%s6 + $0x18] sm:$0xff]
        %v1553 = vld [vmem:[%s6 + $0x20] sm:$0xff]
        %v1554 = vld [vmem:[%s6 + $0x28] sm:$0xff]
        %v1555 = vld [vmem:[%s6 + $0x30] sm:$0xff]
        %v1556 = vld [vmem:[%s6 + $0x38] sm:$0xff]
        %v1557 = vld [vmem:[%s6 + $0x40] sm:$0xff]
        %v1558 = vld [vmem:[%s6 + $0x48] sm:$0xff]
        %v1559 = vld [vmem:[%s6 + $0x50] sm:$0xff]
        %v1560 = vld [vmem:[%s6 + $0x58] sm:$0xff]
        %v1561 = vld [vmem:[%s6 + $0x60] sm:$0xff]
        %v1562 = vld [vmem:[%s6 + $0x68] sm:$0xff]
        %v1563 = vld [vmem:[%s6 + $0x70] sm:$0xff]
        %v1564 = vld [vmem:[%s6 + $0x78] sm:$0xff]
        %v1565 = vld [vmem:[%s7] sm:$0x1]
        %v1567 = vlaneseq
        %v1568 = vshrl.u32 %v1567, 7
        %v1569 = vsub.s32 0, %v1568
        %v1570 = vrot.slane %v1565, %v1569
        %1572 = vmatprep.subr.mxu0 0.0
        %1573 = vmatpush1.msra.mxu0 %v1549
        %1574 = vmatprep.subr.mxu0 0.0
        %1575 = vmatpush1.msra.mxu0 %v1550
        %1576 = vmatprep.subr.mxu0 0.0
        %1577 = vmatpush1.msra.mxu0 %v1551
        %1578 = vmatprep.subr.mxu0 0.0
        %1579 = vmatpush1.msra.mxu0 %v1552
        %1580 = vmatprep.subr.mxu0 0.0
        %1581 = vmatpush1.msra.mxu0 %v1553
        %1582 = vmatprep.subr.mxu0 0.0
        %1583 = vmatpush1.msra.mxu0 %v1554
        %1584 = vmatprep.subr.mxu0 0.0
        %1585 = vmatpush1.msra.mxu0 %v1555
        %1586 = vmatprep.subr.mxu0 0.0
        %1587 = vmatpush1.msra.mxu0 %v1556
        %1588 = vmatprep.subr.mxu0 0.0
        %1589 = vmatpush1.msra.mxu0 %v1557
        %1590 = vmatprep.subr.mxu0 0.0
        %1591 = vmatpush1.msra.mxu0 %v1558
        %1592 = vmatprep.subr.mxu0 0.0
        %1593 = vmatpush1.msra.mxu0 %v1559
        %1594 = vmatprep.subr.mxu0 0.0
        %1595 = vmatpush1.msra.mxu0 %v1560
        %1596 = vmatprep.subr.mxu0 0.0
        %1597 = vmatpush1.msra.mxu0 %v1561
        %1598 = vmatprep.subr.mxu0 0.0
        %1599 = vmatpush1.msra.mxu0 %v1562
        %1600 = vmatprep.subr.mxu0 0.0
        %1601 = vmatpush1.msra.mxu0 %v1563
        %1602 = vmatprep.subr.mxu0 0.0
        %1603 = vmatpush1.msra.mxu0 %v1564
        %1604 = vmatprep.subr.mxu0 0.0
        %1605 = vmatpush1.msra.mxu0 0.0
        %1606 = vmatprep.subr.mxu0 0.0
        %1607 = vmatpush1.msra.mxu0 0.0
        %1608 = vmatprep.subr.mxu0 0.0
        %1609 = vmatpush1.msra.mxu0 0.0
        %1610 = vmatprep.subr.mxu0 0.0
        %1611 = vmatpush1.msra.mxu0 0.0
        %1612 = vmatprep.subr.mxu0 0.0
        %1613 = vmatpush1.msra.mxu0 0.0
        %1614 = vmatprep.subr.mxu0 0.0
        %1615 = vmatpush1.msra.mxu0 0.0
        %1616 = vmatprep.subr.mxu0 0.0
        %1617 = vmatpush1.msra.mxu0 0.0
        %1618 = vmatprep.subr.mxu0 0.0
        %1619 = vmatpush1.msra.mxu0 0.0
        %1620 = vmatprep.subr.mxu0 0.0
        %1621 = vmatpush1.msra.mxu0 0.0
        %1622 = vmatprep.subr.mxu0 0.0
        %1623 = vmatpush1.msra.mxu0 0.0
        %1624 = vmatprep.subr.mxu0 0.0
        %1625 = vmatpush1.msra.mxu0 0.0
        %1626 = vmatprep.subr.mxu0 0.0
        %1627 = vmatpush1.msra.mxu0 0.0
        %1628 = vmatprep.subr.mxu0 0.0
        %1629 = vmatpush1.msra.mxu0 0.0
        %1630 = vmatprep.subr.mxu0 0.0
        %1631 = vmatpush1.msra.mxu0 0.0
        %1632 = vmatprep.subr.mxu0 0.0
        %1633 = vmatpush1.msra.mxu0 0.0
        %1634 = vmatprep.subr.mxu0 0.0
        %1635 = vmatpush1.msra.mxu0 0.0
        %1636 = vmatprep.mubr.f32.mxu0 0.0
        %1637 = vmatmul.mubr.f32.gmra.mrb[0].mxu0 %v1517
        %v1638 = vpop.f32.mrb[0].mxu0
        %v1639 = vadd.f32 %v1570, %v1638
        %v1640 = vpop.f32.mrb[0].mxu0
        %1641 = vmatprep.mubr.f32.mxu0 0.0
        %1642 = vmatmul.mubr.f32.gmra.mrb[0].mxu0 %v1518
        %v1643 = vpop.f32.mrb[0].mxu0
        %v1644 = vadd.f32 %v1570, %v1643
        %v1645 = vpop.f32.mrb[0].mxu0
        %1646 = vmatprep.mubr.f32.mxu0 0.0
        %1647 = vmatmul.mubr.f32.gmra.mrb[0].mxu0 %v1519
        %v1648 = vpop.f32.mrb[0].mxu0
        %v1649 = vadd.f32 %v1570, %v1648
        %v1650 = vpop.f32.mrb[0].mxu0
        %1651 = vmatprep.mubr.f32.mxu0 0.0
        %1652 = vmatmul.mubr.f32.gmra.mrb[0].mxu0 %v1520
        %v1653 = vpop.f32.mrb[0].mxu0
        %v1654 = vadd.f32 %v1570, %v1653
        %v1655 = vpop.f32.mrb[0].mxu0
        %1656 = vmatprep.mubr.f32.mxu0 0.0
        %1657 = vmatmul.mubr.f32.gmra.mrb[0].mxu0 %v1521
        %v1658 = vpop.f32.mrb[0].mxu0
        %v1659 = vadd.f32 %v1570, %v1658
        %v1660 = vpop.f32.mrb[0].mxu0
        %1661 = vmatprep.mubr.f32.mxu0 0.0
        %1662 = vmatmul.mubr.f32.gmra.mrb[0].mxu0 %v1522
        %v1663 = vpop.f32.mrb[0].mxu0
        %v1664 = vadd.f32 %v1570, %v1663
        %v1665 = vpop.f32.mrb[0].mxu0
        %1666 = vmatprep.mubr.f32.mxu0 0.0
        %1667 = vmatmul.mubr.f32.gmra.mrb[0].mxu0 %v1523
        %v1668 = vpop.f32.mrb[0].mxu0
        %v1669 = vadd.f32 %v1570, %v1668
        %v1670 = vpop.f32.mrb[0].mxu0
        %1671 = vmatprep.mubr.f32.mxu0 0.0
        %1672 = vmatmul.mubr.f32.gmra.mrb[0].mxu0 %v1524
        %v1673 = vpop.f32.mrb[0].mxu0
        %v1674 = vadd.f32 %v1570, %v1673
        %v1675 = vpop.f32.mrb[0].mxu0
        %1676 = vmatprep.mubr.f32.mxu0 0.0
        %1677 = vmatmul.mubr.f32.gmra.mrb[0].mxu0 %v1525
        %v1678 = vpop.f32.mrb[0].mxu0
        %v1679 = vadd.f32 %v1570, %v1678
        %v1680 = vpop.f32.mrb[0].mxu0
        %1681 = vmatprep.mubr.f32.mxu0 0.0
        %1682 = vmatmul.mubr.f32.gmra.mrb[0].mxu0 %v1526
        %v1683 = vpop.f32.mrb[0].mxu0
        %v1684 = vadd.f32 %v1570, %v1683
        %v1685 = vpop.f32.mrb[0].mxu0
        %1686 = vmatprep.mubr.f32.mxu0 0.0
        %1687 = vmatmul.mubr.f32.gmra.mrb[0].mxu0 %v1527
        %v1688 = vpop.f32.mrb[0].mxu0
        %v1689 = vadd.f32 %v1570, %v1688
        %v1690 = vpop.f32.mrb[0].mxu0
        %1691 = vmatprep.mubr.f32.mxu0 0.0
        %1692 = vmatmul.mubr.f32.gmra.mrb[0].mxu0 %v1528
        %v1693 = vpop.f32.mrb[0].mxu0
        %v1694 = vadd.f32 %v1570, %v1693
        %v1695 = vpop.f32.mrb[0].mxu0
        %1696 = vmatprep.mubr.f32.mxu0 0.0
        %1697 = vmatmul.mubr.f32.gmra.mrb[0].mxu0 %v1529
        %v1698 = vpop.f32.mrb[0].mxu0
        %v1699 = vadd.f32 %v1570, %v1698
        %v1700 = vpop.f32.mrb[0].mxu0
        %1701 = vmatprep.mubr.f32.mxu0 0.0
        %1702 = vmatmul.mubr.f32.gmra.mrb[0].mxu0 %v1530
        %v1703 = vpop.f32.mrb[0].mxu0
        %v1704 = vadd.f32 %v1570, %v1703
        %v1705 = vpop.f32.mrb[0].mxu0
        %1706 = vmatprep.mubr.f32.mxu0 0.0
        %1707 = vmatmul.mubr.f32.gmra.mrb[0].mxu0 %v1531
        %v1708 = vpop.f32.mrb[0].mxu0
        %v1709 = vadd.f32 %v1570, %v1708
        %v1710 = vpop.f32.mrb[0].mxu0
        %1711 = vmatprep.mubr.f32.mxu0 0.0
        %1712 = vmatmul.mubr.f32.gmra.mrb[0].mxu0 %v1532
        %v1713 = vpop.f32.mrb[0].mxu0
        %v1714 = vadd.f32 %v1570, %v1713
        %v1715 = vpop.f32.mrb[0].mxu0
        %1716 = vmatprep.mubr.f32.mxu0 0.0
        %1717 = vmatmul.mubr.f32.gmra.mrb[0].mxu0 %v1533
        %v1718 = vpop.f32.mrb[0].mxu0
        %v1719 = vadd.f32 %v1570, %v1718
        %v1720 = vpop.f32.mrb[0].mxu0
        %1721 = vmatprep.mubr.f32.mxu0 0.0
        %1722 = vmatmul.mubr.f32.gmra.mrb[0].mxu0 %v1534
        %v1723 = vpop.f32.mrb[0].mxu0
        %v1724 = vadd.f32 %v1570, %v1723
        %v1725 = vpop.f32.mrb[0].mxu0
        %1726 = vmatprep.mubr.f32.mxu0 0.0
        %1727 = vmatmul.mubr.f32.gmra.mrb[0].mxu0 %v1535
        %v1728 = vpop.f32.mrb[0].mxu0
        %v1729 = vadd.f32 %v1570, %v1728
        %v1730 = vpop.f32.mrb[0].mxu0
        %1731 = vmatprep.mubr.f32.mxu0 0.0
        %1732 = vmatmul.mubr.f32.gmra.mrb[0].mxu0 %v1536
        %v1733 = vpop.f32.mrb[0].mxu0
        %v1734 = vadd.f32 %v1570, %v1733
        %v1735 = vpop.f32.mrb[0].mxu0
        %1736 = vmatprep.mubr.f32.mxu0 0.0
        %1737 = vmatmul.mubr.f32.gmra.mrb[0].mxu0 %v1537
        %v1738 = vpop.f32.mrb[0].mxu0
        %v1739 = vadd.f32 %v1570, %v1738
        %v1740 = vpop.f32.mrb[0].mxu0
        %1741 = vmatprep.mubr.f32.mxu0 0.0
        %1742 = vmatmul.mubr.f32.gmra.mrb[0].mxu0 %v1538
        %v1743 = vpop.f32.mrb[0].mxu0
        %v1744 = vadd.f32 %v1570, %v1743
        %v1745 = vpop.f32.mrb[0].mxu0
        %1746 = vmatprep.mubr.f32.mxu0 0.0
        %1747 = vmatmul.mubr.f32.gmra.mrb[0].mxu0 %v1539
        %v1748 = vpop.f32.mrb[0].mxu0
        %v1749 = vadd.f32 %v1570, %v1748
        %v1750 = vpop.f32.mrb[0].mxu0
        %1751 = vmatprep.mubr.f32.mxu0 0.0
        %1752 = vmatmul.mubr.f32.gmra.mrb[0].mxu0 %v1540
        %v1753 = vpop.f32.mrb[0].mxu0
        %v1754 = vadd.f32 %v1570, %v1753
        %v1755 = vpop.f32.mrb[0].mxu0
        %1756 = vmatprep.mubr.f32.mxu0 0.0
        %1757 = vmatmul.mubr.f32.gmra.mrb[0].mxu0 %v1541
        %v1758 = vpop.f32.mrb[0].mxu0
        %v1759 = vadd.f32 %v1570, %v1758
        %v1760 = vpop.f32.mrb[0].mxu0
        %1761 = vmatprep.mubr.f32.mxu0 0.0
        %1762 = vmatmul.mubr.f32.gmra.mrb[0].mxu0 %v1542
        %v1763 = vpop.f32.mrb[0].mxu0
        %v1764 = vadd.f32 %v1570, %v1763
        %v1765 = vpop.f32.mrb[0].mxu0
        %1766 = vmatprep.mubr.f32.mxu0 0.0
        %1767 = vmatmul.mubr.f32.gmra.mrb[0].mxu0 %v1543
        %v1768 = vpop.f32.mrb[0].mxu0
        %v1769 = vadd.f32 %v1570, %v1768
        %v1770 = vpop.f32.mrb[0].mxu0
        %1771 = vmatprep.mubr.f32.mxu0 0.0
        %1772 = vmatmul.mubr.f32.gmra.mrb[0].mxu0 %v1544
        %v1773 = vpop.f32.mrb[0].mxu0
        %v1774 = vadd.f32 %v1570, %v1773
        %v1775 = vpop.f32.mrb[0].mxu0
        %1776 = vmatprep.mubr.f32.mxu0 0.0
        %1777 = vmatmul.mubr.f32.gmra.mrb[0].mxu0 %v1545
        %v1778 = vpop.f32.mrb[0].mxu0
        %v1779 = vadd.f32 %v1570, %v1778
        %v1780 = vpop.f32.mrb[0].mxu0
        %1781 = vmatprep.mubr.f32.mxu0 0.0
        %1782 = vmatmul.mubr.f32.gmra.mrb[0].mxu0 %v1546
        %v1783 = vpop.f32.mrb[0].mxu0
        %v1784 = vadd.f32 %v1570, %v1783
        %v1785 = vpop.f32.mrb[0].mxu0
        %1786 = vmatprep.mubr.f32.mxu0 0.0
        %1787 = vmatmul.mubr.f32.gmra.mrb[0].mxu0 %v1547
        %v1788 = vpop.f32.mrb[0].mxu0
        %v1789 = vadd.f32 %v1570, %v1788
        %v1790 = vpop.f32.mrb[0].mxu0
        %1791 = vmatprep.mubr.f32.mxu0 0.0
        %1792 = vmatmul.mubr.f32.gmra.mrb[0].mxu0 %v1548
        %v1793 = vpop.f32.mrb[0].mxu0
        %v1794 = vadd.f32 %v1570, %v1793
        %v1795 = vpop.f32.mrb[0].mxu0
        %1796 = vdwg.mxu0
        %1797 = vst [vmem:[#allocation4] sm:$0xff] %v1639
        %1798 = vst [vmem:[#allocation4 + $0x20] sm:$0xff] %v1644
        %1799 = vst [vmem:[#allocation4 + $0x40] sm:$0xff] %v1649
        %1800 = vst [vmem:[#allocation4 + $0x60] sm:$0xff] %v1654
        %1801 = vst [vmem:[#allocation4 + $0x80] sm:$0xff] %v1659
        %1802 = vst [vmem:[#allocation4 + $0xa0] sm:$0xff] %v1664
        %1803 = vst [vmem:[#allocation4 + $0xc0] sm:$0xff] %v1669
        %1804 = vst [vmem:[#allocation4 + $0xe0] sm:$0xff] %v1674
        %1805 = vst [vmem:[#allocation4 + $0x100] sm:$0xff] %v1679
        %1806 = vst [vmem:[#allocation4 + $0x120] sm:$0xff] %v1684
        %1807 = vst [vmem:[#allocation4 + $0x140] sm:$0xff] %v1689
        %1808 = vst [vmem:[#allocation4 + $0x160] sm:$0xff] %v1694
        %1809 = vst [vmem:[#allocation4 + $0x180] sm:$0xff] %v1699
        %1810 = vst [vmem:[#allocation4 + $0x1a0] sm:$0xff] %v1704
        %1811 = vst [vmem:[#allocation4 + $0x1c0] sm:$0xff] %v1709
        %1812 = vst [vmem:[#allocation4 + $0x1e0] sm:$0xff] %v1714
        %1813 = vst [vmem:[#allocation4 + $0x200] sm:$0xff] %v1719
        %1814 = vst [vmem:[#allocation4 + $0x220] sm:$0xff] %v1724
        %1815 = vst [vmem:[#allocation4 + $0x240] sm:$0xff] %v1729
        %1816 = vst [vmem:[#allocation4 + $0x260] sm:$0xff] %v1734
        %1817 = vst [vmem:[#allocation4 + $0x280] sm:$0xff] %v1739
        %1818 = vst [vmem:[#allocation4 + $0x2a0] sm:$0xff] %v1744
        %1819 = vst [vmem:[#allocation4 + $0x2c0] sm:$0xff] %v1749
        %1820 = vst [vmem:[#allocation4 + $0x2e0] sm:$0xff] %v1754
        %1821 = vst [vmem:[#allocation4 + $0x300] sm:$0xff] %v1759
        %1822 = vst [vmem:[#allocation4 + $0x320] sm:$0xff] %v1764
        %1823 = vst [vmem:[#allocation4 + $0x340] sm:$0xff] %v1769
        %1824 = vst [vmem:[#allocation4 + $0x360] sm:$0xff] %v1774
        %1825 = vst [vmem:[#allocation4 + $0x380] sm:$0xff] %v1779
        %1826 = vst [vmem:[#allocation4 + $0x3a0] sm:$0xff] %v1784
        %1827 = vst [vmem:[#allocation4 + $0x3c0] sm:$0xff] %v1789
        %1828 = vst [vmem:[#allocation4 + $0x3e0] sm:$0xff] %v1794
        %v1829 = vld [vmem:[#allocation3 + $0x8] sm:$0xff]
        %v1830 = vld [vmem:[#allocation3 + $0x28] sm:$0xff]
        %v1831 = vld [vmem:[#allocation3 + $0x48] sm:$0xff]
        %v1832 = vld [vmem:[#allocation3 + $0x68] sm:$0xff]
        %v1833 = vld [vmem:[#allocation3 + $0x88] sm:$0xff]
        %v1834 = vld [vmem:[#allocation3 + $0xa8] sm:$0xff]
        %v1835 = vld [vmem:[#allocation3 + $0xc8] sm:$0xff]
        %v1836 = vld [vmem:[#allocation3 + $0xe8] sm:$0xff]
        %v1837 = vld [vmem:[#allocation3 + $0x108] sm:$0xff]
        %v1838 = vld [vmem:[#allocation3 + $0x128] sm:$0xff]
        %v1839 = vld [vmem:[#allocation3 + $0x148] sm:$0xff]
        %v1840 = vld [vmem:[#allocation3 + $0x168] sm:$0xff]
        %v1841 = vld [vmem:[#allocation3 + $0x188] sm:$0xff]
        %v1842 = vld [vmem:[#allocation3 + $0x1a8] sm:$0xff]
        %v1843 = vld [vmem:[#allocation3 + $0x1c8] sm:$0xff]
        %v1844 = vld [vmem:[#allocation3 + $0x1e8] sm:$0xff]
        %v1845 = vld [vmem:[#allocation3 + $0x208] sm:$0xff]
        %v1846 = vld [vmem:[#allocation3 + $0x228] sm:$0xff]
        %v1847 = vld [vmem:[#allocation3 + $0x248] sm:$0xff]
        %v1848 = vld [vmem:[#allocation3 + $0x268] sm:$0xff]
        %v1849 = vld [vmem:[#allocation3 + $0x288] sm:$0xff]
        %v1850 = vld [vmem:[#allocation3 + $0x2a8] sm:$0xff]
        %v1851 = vld [vmem:[#allocation3 + $0x2c8] sm:$0xff]
        %v1852 = vld [vmem:[#allocation3 + $0x2e8] sm:$0xff]
        %v1853 = vld [vmem:[#allocation3 + $0x308] sm:$0xff]
        %v1854 = vld [vmem:[#allocation3 + $0x328] sm:$0xff]
        %v1855 = vld [vmem:[#allocation3 + $0x348] sm:$0xff]
        %v1856 = vld [vmem:[#allocation3 + $0x368] sm:$0xff]
        %v1857 = vld [vmem:[#allocation3 + $0x388] sm:$0xff]
        %v1858 = vld [vmem:[#allocation3 + $0x3a8] sm:$0xff]
        %v1859 = vld [vmem:[#allocation3 + $0x3c8] sm:$0xff]
        %v1860 = vld [vmem:[#allocation3 + $0x3e8] sm:$0xff]
        %v1861 = vld [vmem:[%s5 + $0x1] sm:$0x1]
        %v1863 = vlaneseq
        %v1864 = vshrl.u32 %v1863, 7
        %v1865 = vsub.s32 0, %v1864
        %v1866 = vrot.slane %v1861, %v1865
        %v1868 = vadd.f32 %v1829, %v1866
        %v1869 = vadd.f32 %v1830, %v1866
        %v1870 = vadd.f32 %v1831, %v1866
        %v1871 = vadd.f32 %v1832, %v1866
        %v1872 = vadd.f32 %v1833, %v1866
        %v1873 = vadd.f32 %v1834, %v1866
        %v1874 = vadd.f32 %v1835, %v1866
        %v1875 = vadd.f32 %v1836, %v1866
        %v1876 = vadd.f32 %v1837, %v1866
        %v1877 = vadd.f32 %v1838, %v1866
        %v1878 = vadd.f32 %v1839, %v1866
        %v1879 = vadd.f32 %v1840, %v1866
        %v1880 = vadd.f32 %v1841, %v1866
        %v1881 = vadd.f32 %v1842, %v1866
        %v1882 = vadd.f32 %v1843, %v1866
        %v1883 = vadd.f32 %v1844, %v1866
        %v1884 = vadd.f32 %v1845, %v1866
        %v1885 = vadd.f32 %v1846, %v1866
        %v1886 = vadd.f32 %v1847, %v1866
        %v1887 = vadd.f32 %v1848, %v1866
        %v1888 = vadd.f32 %v1849, %v1866
        %v1889 = vadd.f32 %v1850, %v1866
        %v1890 = vadd.f32 %v1851, %v1866
        %v1891 = vadd.f32 %v1852, %v1866
        %v1892 = vadd.f32 %v1853, %v1866
        %v1893 = vadd.f32 %v1854, %v1866
        %v1894 = vadd.f32 %v1855, %v1866
        %v1895 = vadd.f32 %v1856, %v1866
        %v1896 = vadd.f32 %v1857, %v1866
        %v1897 = vadd.f32 %v1858, %v1866
        %v1898 = vadd.f32 %v1859, %v1866
        %v1899 = vadd.f32 %v1860, %v1866
        %v1900 = vsub.f32 0.0, %v1868
        %v1901 = vsub.f32 0.0, %v1869
        %v1902 = vsub.f32 0.0, %v1870
        %v1903 = vsub.f32 0.0, %v1871
        %v1904 = vsub.f32 0.0, %v1872
        %v1905 = vsub.f32 0.0, %v1873
        %v1906 = vsub.f32 0.0, %v1874
        %v1907 = vsub.f32 0.0, %v1875
        %v1908 = vsub.f32 0.0, %v1876
        %v1909 = vsub.f32 0.0, %v1877
        %v1910 = vsub.f32 0.0, %v1878
        %v1911 = vsub.f32 0.0, %v1879
        %v1912 = vsub.f32 0.0, %v1880
        %v1913 = vsub.f32 0.0, %v1881
        %v1914 = vsub.f32 0.0, %v1882
        %v1915 = vsub.f32 0.0, %v1883
        %v1916 = vsub.f32 0.0, %v1884
        %v1917 = vsub.f32 0.0, %v1885
        %v1918 = vsub.f32 0.0, %v1886
        %v1919 = vsub.f32 0.0, %v1887
        %v1920 = vsub.f32 0.0, %v1888
        %v1921 = vsub.f32 0.0, %v1889
        %v1922 = vsub.f32 0.0, %v1890
        %v1923 = vsub.f32 0.0, %v1891
        %v1924 = vsub.f32 0.0, %v1892
        %v1925 = vsub.f32 0.0, %v1893
        %v1926 = vsub.f32 0.0, %v1894
        %v1927 = vsub.f32 0.0, %v1895
        %v1928 = vsub.f32 0.0, %v1896
        %v1929 = vsub.f32 0.0, %v1897
        %v1930 = vsub.f32 0.0, %v1898
        %v1931 = vsub.f32 0.0, %v1899
        %v1932 = vmul.f32 %v1900, 1.442695
        %v1933 = vpow.pop %v1932
        %v1934 = vmul.f32 %v1901, 1.442695
        %v1935 = vpow.pop %v1934
        %v1936 = vmul.f32 %v1902, 1.442695
        %v1937 = vpow.pop %v1936
        %v1938 = vmul.f32 %v1903, 1.442695
        %v1939 = vpow.pop %v1938
        %v1940 = vmul.f32 %v1904, 1.442695
        %v1941 = vpow.pop %v1940
        %v1942 = vmul.f32 %v1905, 1.442695
        %v1943 = vpow.pop %v1942
        %v1944 = vmul.f32 %v1906, 1.442695
        %v1945 = vpow.pop %v1944
        %v1946 = vmul.f32 %v1907, 1.442695
        %v1947 = vpow.pop %v1946
        %v1948 = vmul.f32 %v1908, 1.442695
        %v1949 = vpow.pop %v1948
        %v1950 = vmul.f32 %v1909, 1.442695
        %v1951 = vpow.pop %v1950
        %v1952 = vmul.f32 %v1910, 1.442695
        %v1953 = vpow.pop %v1952
        %v1954 = vmul.f32 %v1911, 1.442695
        %v1955 = vpow.pop %v1954
        %v1956 = vmul.f32 %v1912, 1.442695
        %v1957 = vpow.pop %v1956
        %v1958 = vmul.f32 %v1913, 1.442695
        %v1959 = vpow.pop %v1958
        %v1960 = vmul.f32 %v1914, 1.442695
        %v1961 = vpow.pop %v1960
        %v1962 = vmul.f32 %v1915, 1.442695
        %v1963 = vpow.pop %v1962
        %v1964 = vmul.f32 %v1916, 1.442695
        %v1965 = vpow.pop %v1964
        %v1966 = vmul.f32 %v1917, 1.442695
        %v1967 = vpow.pop %v1966
        %v1968 = vmul.f32 %v1918, 1.442695
        %v1969 = vpow.pop %v1968
        %v1970 = vmul.f32 %v1919, 1.442695
        %v1971 = vpow.pop %v1970
        %v1972 = vmul.f32 %v1920, 1.442695
        %v1973 = vpow.pop %v1972
        %v1974 = vmul.f32 %v1921, 1.442695
        %v1975 = vpow.pop %v1974
        %v1976 = vmul.f32 %v1922, 1.442695
        %v1977 = vpow.pop %v1976
        %v1978 = vmul.f32 %v1923, 1.442695
        %v1979 = vpow.pop %v1978
        %v1980 = vmul.f32 %v1924, 1.442695
        %v1981 = vpow.pop %v1980
        %v1982 = vmul.f32 %v1925, 1.442695
        %v1983 = vpow.pop %v1982
        %v1984 = vmul.f32 %v1926, 1.442695
        %v1985 = vpow.pop %v1984
        %v1986 = vmul.f32 %v1927, 1.442695
        %v1987 = vpow.pop %v1986
        %v1988 = vmul.f32 %v1928, 1.442695
        %v1989 = vpow.pop %v1988
        %v1990 = vmul.f32 %v1929, 1.442695
        %v1991 = vpow.pop %v1990
        %v1992 = vmul.f32 %v1930, 1.442695
        %v1993 = vpow.pop %v1992
        %v1994 = vmul.f32 %v1931, 1.442695
        %v1995 = vpow.pop %v1994
        %v1996 = vadd.f32 %v1933, 1.0
        %v1997 = vadd.f32 %v1935, 1.0
        %v1998 = vadd.f32 %v1937, 1.0
        %v1999 = vadd.f32 %v1939, 1.0
        %v2000 = vadd.f32 %v1941, 1.0
        %v2001 = vadd.f32 %v1943, 1.0
        %v2002 = vadd.f32 %v1945, 1.0
        %v2003 = vadd.f32 %v1947, 1.0
        %v2004 = vadd.f32 %v1949, 1.0
        %v2005 = vadd.f32 %v1951, 1.0
        %v2006 = vadd.f32 %v1953, 1.0
        %v2007 = vadd.f32 %v1955, 1.0
        %v2008 = vadd.f32 %v1957, 1.0
        %v2009 = vadd.f32 %v1959, 1.0
        %v2010 = vadd.f32 %v1961, 1.0
        %v2011 = vadd.f32 %v1963, 1.0
        %v2012 = vadd.f32 %v1965, 1.0
        %v2013 = vadd.f32 %v1967, 1.0
        %v2014 = vadd.f32 %v1969, 1.0
        %v2015 = vadd.f32 %v1971, 1.0
        %v2016 = vadd.f32 %v1973, 1.0
        %v2017 = vadd.f32 %v1975, 1.0
        %v2018 = vadd.f32 %v1977, 1.0
        %v2019 = vadd.f32 %v1979, 1.0
        %v2020 = vadd.f32 %v1981, 1.0
        %v2021 = vadd.f32 %v1983, 1.0
        %v2022 = vadd.f32 %v1985, 1.0
        %v2023 = vadd.f32 %v1987, 1.0
        %v2024 = vadd.f32 %v1989, 1.0
        %v2025 = vadd.f32 %v1991, 1.0
        %v2026 = vadd.f32 %v1993, 1.0
        %v2027 = vadd.f32 %v1995, 1.0
        %v2028 = vrcp.pop %v1996
        %v2029 = vmul.f32 1.0, %v2028
        %v2030 = vrcp.pop %v1997
        %v2031 = vmul.f32 1.0, %v2030
        %v2032 = vrcp.pop %v1998
        %v2033 = vmul.f32 1.0, %v2032
        %v2034 = vrcp.pop %v1999
        %v2035 = vmul.f32 1.0, %v2034
        %v2036 = vrcp.pop %v2000
        %v2037 = vmul.f32 1.0, %v2036
        %v2038 = vrcp.pop %v2001
        %v2039 = vmul.f32 1.0, %v2038
        %v2040 = vrcp.pop %v2002
        %v2041 = vmul.f32 1.0, %v2040
        %v2042 = vrcp.pop %v2003
        %v2043 = vmul.f32 1.0, %v2042
        %v2044 = vrcp.pop %v2004
        %v2045 = vmul.f32 1.0, %v2044
        %v2046 = vrcp.pop %v2005
        %v2047 = vmul.f32 1.0, %v2046
        %v2048 = vrcp.pop %v2006
        %v2049 = vmul.f32 1.0, %v2048
        %v2050 = vrcp.pop %v2007
        %v2051 = vmul.f32 1.0, %v2050
        %v2052 = vrcp.pop %v2008
        %v2053 = vmul.f32 1.0, %v2052
        %v2054 = vrcp.pop %v2009
        %v2055 = vmul.f32 1.0, %v2054
        %v2056 = vrcp.pop %v2010
        %v2057 = vmul.f32 1.0, %v2056
        %v2058 = vrcp.pop %v2011
        %v2059 = vmul.f32 1.0, %v2058
        %v2060 = vrcp.pop %v2012
        %v2061 = vmul.f32 1.0, %v2060
        %v2062 = vrcp.pop %v2013
        %v2063 = vmul.f32 1.0, %v2062
        %v2064 = vrcp.pop %v2014
        %v2065 = vmul.f32 1.0, %v2064
        %v2066 = vrcp.pop %v2015
        %v2067 = vmul.f32 1.0, %v2066
        %v2068 = vrcp.pop %v2016
        %v2069 = vmul.f32 1.0, %v2068
        %v2070 = vrcp.pop %v2017
        %v2071 = vmul.f32 1.0, %v2070
        %v2072 = vrcp.pop %v2018
        %v2073 = vmul.f32 1.0, %v2072
        %v2074 = vrcp.pop %v2019
        %v2075 = vmul.f32 1.0, %v2074
        %v2076 = vrcp.pop %v2020
        %v2077 = vmul.f32 1.0, %v2076
        %v2078 = vrcp.pop %v2021
        %v2079 = vmul.f32 1.0, %v2078
        %v2080 = vrcp.pop %v2022
        %v2081 = vmul.f32 1.0, %v2080
        %v2082 = vrcp.pop %v2023
        %v2083 = vmul.f32 1.0, %v2082
        %v2084 = vrcp.pop %v2024
        %v2085 = vmul.f32 1.0, %v2084
        %v2086 = vrcp.pop %v2025
        %v2087 = vmul.f32 1.0, %v2086
        %v2088 = vrcp.pop %v2026
        %v2089 = vmul.f32 1.0, %v2088
        %v2090 = vrcp.pop %v2027
        %v2091 = vmul.f32 1.0, %v2090
        %v2092 = vmul.f32 %v1868, %v2029
        %v2093 = vmul.f32 %v1869, %v2031
        %v2094 = vmul.f32 %v1870, %v2033
        %v2095 = vmul.f32 %v1871, %v2035
        %v2096 = vmul.f32 %v1872, %v2037
        %v2097 = vmul.f32 %v1873, %v2039
        %v2098 = vmul.f32 %v1874, %v2041
        %v2099 = vmul.f32 %v1875, %v2043
        %v2100 = vmul.f32 %v1876, %v2045
        %v2101 = vmul.f32 %v1877, %v2047
        %v2102 = vmul.f32 %v1878, %v2049
        %v2103 = vmul.f32 %v1879, %v2051
        %v2104 = vmul.f32 %v1880, %v2053
        %v2105 = vmul.f32 %v1881, %v2055
        %v2106 = vmul.f32 %v1882, %v2057
        %v2107 = vmul.f32 %v1883, %v2059
        %v2108 = vmul.f32 %v1884, %v2061
        %v2109 = vmul.f32 %v1885, %v2063
        %v2110 = vmul.f32 %v1886, %v2065
        %v2111 = vmul.f32 %v1887, %v2067
        %v2112 = vmul.f32 %v1888, %v2069
        %v2113 = vmul.f32 %v1889, %v2071
        %v2114 = vmul.f32 %v1890, %v2073
        %v2115 = vmul.f32 %v1891, %v2075
        %v2116 = vmul.f32 %v1892, %v2077
        %v2117 = vmul.f32 %v1893, %v2079
        %v2118 = vmul.f32 %v1894, %v2081
        %v2119 = vmul.f32 %v1895, %v2083
        %v2120 = vmul.f32 %v1896, %v2085
        %v2121 = vmul.f32 %v1897, %v2087
        %v2122 = vmul.f32 %v1898, %v2089
        %v2123 = vmul.f32 %v1899, %v2091
        %s2124 = scalar_lea.vmem %s6, 128
        %v2125 = vld [vmem:[%s2124] sm:$0xff]
        %v2126 = vld [vmem:[%s2124 + $0x8] sm:$0xff]
        %v2127 = vld [vmem:[%s2124 + $0x10] sm:$0xff]
        %v2128 = vld [vmem:[%s2124 + $0x18] sm:$0xff]
        %v2129 = vld [vmem:[%s2124 + $0x20] sm:$0xff]
        %v2130 = vld [vmem:[%s2124 + $0x28] sm:$0xff]
        %v2131 = vld [vmem:[%s2124 + $0x30] sm:$0xff]
        %v2132 = vld [vmem:[%s2124 + $0x38] sm:$0xff]
        %v2133 = vld [vmem:[%s2124 + $0x40] sm:$0xff]
        %v2134 = vld [vmem:[%s2124 + $0x48] sm:$0xff]
        %v2135 = vld [vmem:[%s2124 + $0x50] sm:$0xff]
        %v2136 = vld [vmem:[%s2124 + $0x58] sm:$0xff]
        %v2137 = vld [vmem:[%s2124 + $0x60] sm:$0xff]
        %v2138 = vld [vmem:[%s2124 + $0x68] sm:$0xff]
        %v2139 = vld [vmem:[%s2124 + $0x70] sm:$0xff]
        %v2140 = vld [vmem:[%s2124 + $0x78] sm:$0xff]
        %s2141 = scalar_lea.vmem %s7, 1
        %v2142 = vld [vmem:[%s2141] sm:$0x1]
        %v2144 = vlaneseq
        %v2145 = vshrl.u32 %v2144, 7
        %v2146 = vsub.s32 0, %v2145
        %v2147 = vrot.slane %v2142, %v2146
        %2149 = vmatprep.subr.mxu0 0.0
        %2150 = vmatpush1.msra.mxu0 %v2125
        %2151 = vmatprep.subr.mxu0 0.0
        %2152 = vmatpush1.msra.mxu0 %v2126
        %2153 = vmatprep.subr.mxu0 0.0
        %2154 = vmatpush1.msra.mxu0 %v2127
        %2155 = vmatprep.subr.mxu0 0.0
        %2156 = vmatpush1.msra.mxu0 %v2128
        %2157 = vmatprep.subr.mxu0 0.0
        %2158 = vmatpush1.msra.mxu0 %v2129
        %2159 = vmatprep.subr.mxu0 0.0
        %2160 = vmatpush1.msra.mxu0 %v2130
        %2161 = vmatprep.subr.mxu0 0.0
        %2162 = vmatpush1.msra.mxu0 %v2131
        %2163 = vmatprep.subr.mxu0 0.0
        %2164 = vmatpush1.msra.mxu0 %v2132
        %2165 = vmatprep.subr.mxu0 0.0
        %2166 = vmatpush1.msra.mxu0 %v2133
        %2167 = vmatprep.subr.mxu0 0.0
        %2168 = vmatpush1.msra.mxu0 %v2134
        %2169 = vmatprep.subr.mxu0 0.0
        %2170 = vmatpush1.msra.mxu0 %v2135
        %2171 = vmatprep.subr.mxu0 0.0
        %2172 = vmatpush1.msra.mxu0 %v2136
        %2173 = vmatprep.subr.mxu0 0.0
        %2174 = vmatpush1.msra.mxu0 %v2137
        %2175 = vmatprep.subr.mxu0 0.0
        %2176 = vmatpush1.msra.mxu0 %v2138
        %2177 = vmatprep.subr.mxu0 0.0
        %2178 = vmatpush1.msra.mxu0 %v2139
        %2179 = vmatprep.subr.mxu0 0.0
        %2180 = vmatpush1.msra.mxu0 %v2140
        %2181 = vmatprep.subr.mxu0 0.0
        %2182 = vmatpush1.msra.mxu0 0.0
        %2183 = vmatprep.subr.mxu0 0.0
        %2184 = vmatpush1.msra.mxu0 0.0
        %2185 = vmatprep.subr.mxu0 0.0
        %2186 = vmatpush1.msra.mxu0 0.0
        %2187 = vmatprep.subr.mxu0 0.0
        %2188 = vmatpush1.msra.mxu0 0.0
        %2189 = vmatprep.subr.mxu0 0.0
        %2190 = vmatpush1.msra.mxu0 0.0
        %2191 = vmatprep.subr.mxu0 0.0
        %2192 = vmatpush1.msra.mxu0 0.0
        %2193 = vmatprep.subr.mxu0 0.0
        %2194 = vmatpush1.msra.mxu0 0.0
        %2195 = vmatprep.subr.mxu0 0.0
        %2196 = vmatpush1.msra.mxu0 0.0
        %2197 = vmatprep.subr.mxu0 0.0
        %2198 = vmatpush1.msra.mxu0 0.0
        %2199 = vmatprep.subr.mxu0 0.0
        %2200 = vmatpush1.msra.mxu0 0.0
        %2201 = vmatprep.subr.mxu0 0.0
        %2202 = vmatpush1.msra.mxu0 0.0
        %2203 = vmatprep.subr.mxu0 0.0
        %2204 = vmatpush1.msra.mxu0 0.0
        %2205 = vmatprep.subr.mxu0 0.0
        %2206 = vmatpush1.msra.mxu0 0.0
        %2207 = vmatprep.subr.mxu0 0.0
        %2208 = vmatpush1.msra.mxu0 0.0
        %2209 = vmatprep.subr.mxu0 0.0
        %2210 = vmatpush1.msra.mxu0 0.0
        %2211 = vmatprep.subr.mxu0 0.0
        %2212 = vmatpush1.msra.mxu0 0.0
        %2213 = vmatprep.mubr.f32.mxu0 0.0
        %2214 = vmatmul.mubr.f32.gmra.mrb[0].mxu0 %v2092
        %v2215 = vpop.f32.mrb[0].mxu0
        %v2216 = vadd.f32 %v2147, %v2215
        %v2217 = vpop.f32.mrb[0].mxu0
        %2218 = vmatprep.mubr.f32.mxu0 0.0
        %2219 = vmatmul.mubr.f32.gmra.mrb[0].mxu0 %v2093
        %v2220 = vpop.f32.mrb[0].mxu0
        %v2221 = vadd.f32 %v2147, %v2220
        %v2222 = vpop.f32.mrb[0].mxu0
        %2223 = vmatprep.mubr.f32.mxu0 0.0
        %2224 = vmatmul.mubr.f32.gmra.mrb[0].mxu0 %v2094
        %v2225 = vpop.f32.mrb[0].mxu0
        %v2226 = vadd.f32 %v2147, %v2225
        %v2227 = vpop.f32.mrb[0].mxu0
        %2228 = vmatprep.mubr.f32.mxu0 0.0
        %2229 = vmatmul.mubr.f32.gmra.mrb[0].mxu0 %v2095
        %v2230 = vpop.f32.mrb[0].mxu0
        %v2231 = vadd.f32 %v2147, %v2230
        %v2232 = vpop.f32.mrb[0].mxu0
        %2233 = vmatprep.mubr.f32.mxu0 0.0
        %2234 = vmatmul.mubr.f32.gmra.mrb[0].mxu0 %v2096
        %v2235 = vpop.f32.mrb[0].mxu0
        %v2236 = vadd.f32 %v2147, %v2235
        %v2237 = vpop.f32.mrb[0].mxu0
        %2238 = vmatprep.mubr.f32.mxu0 0.0
        %2239 = vmatmul.mubr.f32.gmra.mrb[0].mxu0 %v2097
        %v2240 = vpop.f32.mrb[0].mxu0
        %v2241 = vadd.f32 %v2147, %v2240
        %v2242 = vpop.f32.mrb[0].mxu0
        %2243 = vmatprep.mubr.f32.mxu0 0.0
        %2244 = vmatmul.mubr.f32.gmra.mrb[0].mxu0 %v2098
        %v2245 = vpop.f32.mrb[0].mxu0
        %v2246 = vadd.f32 %v2147, %v2245
        %v2247 = vpop.f32.mrb[0].mxu0
        %2248 = vmatprep.mubr.f32.mxu0 0.0
        %2249 = vmatmul.mubr.f32.gmra.mrb[0].mxu0 %v2099
        %v2250 = vpop.f32.mrb[0].mxu0
        %v2251 = vadd.f32 %v2147, %v2250
        %v2252 = vpop.f32.mrb[0].mxu0
        %2253 = vmatprep.mubr.f32.mxu0 0.0
        %2254 = vmatmul.mubr.f32.gmra.mrb[0].mxu0 %v2100
        %v2255 = vpop.f32.mrb[0].mxu0
        %v2256 = vadd.f32 %v2147, %v2255
        %v2257 = vpop.f32.mrb[0].mxu0
        %2258 = vmatprep.mubr.f32.mxu0 0.0
        %2259 = vmatmul.mubr.f32.gmra.mrb[0].mxu0 %v2101
        %v2260 = vpop.f32.mrb[0].mxu0
        %v2261 = vadd.f32 %v2147, %v2260
        %v2262 = vpop.f32.mrb[0].mxu0
        %2263 = vmatprep.mubr.f32.mxu0 0.0
        %2264 = vmatmul.mubr.f32.gmra.mrb[0].mxu0 %v2102
        %v2265 = vpop.f32.mrb[0].mxu0
        %v2266 = vadd.f32 %v2147, %v2265
        %v2267 = vpop.f32.mrb[0].mxu0
        %2268 = vmatprep.mubr.f32.mxu0 0.0
        %2269 = vmatmul.mubr.f32.gmra.mrb[0].mxu0 %v2103
        %v2270 = vpop.f32.mrb[0].mxu0
        %v2271 = vadd.f32 %v2147, %v2270
        %v2272 = vpop.f32.mrb[0].mxu0
        %2273 = vmatprep.mubr.f32.mxu0 0.0
        %2274 = vmatmul.mubr.f32.gmra.mrb[0].mxu0 %v2104
        %v2275 = vpop.f32.mrb[0].mxu0
        %v2276 = vadd.f32 %v2147, %v2275
        %v2277 = vpop.f32.mrb[0].mxu0
        %2278 = vmatprep.mubr.f32.mxu0 0.0
        %2279 = vmatmul.mubr.f32.gmra.mrb[0].mxu0 %v2105
        %v2280 = vpop.f32.mrb[0].mxu0
        %v2281 = vadd.f32 %v2147, %v2280
        %v2282 = vpop.f32.mrb[0].mxu0
        %2283 = vmatprep.mubr.f32.mxu0 0.0
        %2284 = vmatmul.mubr.f32.gmra.mrb[0].mxu0 %v2106
        %v2285 = vpop.f32.mrb[0].mxu0
        %v2286 = vadd.f32 %v2147, %v2285
        %v2287 = vpop.f32.mrb[0].mxu0
        %2288 = vmatprep.mubr.f32.mxu0 0.0
        %2289 = vmatmul.mubr.f32.gmra.mrb[0].mxu0 %v2107
        %v2290 = vpop.f32.mrb[0].mxu0
        %v2291 = vadd.f32 %v2147, %v2290
        %v2292 = vpop.f32.mrb[0].mxu0
        %2293 = vmatprep.mubr.f32.mxu0 0.0
        %2294 = vmatmul.mubr.f32.gmra.mrb[0].mxu0 %v2108
        %v2295 = vpop.f32.mrb[0].mxu0
        %v2296 = vadd.f32 %v2147, %v2295
        %v2297 = vpop.f32.mrb[0].mxu0
        %2298 = vmatprep.mubr.f32.mxu0 0.0
        %2299 = vmatmul.mubr.f32.gmra.mrb[0].mxu0 %v2109
        %v2300 = vpop.f32.mrb[0].mxu0
        %v2301 = vadd.f32 %v2147, %v2300
        %v2302 = vpop.f32.mrb[0].mxu0
        %2303 = vmatprep.mubr.f32.mxu0 0.0
        %2304 = vmatmul.mubr.f32.gmra.mrb[0].mxu0 %v2110
        %v2305 = vpop.f32.mrb[0].mxu0
        %v2306 = vadd.f32 %v2147, %v2305
        %v2307 = vpop.f32.mrb[0].mxu0
        %2308 = vmatprep.mubr.f32.mxu0 0.0
        %2309 = vmatmul.mubr.f32.gmra.mrb[0].mxu0 %v2111
        %v2310 = vpop.f32.mrb[0].mxu0
        %v2311 = vadd.f32 %v2147, %v2310
        %v2312 = vpop.f32.mrb[0].mxu0
        %2313 = vmatprep.mubr.f32.mxu0 0.0
        %2314 = vmatmul.mubr.f32.gmra.mrb[0].mxu0 %v2112
        %v2315 = vpop.f32.mrb[0].mxu0
        %v2316 = vadd.f32 %v2147, %v2315
        %v2317 = vpop.f32.mrb[0].mxu0
        %2318 = vmatprep.mubr.f32.mxu0 0.0
        %2319 = vmatmul.mubr.f32.gmra.mrb[0].mxu0 %v2113
        %v2320 = vpop.f32.mrb[0].mxu0
        %v2321 = vadd.f32 %v2147, %v2320
        %v2322 = vpop.f32.mrb[0].mxu0
        %2323 = vmatprep.mubr.f32.mxu0 0.0
        %2324 = vmatmul.mubr.f32.gmra.mrb[0].mxu0 %v2114
        %v2325 = vpop.f32.mrb[0].mxu0
        %v2326 = vadd.f32 %v2147, %v2325
        %v2327 = vpop.f32.mrb[0].mxu0
        %2328 = vmatprep.mubr.f32.mxu0 0.0
        %2329 = vmatmul.mubr.f32.gmra.mrb[0].mxu0 %v2115
        %v2330 = vpop.f32.mrb[0].mxu0
        %v2331 = vadd.f32 %v2147, %v2330
        %v2332 = vpop.f32.mrb[0].mxu0
        %2333 = vmatprep.mubr.f32.mxu0 0.0
        %2334 = vmatmul.mubr.f32.gmra.mrb[0].mxu0 %v2116
        %v2335 = vpop.f32.mrb[0].mxu0
        %v2336 = vadd.f32 %v2147, %v2335
        %v2337 = vpop.f32.mrb[0].mxu0
        %2338 = vmatprep.mubr.f32.mxu0 0.0
        %2339 = vmatmul.mubr.f32.gmra.mrb[0].mxu0 %v2117
        %v2340 = vpop.f32.mrb[0].mxu0
        %v2341 = vadd.f32 %v2147, %v2340
        %v2342 = vpop.f32.mrb[0].mxu0
        %2343 = vmatprep.mubr.f32.mxu0 0.0
        %2344 = vmatmul.mubr.f32.gmra.mrb[0].mxu0 %v2118
        %v2345 = vpop.f32.mrb[0].mxu0
        %v2346 = vadd.f32 %v2147, %v2345
        %v2347 = vpop.f32.mrb[0].mxu0
        %2348 = vmatprep.mubr.f32.mxu0 0.0
        %2349 = vmatmul.mubr.f32.gmra.mrb[0].mxu0 %v2119
        %v2350 = vpop.f32.mrb[0].mxu0
        %v2351 = vadd.f32 %v2147, %v2350
        %v2352 = vpop.f32.mrb[0].mxu0
        %2353 = vmatprep.mubr.f32.mxu0 0.0
        %2354 = vmatmul.mubr.f32.gmra.mrb[0].mxu0 %v2120
        %v2355 = vpop.f32.mrb[0].mxu0
        %v2356 = vadd.f32 %v2147, %v2355
        %v2357 = vpop.f32.mrb[0].mxu0
        %2358 = vmatprep.mubr.f32.mxu0 0.0
        %2359 = vmatmul.mubr.f32.gmra.mrb[0].mxu0 %v2121
        %v2360 = vpop.f32.mrb[0].mxu0
        %v2361 = vadd.f32 %v2147, %v2360
        %v2362 = vpop.f32.mrb[0].mxu0
        %2363 = vmatprep.mubr.f32.mxu0 0.0
        %2364 = vmatmul.mubr.f32.gmra.mrb[0].mxu0 %v2122
        %v2365 = vpop.f32.mrb[0].mxu0
        %v2366 = vadd.f32 %v2147, %v2365
        %v2367 = vpop.f32.mrb[0].mxu0
        %2368 = vmatprep.mubr.f32.mxu0 0.0
        %2369 = vmatmul.mubr.f32.gmra.mrb[0].mxu0 %v2123
        %v2370 = vpop.f32.mrb[0].mxu0
        %v2371 = vadd.f32 %v2147, %v2370
        %v2372 = vpop.f32.mrb[0].mxu0
        %2373 = vdwg.mxu0
        %2374 = vst [vmem:[#allocation4 + $0x8] sm:$0xff] %v2216
        %2375 = vst [vmem:[#allocation4 + $0x28] sm:$0xff] %v2221
        %2376 = vst [vmem:[#allocation4 + $0x48] sm:$0xff] %v2226
        %2377 = vst [vmem:[#allocation4 + $0x68] sm:$0xff] %v2231
        %2378 = vst [vmem:[#allocation4 + $0x88] sm:$0xff] %v2236
        %2379 = vst [vmem:[#allocation4 + $0xa8] sm:$0xff] %v2241
        %2380 = vst [vmem:[#allocation4 + $0xc8] sm:$0xff] %v2246
        %2381 = vst [vmem:[#allocation4 + $0xe8] sm:$0xff] %v2251
        %2382 = vst [vmem:[#allocation4 + $0x108] sm:$0xff] %v2256
        %2383 = vst [vmem:[#allocation4 + $0x128] sm:$0xff] %v2261
        %2384 = vst [vmem:[#allocation4 + $0x148] sm:$0xff] %v2266
        %2385 = vst [vmem:[#allocation4 + $0x168] sm:$0xff] %v2271
        %2386 = vst [vmem:[#allocation4 + $0x188] sm:$0xff] %v2276
        %2387 = vst [vmem:[#allocation4 + $0x1a8] sm:$0xff] %v2281
        %2388 = vst [vmem:[#allocation4 + $0x1c8] sm:$0xff] %v2286
        %2389 = vst [vmem:[#allocation4 + $0x1e8] sm:$0xff] %v2291
        %2390 = vst [vmem:[#allocation4 + $0x208] sm:$0xff] %v2296
        %2391 = vst [vmem:[#allocation4 + $0x228] sm:$0xff] %v2301
        %2392 = vst [vmem:[#allocation4 + $0x248] sm:$0xff] %v2306
        %2393 = vst [vmem:[#allocation4 + $0x268] sm:$0xff] %v2311
        %2394 = vst [vmem:[#allocation4 + $0x288] sm:$0xff] %v2316
        %2395 = vst [vmem:[#allocation4 + $0x2a8] sm:$0xff] %v2321
        %2396 = vst [vmem:[#allocation4 + $0x2c8] sm:$0xff] %v2326
        %2397 = vst [vmem:[#allocation4 + $0x2e8] sm:$0xff] %v2331
        %2398 = vst [vmem:[#allocation4 + $0x308] sm:$0xff] %v2336
        %2399 = vst [vmem:[#allocation4 + $0x328] sm:$0xff] %v2341
        %2400 = vst [vmem:[#allocation4 + $0x348] sm:$0xff] %v2346
        %2401 = vst [vmem:[#allocation4 + $0x368] sm:$0xff] %v2351
        %2402 = vst [vmem:[#allocation4 + $0x388] sm:$0xff] %v2356
        %2403 = vst [vmem:[#allocation4 + $0x3a8] sm:$0xff] %v2361
        %2404 = vst [vmem:[#allocation4 + $0x3c8] sm:$0xff] %v2366
        %2405 = vst [vmem:[#allocation4 + $0x3e8] sm:$0xff] %v2371
        %v2406 = vld [vmem:[#allocation3 + $0x10] sm:$0xff]
        %v2407 = vld [vmem:[#allocation3 + $0x30] sm:$0xff]
        %v2408 = vld [vmem:[#allocation3 + $0x50] sm:$0xff]
        %v2409 = vld [vmem:[#allocation3 + $0x70] sm:$0xff]
        %v2410 = vld [vmem:[#allocation3 + $0x90] sm:$0xff]
        %v2411 = vld [vmem:[#allocation3 + $0xb0] sm:$0xff]
        %v2412 = vld [vmem:[#allocation3 + $0xd0] sm:$0xff]
        %v2413 = vld [vmem:[#allocation3 + $0xf0] sm:$0xff]
        %v2414 = vld [vmem:[#allocation3 + $0x110] sm:$0xff]
        %v2415 = vld [vmem:[#allocation3 + $0x130] sm:$0xff]
        %v2416 = vld [vmem:[#allocation3 + $0x150] sm:$0xff]
        %v2417 = vld [vmem:[#allocation3 + $0x170] sm:$0xff]
        %v2418 = vld [vmem:[#allocation3 + $0x190] sm:$0xff]
        %v2419 = vld [vmem:[#allocation3 + $0x1b0] sm:$0xff]
        %v2420 = vld [vmem:[#allocation3 + $0x1d0] sm:$0xff]
        %v2421 = vld [vmem:[#allocation3 + $0x1f0] sm:$0xff]
        %v2422 = vld [vmem:[#allocation3 + $0x210] sm:$0xff]
        %v2423 = vld [vmem:[#allocation3 + $0x230] sm:$0xff]
        %v2424 = vld [vmem:[#allocation3 + $0x250] sm:$0xff]
        %v2425 = vld [vmem:[#allocation3 + $0x270] sm:$0xff]
        %v2426 = vld [vmem:[#allocation3 + $0x290] sm:$0xff]
        %v2427 = vld [vmem:[#allocation3 + $0x2b0] sm:$0xff]
        %v2428 = vld [vmem:[#allocation3 + $0x2d0] sm:$0xff]
        %v2429 = vld [vmem:[#allocation3 + $0x2f0] sm:$0xff]
        %v2430 = vld [vmem:[#allocation3 + $0x310] sm:$0xff]
        %v2431 = vld [vmem:[#allocation3 + $0x330] sm:$0xff]
        %v2432 = vld [vmem:[#allocation3 + $0x350] sm:$0xff]
        %v2433 = vld [vmem:[#allocation3 + $0x370] sm:$0xff]
        %v2434 = vld [vmem:[#allocation3 + $0x390] sm:$0xff]
        %v2435 = vld [vmem:[#allocation3 + $0x3b0] sm:$0xff]
        %v2436 = vld [vmem:[#allocation3 + $0x3d0] sm:$0xff]
        %v2437 = vld [vmem:[#allocation3 + $0x3f0] sm:$0xff]
        %v2438 = vld [vmem:[%s5 + $0x2] sm:$0x1]
        %v2440 = vlaneseq
        %v2441 = vshrl.u32 %v2440, 7
        %v2442 = vsub.s32 0, %v2441
        %v2443 = vrot.slane %v2438, %v2442
        %v2445 = vadd.f32 %v2406, %v2443
        %v2446 = vadd.f32 %v2407, %v2443
        %v2447 = vadd.f32 %v2408, %v2443
        %v2448 = vadd.f32 %v2409, %v2443
        %v2449 = vadd.f32 %v2410, %v2443
        %v2450 = vadd.f32 %v2411, %v2443
        %v2451 = vadd.f32 %v2412, %v2443
        %v2452 = vadd.f32 %v2413, %v2443
        %v2453 = vadd.f32 %v2414, %v2443
        %v2454 = vadd.f32 %v2415, %v2443
        %v2455 = vadd.f32 %v2416, %v2443
        %v2456 = vadd.f32 %v2417, %v2443
        %v2457 = vadd.f32 %v2418, %v2443
        %v2458 = vadd.f32 %v2419, %v2443
        %v2459 = vadd.f32 %v2420, %v2443
        %v2460 = vadd.f32 %v2421, %v2443
        %v2461 = vadd.f32 %v2422, %v2443
        %v2462 = vadd.f32 %v2423, %v2443
        %v2463 = vadd.f32 %v2424, %v2443
        %v2464 = vadd.f32 %v2425, %v2443
        %v2465 = vadd.f32 %v2426, %v2443
        %v2466 = vadd.f32 %v2427, %v2443
        %v2467 = vadd.f32 %v2428, %v2443
        %v2468 = vadd.f32 %v2429, %v2443
        %v2469 = vadd.f32 %v2430, %v2443
        %v2470 = vadd.f32 %v2431, %v2443
        %v2471 = vadd.f32 %v2432, %v2443
        %v2472 = vadd.f32 %v2433, %v2443
        %v2473 = vadd.f32 %v2434, %v2443
        %v2474 = vadd.f32 %v2435, %v2443
        %v2475 = vadd.f32 %v2436, %v2443
        %v2476 = vadd.f32 %v2437, %v2443
        %v2477 = vsub.f32 0.0, %v2445
        %v2478 = vsub.f32 0.0, %v2446
        %v2479 = vsub.f32 0.0, %v2447
        %v2480 = vsub.f32 0.0, %v2448
        %v2481 = vsub.f32 0.0, %v2449
        %v2482 = vsub.f32 0.0, %v2450
        %v2483 = vsub.f32 0.0, %v2451
        %v2484 = vsub.f32 0.0, %v2452
        %v2485 = vsub.f32 0.0, %v2453
        %v2486 = vsub.f32 0.0, %v2454
        %v2487 = vsub.f32 0.0, %v2455
        %v2488 = vsub.f32 0.0, %v2456
        %v2489 = vsub.f32 0.0, %v2457
        %v2490 = vsub.f32 0.0, %v2458
        %v2491 = vsub.f32 0.0, %v2459
        %v2492 = vsub.f32 0.0, %v2460
        %v2493 = vsub.f32 0.0, %v2461
        %v2494 = vsub.f32 0.0, %v2462
        %v2495 = vsub.f32 0.0, %v2463
        %v2496 = vsub.f32 0.0, %v2464
        %v2497 = vsub.f32 0.0, %v2465
        %v2498 = vsub.f32 0.0, %v2466
        %v2499 = vsub.f32 0.0, %v2467
        %v2500 = vsub.f32 0.0, %v2468
        %v2501 = vsub.f32 0.0, %v2469
        %v2502 = vsub.f32 0.0, %v2470
        %v2503 = vsub.f32 0.0, %v2471
        %v2504 = vsub.f32 0.0, %v2472
        %v2505 = vsub.f32 0.0, %v2473
        %v2506 = vsub.f32 0.0, %v2474
        %v2507 = vsub.f32 0.0, %v2475
        %v2508 = vsub.f32 0.0, %v2476
        %v2509 = vmul.f32 %v2477, 1.442695
        %v2510 = vpow.pop %v2509
        %v2511 = vmul.f32 %v2478, 1.442695
        %v2512 = vpow.pop %v2511
        %v2513 = vmul.f32 %v2479, 1.442695
        %v2514 = vpow.pop %v2513
        %v2515 = vmul.f32 %v2480, 1.442695
        %v2516 = vpow.pop %v2515
        %v2517 = vmul.f32 %v2481, 1.442695
        %v2518 = vpow.pop %v2517
        %v2519 = vmul.f32 %v2482, 1.442695
        %v2520 = vpow.pop %v2519
        %v2521 = vmul.f32 %v2483, 1.442695
        %v2522 = vpow.pop %v2521
        %v2523 = vmul.f32 %v2484, 1.442695
        %v2524 = vpow.pop %v2523
        %v2525 = vmul.f32 %v2485, 1.442695
        %v2526 = vpow.pop %v2525
        %v2527 = vmul.f32 %v2486, 1.442695
        %v2528 = vpow.pop %v2527
        %v2529 = vmul.f32 %v2487, 1.442695
        %v2530 = vpow.pop %v2529
        %v2531 = vmul.f32 %v2488, 1.442695
        %v2532 = vpow.pop %v2531
        %v2533 = vmul.f32 %v2489, 1.442695
        %v2534 = vpow.pop %v2533
        %v2535 = vmul.f32 %v2490, 1.442695
        %v2536 = vpow.pop %v2535
        %v2537 = vmul.f32 %v2491, 1.442695
        %v2538 = vpow.pop %v2537
        %v2539 = vmul.f32 %v2492, 1.442695
        %v2540 = vpow.pop %v2539
        %v2541 = vmul.f32 %v2493, 1.442695
        %v2542 = vpow.pop %v2541
        %v2543 = vmul.f32 %v2494, 1.442695
        %v2544 = vpow.pop %v2543
        %v2545 = vmul.f32 %v2495, 1.442695
        %v2546 = vpow.pop %v2545
        %v2547 = vmul.f32 %v2496, 1.442695
        %v2548 = vpow.pop %v2547
        %v2549 = vmul.f32 %v2497, 1.442695
        %v2550 = vpow.pop %v2549
        %v2551 = vmul.f32 %v2498, 1.442695
        %v2552 = vpow.pop %v2551
        %v2553 = vmul.f32 %v2499, 1.442695
        %v2554 = vpow.pop %v2553
        %v2555 = vmul.f32 %v2500, 1.442695
        %v2556 = vpow.pop %v2555
        %v2557 = vmul.f32 %v2501, 1.442695
        %v2558 = vpow.pop %v2557
        %v2559 = vmul.f32 %v2502, 1.442695
        %v2560 = vpow.pop %v2559
        %v2561 = vmul.f32 %v2503, 1.442695
        %v2562 = vpow.pop %v2561
        %v2563 = vmul.f32 %v2504, 1.442695
        %v2564 = vpow.pop %v2563
        %v2565 = vmul.f32 %v2505, 1.442695
        %v2566 = vpow.pop %v2565
        %v2567 = vmul.f32 %v2506, 1.442695
        %v2568 = vpow.pop %v2567
        %v2569 = vmul.f32 %v2507, 1.442695
        %v2570 = vpow.pop %v2569
        %v2571 = vmul.f32 %v2508, 1.442695
        %v2572 = vpow.pop %v2571
        %v2573 = vadd.f32 %v2510, 1.0
        %v2574 = vadd.f32 %v2512, 1.0
        %v2575 = vadd.f32 %v2514, 1.0
        %v2576 = vadd.f32 %v2516, 1.0
        %v2577 = vadd.f32 %v2518, 1.0
        %v2578 = vadd.f32 %v2520, 1.0
        %v2579 = vadd.f32 %v2522, 1.0
        %v2580 = vadd.f32 %v2524, 1.0
        %v2581 = vadd.f32 %v2526, 1.0
        %v2582 = vadd.f32 %v2528, 1.0
        %v2583 = vadd.f32 %v2530, 1.0
        %v2584 = vadd.f32 %v2532, 1.0
        %v2585 = vadd.f32 %v2534, 1.0
        %v2586 = vadd.f32 %v2536, 1.0
        %v2587 = vadd.f32 %v2538, 1.0
        %v2588 = vadd.f32 %v2540, 1.0
        %v2589 = vadd.f32 %v2542, 1.0
        %v2590 = vadd.f32 %v2544, 1.0
        %v2591 = vadd.f32 %v2546, 1.0
        %v2592 = vadd.f32 %v2548, 1.0
        %v2593 = vadd.f32 %v2550, 1.0
        %v2594 = vadd.f32 %v2552, 1.0
        %v2595 = vadd.f32 %v2554, 1.0
        %v2596 = vadd.f32 %v2556, 1.0
        %v2597 = vadd.f32 %v2558, 1.0
        %v2598 = vadd.f32 %v2560, 1.0
        %v2599 = vadd.f32 %v2562, 1.0
        %v2600 = vadd.f32 %v2564, 1.0
        %v2601 = vadd.f32 %v2566, 1.0
        %v2602 = vadd.f32 %v2568, 1.0
        %v2603 = vadd.f32 %v2570, 1.0
        %v2604 = vadd.f32 %v2572, 1.0
        %v2605 = vrcp.pop %v2573
        %v2606 = vmul.f32 1.0, %v2605
        %v2607 = vrcp.pop %v2574
        %v2608 = vmul.f32 1.0, %v2607
        %v2609 = vrcp.pop %v2575
        %v2610 = vmul.f32 1.0, %v2609
        %v2611 = vrcp.pop %v2576
        %v2612 = vmul.f32 1.0, %v2611
        %v2613 = vrcp.pop %v2577
        %v2614 = vmul.f32 1.0, %v2613
        %v2615 = vrcp.pop %v2578
        %v2616 = vmul.f32 1.0, %v2615
        %v2617 = vrcp.pop %v2579
        %v2618 = vmul.f32 1.0, %v2617
        %v2619 = vrcp.pop %v2580
        %v2620 = vmul.f32 1.0, %v2619
        %v2621 = vrcp.pop %v2581
        %v2622 = vmul.f32 1.0, %v2621
        %v2623 = vrcp.pop %v2582
        %v2624 = vmul.f32 1.0, %v2623
        %v2625 = vrcp.pop %v2583
        %v2626 = vmul.f32 1.0, %v2625
        %v2627 = vrcp.pop %v2584
        %v2628 = vmul.f32 1.0, %v2627
        %v2629 = vrcp.pop %v2585
        %v2630 = vmul.f32 1.0, %v2629
        %v2631 = vrcp.pop %v2586
        %v2632 = vmul.f32 1.0, %v2631
        %v2633 = vrcp.pop %v2587
        %v2634 = vmul.f32 1.0, %v2633
        %v2635 = vrcp.pop %v2588
        %v2636 = vmul.f32 1.0, %v2635
        %v2637 = vrcp.pop %v2589
        %v2638 = vmul.f32 1.0, %v2637
        %v2639 = vrcp.pop %v2590
        %v2640 = vmul.f32 1.0, %v2639
        %v2641 = vrcp.pop %v2591
        %v2642 = vmul.f32 1.0, %v2641
        %v2643 = vrcp.pop %v2592
        %v2644 = vmul.f32 1.0, %v2643
        %v2645 = vrcp.pop %v2593
        %v2646 = vmul.f32 1.0, %v2645
        %v2647 = vrcp.pop %v2594
        %v2648 = vmul.f32 1.0, %v2647
        %v2649 = vrcp.pop %v2595
        %v2650 = vmul.f32 1.0, %v2649
        %v2651 = vrcp.pop %v2596
        %v2652 = vmul.f32 1.0, %v2651
        %v2653 = vrcp.pop %v2597
        %v2654 = vmul.f32 1.0, %v2653
        %v2655 = vrcp.pop %v2598
        %v2656 = vmul.f32 1.0, %v2655
        %v2657 = vrcp.pop %v2599
        %v2658 = vmul.f32 1.0, %v2657
        %v2659 = vrcp.pop %v2600
        %v2660 = vmul.f32 1.0, %v2659
        %v2661 = vrcp.pop %v2601
        %v2662 = vmul.f32 1.0, %v2661
        %v2663 = vrcp.pop %v2602
        %v2664 = vmul.f32 1.0, %v2663
        %v2665 = vrcp.pop %v2603
        %v2666 = vmul.f32 1.0, %v2665
        %v2667 = vrcp.pop %v2604
        %v2668 = vmul.f32 1.0, %v2667
        %v2669 = vmul.f32 %v2445, %v2606
        %v2670 = vmul.f32 %v2446, %v2608
        %v2671 = vmul.f32 %v2447, %v2610
        %v2672 = vmul.f32 %v2448, %v2612
        %v2673 = vmul.f32 %v2449, %v2614
        %v2674 = vmul.f32 %v2450, %v2616
        %v2675 = vmul.f32 %v2451, %v2618
        %v2676 = vmul.f32 %v2452, %v2620
        %v2677 = vmul.f32 %v2453, %v2622
        %v2678 = vmul.f32 %v2454, %v2624
        %v2679 = vmul.f32 %v2455, %v2626
        %v2680 = vmul.f32 %v2456, %v2628
        %v2681 = vmul.f32 %v2457, %v2630
        %v2682 = vmul.f32 %v2458, %v2632
        %v2683 = vmul.f32 %v2459, %v2634
        %v2684 = vmul.f32 %v2460, %v2636
        %v2685 = vmul.f32 %v2461, %v2638
        %v2686 = vmul.f32 %v2462, %v2640
        %v2687 = vmul.f32 %v2463, %v2642
        %v2688 = vmul.f32 %v2464, %v2644
        %v2689 = vmul.f32 %v2465, %v2646
        %v2690 = vmul.f32 %v2466, %v2648
        %v2691 = vmul.f32 %v2467, %v2650
        %v2692 = vmul.f32 %v2468, %v2652
        %v2693 = vmul.f32 %v2469, %v2654
        %v2694 = vmul.f32 %v2470, %v2656
        %v2695 = vmul.f32 %v2471, %v2658
        %v2696 = vmul.f32 %v2472, %v2660
        %v2697 = vmul.f32 %v2473, %v2662
        %v2698 = vmul.f32 %v2474, %v2664
        %v2699 = vmul.f32 %v2475, %v2666
        %v2700 = vmul.f32 %v2476, %v2668
        %s2701 = scalar_lea.vmem %s6, 256
        %v2702 = vld [vmem:[%s2701] sm:$0xff]
        %v2703 = vld [vmem:[%s2701 + $0x8] sm:$0xff]
        %v2704 = vld [vmem:[%s2701 + $0x10] sm:$0xff]
        %v2705 = vld [vmem:[%s2701 + $0x18] sm:$0xff]
        %v2706 = vld [vmem:[%s2701 + $0x20] sm:$0xff]
        %v2707 = vld [vmem:[%s2701 + $0x28] sm:$0xff]
        %v2708 = vld [vmem:[%s2701 + $0x30] sm:$0xff]
        %v2709 = vld [vmem:[%s2701 + $0x38] sm:$0xff]
        %v2710 = vld [vmem:[%s2701 + $0x40] sm:$0xff]
        %v2711 = vld [vmem:[%s2701 + $0x48] sm:$0xff]
        %v2712 = vld [vmem:[%s2701 + $0x50] sm:$0xff]
        %v2713 = vld [vmem:[%s2701 + $0x58] sm:$0xff]
        %v2714 = vld [vmem:[%s2701 + $0x60] sm:$0xff]
        %v2715 = vld [vmem:[%s2701 + $0x68] sm:$0xff]
        %v2716 = vld [vmem:[%s2701 + $0x70] sm:$0xff]
        %v2717 = vld [vmem:[%s2701 + $0x78] sm:$0xff]
        %s2718 = scalar_lea.vmem %s7, 2
        %v2719 = vld [vmem:[%s2718] sm:$0x1]
        %v2721 = vlaneseq
        %v2722 = vshrl.u32 %v2721, 7
        %v2723 = vsub.s32 0, %v2722
        %v2724 = vrot.slane %v2719, %v2723
        %2726 = vmatprep.subr.mxu0 0.0
        %2727 = vmatpush1.msra.mxu0 %v2702
        %2728 = vmatprep.subr.mxu0 0.0
        %2729 = vmatpush1.msra.mxu0 %v2703
        %2730 = vmatprep.subr.mxu0 0.0
        %2731 = vmatpush1.msra.mxu0 %v2704
        %2732 = vmatprep.subr.mxu0 0.0
        %2733 = vmatpush1.msra.mxu0 %v2705
        %2734 = vmatprep.subr.mxu0 0.0
        %2735 = vmatpush1.msra.mxu0 %v2706
        %2736 = vmatprep.subr.mxu0 0.0
        %2737 = vmatpush1.msra.mxu0 %v2707
        %2738 = vmatprep.subr.mxu0 0.0
        %2739 = vmatpush1.msra.mxu0 %v2708
        %2740 = vmatprep.subr.mxu0 0.0
        %2741 = vmatpush1.msra.mxu0 %v2709
        %2742 = vmatprep.subr.mxu0 0.0
        %2743 = vmatpush1.msra.mxu0 %v2710
        %2744 = vmatprep.subr.mxu0 0.0
        %2745 = vmatpush1.msra.mxu0 %v2711
        %2746 = vmatprep.subr.mxu0 0.0
        %2747 = vmatpush1.msra.mxu0 %v2712
        %2748 = vmatprep.subr.mxu0 0.0
        %2749 = vmatpush1.msra.mxu0 %v2713
        %2750 = vmatprep.subr.mxu0 0.0
        %2751 = vmatpush1.msra.mxu0 %v2714
        %2752 = vmatprep.subr.mxu0 0.0
        %2753 = vmatpush1.msra.mxu0 %v2715
        %2754 = vmatprep.subr.mxu0 0.0
        %2755 = vmatpush1.msra.mxu0 %v2716
        %2756 = vmatprep.subr.mxu0 0.0
        %2757 = vmatpush1.msra.mxu0 %v2717
        %2758 = vmatprep.subr.mxu0 0.0
        %2759 = vmatpush1.msra.mxu0 0.0
        %2760 = vmatprep.subr.mxu0 0.0
        %2761 = vmatpush1.msra.mxu0 0.0
        %2762 = vmatprep.subr.mxu0 0.0
        %2763 = vmatpush1.msra.mxu0 0.0
        %2764 = vmatprep.subr.mxu0 0.0
        %2765 = vmatpush1.msra.mxu0 0.0
        %2766 = vmatprep.subr.mxu0 0.0
        %2767 = vmatpush1.msra.mxu0 0.0
        %2768 = vmatprep.subr.mxu0 0.0
        %2769 = vmatpush1.msra.mxu0 0.0
        %2770 = vmatprep.subr.mxu0 0.0
        %2771 = vmatpush1.msra.mxu0 0.0
        %2772 = vmatprep.subr.mxu0 0.0
        %2773 = vmatpush1.msra.mxu0 0.0
        %2774 = vmatprep.subr.mxu0 0.0
        %2775 = vmatpush1.msra.mxu0 0.0
        %2776 = vmatprep.subr.mxu0 0.0
        %2777 = vmatpush1.msra.mxu0 0.0
        %2778 = vmatprep.subr.mxu0 0.0
        %2779 = vmatpush1.msra.mxu0 0.0
        %2780 = vmatprep.subr.mxu0 0.0
        %2781 = vmatpush1.msra.mxu0 0.0
        %2782 = vmatprep.subr.mxu0 0.0
        %2783 = vmatpush1.msra.mxu0 0.0
        %2784 = vmatprep.subr.mxu0 0.0
        %2785 = vmatpush1.msra.mxu0 0.0
        %2786 = vmatprep.subr.mxu0 0.0
        %2787 = vmatpush1.msra.mxu0 0.0
        %2788 = vmatprep.subr.mxu0 0.0
        %2789 = vmatpush1.msra.mxu0 0.0
        %2790 = vmatprep.mubr.f32.mxu0 0.0
        %2791 = vmatmul.mubr.f32.gmra.mrb[0].mxu0 %v2669
        %v2792 = vpop.f32.mrb[0].mxu0
        %v2793 = vadd.f32 %v2724, %v2792
        %v2794 = vpop.f32.mrb[0].mxu0
        %2795 = vmatprep.mubr.f32.mxu0 0.0
        %2796 = vmatmul.mubr.f32.gmra.mrb[0].mxu0 %v2670
        %v2797 = vpop.f32.mrb[0].mxu0
        %v2798 = vadd.f32 %v2724, %v2797
        %v2799 = vpop.f32.mrb[0].mxu0
        %2800 = vmatprep.mubr.f32.mxu0 0.0
        %2801 = vmatmul.mubr.f32.gmra.mrb[0].mxu0 %v2671
        %v2802 = vpop.f32.mrb[0].mxu0
        %v2803 = vadd.f32 %v2724, %v2802
        %v2804 = vpop.f32.mrb[0].mxu0
        %2805 = vmatprep.mubr.f32.mxu0 0.0
        %2806 = vmatmul.mubr.f32.gmra.mrb[0].mxu0 %v2672
        %v2807 = vpop.f32.mrb[0].mxu0
        %v2808 = vadd.f32 %v2724, %v2807
        %v2809 = vpop.f32.mrb[0].mxu0
        %2810 = vmatprep.mubr.f32.mxu0 0.0
        %2811 = vmatmul.mubr.f32.gmra.mrb[0].mxu0 %v2673
        %v2812 = vpop.f32.mrb[0].mxu0
        %v2813 = vadd.f32 %v2724, %v2812
        %v2814 = vpop.f32.mrb[0].mxu0
        %2815 = vmatprep.mubr.f32.mxu0 0.0
        %2816 = vmatmul.mubr.f32.gmra.mrb[0].mxu0 %v2674
        %v2817 = vpop.f32.mrb[0].mxu0
        %v2818 = vadd.f32 %v2724, %v2817
        %v2819 = vpop.f32.mrb[0].mxu0
        %2820 = vmatprep.mubr.f32.mxu0 0.0
        %2821 = vmatmul.mubr.f32.gmra.mrb[0].mxu0 %v2675
        %v2822 = vpop.f32.mrb[0].mxu0
        %v2823 = vadd.f32 %v2724, %v2822
        %v2824 = vpop.f32.mrb[0].mxu0
        %2825 = vmatprep.mubr.f32.mxu0 0.0
        %2826 = vmatmul.mubr.f32.gmra.mrb[0].mxu0 %v2676
        %v2827 = vpop.f32.mrb[0].mxu0
        %v2828 = vadd.f32 %v2724, %v2827
        %v2829 = vpop.f32.mrb[0].mxu0
        %2830 = vmatprep.mubr.f32.mxu0 0.0
        %2831 = vmatmul.mubr.f32.gmra.mrb[0].mxu0 %v2677
        %v2832 = vpop.f32.mrb[0].mxu0
        %v2833 = vadd.f32 %v2724, %v2832
        %v2834 = vpop.f32.mrb[0].mxu0
        %2835 = vmatprep.mubr.f32.mxu0 0.0
        %2836 = vmatmul.mubr.f32.gmra.mrb[0].mxu0 %v2678
        %v2837 = vpop.f32.mrb[0].mxu0
        %v2838 = vadd.f32 %v2724, %v2837
        %v2839 = vpop.f32.mrb[0].mxu0
        %2840 = vmatprep.mubr.f32.mxu0 0.0
        %2841 = vmatmul.mubr.f32.gmra.mrb[0].mxu0 %v2679
        %v2842 = vpop.f32.mrb[0].mxu0
        %v2843 = vadd.f32 %v2724, %v2842
        %v2844 = vpop.f32.mrb[0].mxu0
        %2845 = vmatprep.mubr.f32.mxu0 0.0
        %2846 = vmatmul.mubr.f32.gmra.mrb[0].mxu0 %v2680
        %v2847 = vpop.f32.mrb[0].mxu0
        %v2848 = vadd.f32 %v2724, %v2847
        %v2849 = vpop.f32.mrb[0].mxu0
        %2850 = vmatprep.mubr.f32.mxu0 0.0
        %2851 = vmatmul.mubr.f32.gmra.mrb[0].mxu0 %v2681
        %v2852 = vpop.f32.mrb[0].mxu0
        %v2853 = vadd.f32 %v2724, %v2852
        %v2854 = vpop.f32.mrb[0].mxu0
        %2855 = vmatprep.mubr.f32.mxu0 0.0
        %2856 = vmatmul.mubr.f32.gmra.mrb[0].mxu0 %v2682
        %v2857 = vpop.f32.mrb[0].mxu0
        %v2858 = vadd.f32 %v2724, %v2857
        %v2859 = vpop.f32.mrb[0].mxu0
        %2860 = vmatprep.mubr.f32.mxu0 0.0
        %2861 = vmatmul.mubr.f32.gmra.mrb[0].mxu0 %v2683
        %v2862 = vpop.f32.mrb[0].mxu0
        %v2863 = vadd.f32 %v2724, %v2862
        %v2864 = vpop.f32.mrb[0].mxu0
        %2865 = vmatprep.mubr.f32.mxu0 0.0
        %2866 = vmatmul.mubr.f32.gmra.mrb[0].mxu0 %v2684
        %v2867 = vpop.f32.mrb[0].mxu0
        %v2868 = vadd.f32 %v2724, %v2867
        %v2869 = vpop.f32.mrb[0].mxu0
        %2870 = vmatprep.mubr.f32.mxu0 0.0
        %2871 = vmatmul.mubr.f32.gmra.mrb[0].mxu0 %v2685
        %v2872 = vpop.f32.mrb[0].mxu0
        %v2873 = vadd.f32 %v2724, %v2872
        %v2874 = vpop.f32.mrb[0].mxu0
        %2875 = vmatprep.mubr.f32.mxu0 0.0
        %2876 = vmatmul.mubr.f32.gmra.mrb[0].mxu0 %v2686
        %v2877 = vpop.f32.mrb[0].mxu0
        %v2878 = vadd.f32 %v2724, %v2877
        %v2879 = vpop.f32.mrb[0].mxu0
        %2880 = vmatprep.mubr.f32.mxu0 0.0
        %2881 = vmatmul.mubr.f32.gmra.mrb[0].mxu0 %v2687
        %v2882 = vpop.f32.mrb[0].mxu0
        %v2883 = vadd.f32 %v2724, %v2882
        %v2884 = vpop.f32.mrb[0].mxu0
        %2885 = vmatprep.mubr.f32.mxu0 0.0
        %2886 = vmatmul.mubr.f32.gmra.mrb[0].mxu0 %v2688
        %v2887 = vpop.f32.mrb[0].mxu0
        %v2888 = vadd.f32 %v2724, %v2887
        %v2889 = vpop.f32.mrb[0].mxu0
        %2890 = vmatprep.mubr.f32.mxu0 0.0
        %2891 = vmatmul.mubr.f32.gmra.mrb[0].mxu0 %v2689
        %v2892 = vpop.f32.mrb[0].mxu0
        %v2893 = vadd.f32 %v2724, %v2892
        %v2894 = vpop.f32.mrb[0].mxu0
        %2895 = vmatprep.mubr.f32.mxu0 0.0
        %2896 = vmatmul.mubr.f32.gmra.mrb[0].mxu0 %v2690
        %v2897 = vpop.f32.mrb[0].mxu0
        %v2898 = vadd.f32 %v2724, %v2897
        %v2899 = vpop.f32.mrb[0].mxu0
        %2900 = vmatprep.mubr.f32.mxu0 0.0
        %2901 = vmatmul.mubr.f32.gmra.mrb[0].mxu0 %v2691
        %v2902 = vpop.f32.mrb[0].mxu0
        %v2903 = vadd.f32 %v2724, %v2902
        %v2904 = vpop.f32.mrb[0].mxu0
        %2905 = vmatprep.mubr.f32.mxu0 0.0
        %2906 = vmatmul.mubr.f32.gmra.mrb[0].mxu0 %v2692
        %v2907 = vpop.f32.mrb[0].mxu0
        %v2908 = vadd.f32 %v2724, %v2907
        %v2909 = vpop.f32.mrb[0].mxu0
        %2910 = vmatprep.mubr.f32.mxu0 0.0
        %2911 = vmatmul.mubr.f32.gmra.mrb[0].mxu0 %v2693
        %v2912 = vpop.f32.mrb[0].mxu0
        %v2913 = vadd.f32 %v2724, %v2912
        %v2914 = vpop.f32.mrb[0].mxu0
        %2915 = vmatprep.mubr.f32.mxu0 0.0
        %2916 = vmatmul.mubr.f32.gmra.mrb[0].mxu0 %v2694
        %v2917 = vpop.f32.mrb[0].mxu0
        %v2918 = vadd.f32 %v2724, %v2917
        %v2919 = vpop.f32.mrb[0].mxu0
        %2920 = vmatprep.mubr.f32.mxu0 0.0
        %2921 = vmatmul.mubr.f32.gmra.mrb[0].mxu0 %v2695
        %v2922 = vpop.f32.mrb[0].mxu0
        %v2923 = vadd.f32 %v2724, %v2922
        %v2924 = vpop.f32.mrb[0].mxu0
        %2925 = vmatprep.mubr.f32.mxu0 0.0
        %2926 = vmatmul.mubr.f32.gmra.mrb[0].mxu0 %v2696
        %v2927 = vpop.f32.mrb[0].mxu0
        %v2928 = vadd.f32 %v2724, %v2927
        %v2929 = vpop.f32.mrb[0].mxu0
        %2930 = vmatprep.mubr.f32.mxu0 0.0
        %2931 = vmatmul.mubr.f32.gmra.mrb[0].mxu0 %v2697
        %v2932 = vpop.f32.mrb[0].mxu0
        %v2933 = vadd.f32 %v2724, %v2932
        %v2934 = vpop.f32.mrb[0].mxu0
        %2935 = vmatprep.mubr.f32.mxu0 0.0
        %2936 = vmatmul.mubr.f32.gmra.mrb[0].mxu0 %v2698
        %v2937 = vpop.f32.mrb[0].mxu0
        %v2938 = vadd.f32 %v2724, %v2937
        %v2939 = vpop.f32.mrb[0].mxu0
        %2940 = vmatprep.mubr.f32.mxu0 0.0
        %2941 = vmatmul.mubr.f32.gmra.mrb[0].mxu0 %v2699
        %v2942 = vpop.f32.mrb[0].mxu0
        %v2943 = vadd.f32 %v2724, %v2942
        %v2944 = vpop.f32.mrb[0].mxu0
        %2945 = vmatprep.mubr.f32.mxu0 0.0
        %2946 = vmatmul.mubr.f32.gmra.mrb[0].mxu0 %v2700
        %v2947 = vpop.f32.mrb[0].mxu0
        %v2948 = vadd.f32 %v2724, %v2947
        %v2949 = vpop.f32.mrb[0].mxu0
        %2950 = vdwg.mxu0
        %2951 = vst [vmem:[#allocation4 + $0x10] sm:$0xff] %v2793
        %2952 = vst [vmem:[#allocation4 + $0x30] sm:$0xff] %v2798
        %2953 = vst [vmem:[#allocation4 + $0x50] sm:$0xff] %v2803
        %2954 = vst [vmem:[#allocation4 + $0x70] sm:$0xff] %v2808
        %2955 = vst [vmem:[#allocation4 + $0x90] sm:$0xff] %v2813
        %2956 = vst [vmem:[#allocation4 + $0xb0] sm:$0xff] %v2818
        %2957 = vst [vmem:[#allocation4 + $0xd0] sm:$0xff] %v2823
        %2958 = vst [vmem:[#allocation4 + $0xf0] sm:$0xff] %v2828
        %2959 = vst [vmem:[#allocation4 + $0x110] sm:$0xff] %v2833
        %2960 = vst [vmem:[#allocation4 + $0x130] sm:$0xff] %v2838
        %2961 = vst [vmem:[#allocation4 + $0x150] sm:$0xff] %v2843
        %2962 = vst [vmem:[#allocation4 + $0x170] sm:$0xff] %v2848
        %2963 = vst [vmem:[#allocation4 + $0x190] sm:$0xff] %v2853
        %2964 = vst [vmem:[#allocation4 + $0x1b0] sm:$0xff] %v2858
        %2965 = vst [vmem:[#allocation4 + $0x1d0] sm:$0xff] %v2863
        %2966 = vst [vmem:[#allocation4 + $0x1f0] sm:$0xff] %v2868
        %2967 = vst [vmem:[#allocation4 + $0x210] sm:$0xff] %v2873
        %2968 = vst [vmem:[#allocation4 + $0x230] sm:$0xff] %v2878
        %2969 = vst [vmem:[#allocation4 + $0x250] sm:$0xff] %v2883
        %2970 = vst [vmem:[#allocation4 + $0x270] sm:$0xff] %v2888
        %2971 = vst [vmem:[#allocation4 + $0x290] sm:$0xff] %v2893
        %2972 = vst [vmem:[#allocation4 + $0x2b0] sm:$0xff] %v2898
        %2973 = vst [vmem:[#allocation4 + $0x2d0] sm:$0xff] %v2903
        %2974 = vst [vmem:[#allocation4 + $0x2f0] sm:$0xff] %v2908
        %2975 = vst [vmem:[#allocation4 + $0x310] sm:$0xff] %v2913
        %2976 = vst [vmem:[#allocation4 + $0x330] sm:$0xff] %v2918
        %2977 = vst [vmem:[#allocation4 + $0x350] sm:$0xff] %v2923
        %2978 = vst [vmem:[#allocation4 + $0x370] sm:$0xff] %v2928
        %2979 = vst [vmem:[#allocation4 + $0x390] sm:$0xff] %v2933
        %2980 = vst [vmem:[#allocation4 + $0x3b0] sm:$0xff] %v2938
        %2981 = vst [vmem:[#allocation4 + $0x3d0] sm:$0xff] %v2943
        %2982 = vst [vmem:[#allocation4 + $0x3f0] sm:$0xff] %v2948
        %v2983 = vld [vmem:[#allocation3 + $0x18] sm:$0xff]
        %v2984 = vld [vmem:[#allocation3 + $0x38] sm:$0xff]
        %v2985 = vld [vmem:[#allocation3 + $0x58] sm:$0xff]
        %v2986 = vld [vmem:[#allocation3 + $0x78] sm:$0xff]
        %v2987 = vld [vmem:[#allocation3 + $0x98] sm:$0xff]
        %v2988 = vld [vmem:[#allocation3 + $0xb8] sm:$0xff]
        %v2989 = vld [vmem:[#allocation3 + $0xd8] sm:$0xff]
        %v2990 = vld [vmem:[#allocation3 + $0xf8] sm:$0xff]
        %v2991 = vld [vmem:[#allocation3 + $0x118] sm:$0xff]
        %v2992 = vld [vmem:[#allocation3 + $0x138] sm:$0xff]
        %v2993 = vld [vmem:[#allocation3 + $0x158] sm:$0xff]
        %v2994 = vld [vmem:[#allocation3 + $0x178] sm:$0xff]
        %v2995 = vld [vmem:[#allocation3 + $0x198] sm:$0xff]
        %v2996 = vld [vmem:[#allocation3 + $0x1b8] sm:$0xff]
        %v2997 = vld [vmem:[#allocation3 + $0x1d8] sm:$0xff]
        %v2998 = vld [vmem:[#allocation3 + $0x1f8] sm:$0xff]
        %v2999 = vld [vmem:[#allocation3 + $0x218] sm:$0xff]
        %v3000 = vld [vmem:[#allocation3 + $0x238] sm:$0xff]
        %v3001 = vld [vmem:[#allocation3 + $0x258] sm:$0xff]
        %v3002 = vld [vmem:[#allocation3 + $0x278] sm:$0xff]
        %v3003 = vld [vmem:[#allocation3 + $0x298] sm:$0xff]
        %v3004 = vld [vmem:[#allocation3 + $0x2b8] sm:$0xff]
        %v3005 = vld [vmem:[#allocation3 + $0x2d8] sm:$0xff]
        %v3006 = vld [vmem:[#allocation3 + $0x2f8] sm:$0xff]
        %v3007 = vld [vmem:[#allocation3 + $0x318] sm:$0xff]
        %v3008 = vld [vmem:[#allocation3 + $0x338] sm:$0xff]
        %v3009 = vld [vmem:[#allocation3 + $0x358] sm:$0xff]
        %v3010 = vld [vmem:[#allocation3 + $0x378] sm:$0xff]
        %v3011 = vld [vmem:[#allocation3 + $0x398] sm:$0xff]
        %v3012 = vld [vmem:[#allocation3 + $0x3b8] sm:$0xff]
        %v3013 = vld [vmem:[#allocation3 + $0x3d8] sm:$0xff]
        %v3014 = vld [vmem:[#allocation3 + $0x3f8] sm:$0xff]
        %v3015 = vld [vmem:[%s5 + $0x3] sm:$0x1]
        %v3017 = vlaneseq
        %v3018 = vshrl.u32 %v3017, 7
        %v3019 = vsub.s32 0, %v3018
        %v3020 = vrot.slane %v3015, %v3019
        %v3022 = vadd.f32 %v2983, %v3020
        %v3023 = vadd.f32 %v2984, %v3020
        %v3024 = vadd.f32 %v2985, %v3020
        %v3025 = vadd.f32 %v2986, %v3020
        %v3026 = vadd.f32 %v2987, %v3020
        %v3027 = vadd.f32 %v2988, %v3020
        %v3028 = vadd.f32 %v2989, %v3020
        %v3029 = vadd.f32 %v2990, %v3020
        %v3030 = vadd.f32 %v2991, %v3020
        %v3031 = vadd.f32 %v2992, %v3020
        %v3032 = vadd.f32 %v2993, %v3020
        %v3033 = vadd.f32 %v2994, %v3020
        %v3034 = vadd.f32 %v2995, %v3020
        %v3035 = vadd.f32 %v2996, %v3020
        %v3036 = vadd.f32 %v2997, %v3020
        %v3037 = vadd.f32 %v2998, %v3020
        %v3038 = vadd.f32 %v2999, %v3020
        %v3039 = vadd.f32 %v3000, %v3020
        %v3040 = vadd.f32 %v3001, %v3020
        %v3041 = vadd.f32 %v3002, %v3020
        %v3042 = vadd.f32 %v3003, %v3020
        %v3043 = vadd.f32 %v3004, %v3020
        %v3044 = vadd.f32 %v3005, %v3020
        %v3045 = vadd.f32 %v3006, %v3020
        %v3046 = vadd.f32 %v3007, %v3020
        %v3047 = vadd.f32 %v3008, %v3020
        %v3048 = vadd.f32 %v3009, %v3020
        %v3049 = vadd.f32 %v3010, %v3020
        %v3050 = vadd.f32 %v3011, %v3020
        %v3051 = vadd.f32 %v3012, %v3020
        %v3052 = vadd.f32 %v3013, %v3020
        %v3053 = vadd.f32 %v3014, %v3020
        %v3054 = vsub.f32 0.0, %v3022
        %v3055 = vsub.f32 0.0, %v3023
        %v3056 = vsub.f32 0.0, %v3024
        %v3057 = vsub.f32 0.0, %v3025
        %v3058 = vsub.f32 0.0, %v3026
        %v3059 = vsub.f32 0.0, %v3027
        %v3060 = vsub.f32 0.0, %v3028
        %v3061 = vsub.f32 0.0, %v3029
        %v3062 = vsub.f32 0.0, %v3030
        %v3063 = vsub.f32 0.0, %v3031
        %v3064 = vsub.f32 0.0, %v3032
        %v3065 = vsub.f32 0.0, %v3033
        %v3066 = vsub.f32 0.0, %v3034
        %v3067 = vsub.f32 0.0, %v3035
        %v3068 = vsub.f32 0.0, %v3036
        %v3069 = vsub.f32 0.0, %v3037
        %v3070 = vsub.f32 0.0, %v3038
        %v3071 = vsub.f32 0.0, %v3039
        %v3072 = vsub.f32 0.0, %v3040
        %v3073 = vsub.f32 0.0, %v3041
        %v3074 = vsub.f32 0.0, %v3042
        %v3075 = vsub.f32 0.0, %v3043
        %v3076 = vsub.f32 0.0, %v3044
        %v3077 = vsub.f32 0.0, %v3045
        %v3078 = vsub.f32 0.0, %v3046
        %v3079 = vsub.f32 0.0, %v3047
        %v3080 = vsub.f32 0.0, %v3048
        %v3081 = vsub.f32 0.0, %v3049
        %v3082 = vsub.f32 0.0, %v3050
        %v3083 = vsub.f32 0.0, %v3051
        %v3084 = vsub.f32 0.0, %v3052
        %v3085 = vsub.f32 0.0, %v3053
        %v3086 = vmul.f32 %v3054, 1.442695
        %v3087 = vpow.pop %v3086
        %v3088 = vmul.f32 %v3055, 1.442695
        %v3089 = vpow.pop %v3088
        %v3090 = vmul.f32 %v3056, 1.442695
        %v3091 = vpow.pop %v3090
        %v3092 = vmul.f32 %v3057, 1.442695
        %v3093 = vpow.pop %v3092
        %v3094 = vmul.f32 %v3058, 1.442695
        %v3095 = vpow.pop %v3094
        %v3096 = vmul.f32 %v3059, 1.442695
        %v3097 = vpow.pop %v3096
        %v3098 = vmul.f32 %v3060, 1.442695
        %v3099 = vpow.pop %v3098
        %v3100 = vmul.f32 %v3061, 1.442695
        %v3101 = vpow.pop %v3100
        %v3102 = vmul.f32 %v3062, 1.442695
        %v3103 = vpow.pop %v3102
        %v3104 = vmul.f32 %v3063, 1.442695
        %v3105 = vpow.pop %v3104
        %v3106 = vmul.f32 %v3064, 1.442695
        %v3107 = vpow.pop %v3106
        %v3108 = vmul.f32 %v3065, 1.442695
        %v3109 = vpow.pop %v3108
        %v3110 = vmul.f32 %v3066, 1.442695
        %v3111 = vpow.pop %v3110
        %v3112 = vmul.f32 %v3067, 1.442695
        %v3113 = vpow.pop %v3112
        %v3114 = vmul.f32 %v3068, 1.442695
        %v3115 = vpow.pop %v3114
        %v3116 = vmul.f32 %v3069, 1.442695
        %v3117 = vpow.pop %v3116
        %v3118 = vmul.f32 %v3070, 1.442695
        %v3119 = vpow.pop %v3118
        %v3120 = vmul.f32 %v3071, 1.442695
        %v3121 = vpow.pop %v3120
        %v3122 = vmul.f32 %v3072, 1.442695
        %v3123 = vpow.pop %v3122
        %v3124 = vmul.f32 %v3073, 1.442695
        %v3125 = vpow.pop %v3124
        %v3126 = vmul.f32 %v3074, 1.442695
        %v3127 = vpow.pop %v3126
        %v3128 = vmul.f32 %v3075, 1.442695
        %v3129 = vpow.pop %v3128
        %v3130 = vmul.f32 %v3076, 1.442695
        %v3131 = vpow.pop %v3130
        %v3132 = vmul.f32 %v3077, 1.442695
        %v3133 = vpow.pop %v3132
        %v3134 = vmul.f32 %v3078, 1.442695
        %v3135 = vpow.pop %v3134
        %v3136 = vmul.f32 %v3079, 1.442695
        %v3137 = vpow.pop %v3136
        %v3138 = vmul.f32 %v3080, 1.442695
        %v3139 = vpow.pop %v3138
        %v3140 = vmul.f32 %v3081, 1.442695
        %v3141 = vpow.pop %v3140
        %v3142 = vmul.f32 %v3082, 1.442695
        %v3143 = vpow.pop %v3142
        %v3144 = vmul.f32 %v3083, 1.442695
        %v3145 = vpow.pop %v3144
        %v3146 = vmul.f32 %v3084, 1.442695
        %v3147 = vpow.pop %v3146
        %v3148 = vmul.f32 %v3085, 1.442695
        %v3149 = vpow.pop %v3148
        %v3150 = vadd.f32 %v3087, 1.0
        %v3151 = vadd.f32 %v3089, 1.0
        %v3152 = vadd.f32 %v3091, 1.0
        %v3153 = vadd.f32 %v3093, 1.0
        %v3154 = vadd.f32 %v3095, 1.0
        %v3155 = vadd.f32 %v3097, 1.0
        %v3156 = vadd.f32 %v3099, 1.0
        %v3157 = vadd.f32 %v3101, 1.0
        %v3158 = vadd.f32 %v3103, 1.0
        %v3159 = vadd.f32 %v3105, 1.0
        %v3160 = vadd.f32 %v3107, 1.0
        %v3161 = vadd.f32 %v3109, 1.0
        %v3162 = vadd.f32 %v3111, 1.0
        %v3163 = vadd.f32 %v3113, 1.0
        %v3164 = vadd.f32 %v3115, 1.0
        %v3165 = vadd.f32 %v3117, 1.0
        %v3166 = vadd.f32 %v3119, 1.0
        %v3167 = vadd.f32 %v3121, 1.0
        %v3168 = vadd.f32 %v3123, 1.0
        %v3169 = vadd.f32 %v3125, 1.0
        %v3170 = vadd.f32 %v3127, 1.0
        %v3171 = vadd.f32 %v3129, 1.0
        %v3172 = vadd.f32 %v3131, 1.0
        %v3173 = vadd.f32 %v3133, 1.0
        %v3174 = vadd.f32 %v3135, 1.0
        %v3175 = vadd.f32 %v3137, 1.0
        %v3176 = vadd.f32 %v3139, 1.0
        %v3177 = vadd.f32 %v3141, 1.0
        %v3178 = vadd.f32 %v3143, 1.0
        %v3179 = vadd.f32 %v3145, 1.0
        %v3180 = vadd.f32 %v3147, 1.0
        %v3181 = vadd.f32 %v3149, 1.0
        %v3182 = vrcp.pop %v3150
        %v3183 = vmul.f32 1.0, %v3182
        %v3184 = vrcp.pop %v3151
        %v3185 = vmul.f32 1.0, %v3184
        %v3186 = vrcp.pop %v3152
        %v3187 = vmul.f32 1.0, %v3186
        %v3188 = vrcp.pop %v3153
        %v3189 = vmul.f32 1.0, %v3188
        %v3190 = vrcp.pop %v3154
        %v3191 = vmul.f32 1.0, %v3190
        %v3192 = vrcp.pop %v3155
        %v3193 = vmul.f32 1.0, %v3192
        %v3194 = vrcp.pop %v3156
        %v3195 = vmul.f32 1.0, %v3194
        %v3196 = vrcp.pop %v3157
        %v3197 = vmul.f32 1.0, %v3196
        %v3198 = vrcp.pop %v3158
        %v3199 = vmul.f32 1.0, %v3198
        %v3200 = vrcp.pop %v3159
        %v3201 = vmul.f32 1.0, %v3200
        %v3202 = vrcp.pop %v3160
        %v3203 = vmul.f32 1.0, %v3202
        %v3204 = vrcp.pop %v3161
        %v3205 = vmul.f32 1.0, %v3204
        %v3206 = vrcp.pop %v3162
        %v3207 = vmul.f32 1.0, %v3206
        %v3208 = vrcp.pop %v3163
        %v3209 = vmul.f32 1.0, %v3208
        %v3210 = vrcp.pop %v3164
        %v3211 = vmul.f32 1.0, %v3210
        %v3212 = vrcp.pop %v3165
        %v3213 = vmul.f32 1.0, %v3212
        %v3214 = vrcp.pop %v3166
        %v3215 = vmul.f32 1.0, %v3214
        %v3216 = vrcp.pop %v3167
        %v3217 = vmul.f32 1.0, %v3216
        %v3218 = vrcp.pop %v3168
        %v3219 = vmul.f32 1.0, %v3218
        %v3220 = vrcp.pop %v3169
        %v3221 = vmul.f32 1.0, %v3220
        %v3222 = vrcp.pop %v3170
        %v3223 = vmul.f32 1.0, %v3222
        %v3224 = vrcp.pop %v3171
        %v3225 = vmul.f32 1.0, %v3224
        %v3226 = vrcp.pop %v3172
        %v3227 = vmul.f32 1.0, %v3226
        %v3228 = vrcp.pop %v3173
        %v3229 = vmul.f32 1.0, %v3228
        %v3230 = vrcp.pop %v3174
        %v3231 = vmul.f32 1.0, %v3230
        %v3232 = vrcp.pop %v3175
        %v3233 = vmul.f32 1.0, %v3232
        %v3234 = vrcp.pop %v3176
        %v3235 = vmul.f32 1.0, %v3234
        %v3236 = vrcp.pop %v3177
        %v3237 = vmul.f32 1.0, %v3236
        %v3238 = vrcp.pop %v3178
        %v3239 = vmul.f32 1.0, %v3238
        %v3240 = vrcp.pop %v3179
        %v3241 = vmul.f32 1.0, %v3240
        %v3242 = vrcp.pop %v3180
        %v3243 = vmul.f32 1.0, %v3242
        %v3244 = vrcp.pop %v3181
        %v3245 = vmul.f32 1.0, %v3244
        %v3246 = vmul.f32 %v3022, %v3183
        %v3247 = vmul.f32 %v3023, %v3185
        %v3248 = vmul.f32 %v3024, %v3187
        %v3249 = vmul.f32 %v3025, %v3189
        %v3250 = vmul.f32 %v3026, %v3191
        %v3251 = vmul.f32 %v3027, %v3193
        %v3252 = vmul.f32 %v3028, %v3195
        %v3253 = vmul.f32 %v3029, %v3197
        %v3254 = vmul.f32 %v3030, %v3199
        %v3255 = vmul.f32 %v3031, %v3201
        %v3256 = vmul.f32 %v3032, %v3203
        %v3257 = vmul.f32 %v3033, %v3205
        %v3258 = vmul.f32 %v3034, %v3207
        %v3259 = vmul.f32 %v3035, %v3209
        %v3260 = vmul.f32 %v3036, %v3211
        %v3261 = vmul.f32 %v3037, %v3213
        %v3262 = vmul.f32 %v3038, %v3215
        %v3263 = vmul.f32 %v3039, %v3217
        %v3264 = vmul.f32 %v3040, %v3219
        %v3265 = vmul.f32 %v3041, %v3221
        %v3266 = vmul.f32 %v3042, %v3223
        %v3267 = vmul.f32 %v3043, %v3225
        %v3268 = vmul.f32 %v3044, %v3227
        %v3269 = vmul.f32 %v3045, %v3229
        %v3270 = vmul.f32 %v3046, %v3231
        %v3271 = vmul.f32 %v3047, %v3233
        %v3272 = vmul.f32 %v3048, %v3235
        %v3273 = vmul.f32 %v3049, %v3237
        %v3274 = vmul.f32 %v3050, %v3239
        %v3275 = vmul.f32 %v3051, %v3241
        %v3276 = vmul.f32 %v3052, %v3243
        %v3277 = vmul.f32 %v3053, %v3245
        %s3278 = scalar_lea.vmem %s6, 384
        %v3279 = vld [vmem:[%s3278] sm:$0xff]
        %v3280 = vld [vmem:[%s3278 + $0x8] sm:$0xff]
        %v3281 = vld [vmem:[%s3278 + $0x10] sm:$0xff]
        %v3282 = vld [vmem:[%s3278 + $0x18] sm:$0xff]
        %v3283 = vld [vmem:[%s3278 + $0x20] sm:$0xff]
        %v3284 = vld [vmem:[%s3278 + $0x28] sm:$0xff]
        %v3285 = vld [vmem:[%s3278 + $0x30] sm:$0xff]
        %v3286 = vld [vmem:[%s3278 + $0x38] sm:$0xff]
        %v3287 = vld [vmem:[%s3278 + $0x40] sm:$0xff]
        %v3288 = vld [vmem:[%s3278 + $0x48] sm:$0xff]
        %v3289 = vld [vmem:[%s3278 + $0x50] sm:$0xff]
        %v3290 = vld [vmem:[%s3278 + $0x58] sm:$0xff]
        %v3291 = vld [vmem:[%s3278 + $0x60] sm:$0xff]
        %v3292 = vld [vmem:[%s3278 + $0x68] sm:$0xff]
        %v3293 = vld [vmem:[%s3278 + $0x70] sm:$0xff]
        %v3294 = vld [vmem:[%s3278 + $0x78] sm:$0xff]
        %s3295 = scalar_lea.vmem %s7, 3
        %v3296 = vld [vmem:[%s3295] sm:$0x1]
        %v3298 = vlaneseq
        %v3299 = vshrl.u32 %v3298, 7
        %v3300 = vsub.s32 0, %v3299
        %v3301 = vrot.slane %v3296, %v3300
        %3303 = vmatprep.subr.mxu0 0.0
        %3304 = vmatpush1.msra.mxu0 %v3279
        %3305 = vmatprep.subr.mxu0 0.0
        %3306 = vmatpush1.msra.mxu0 %v3280
        %3307 = vmatprep.subr.mxu0 0.0
        %3308 = vmatpush1.msra.mxu0 %v3281
        %3309 = vmatprep.subr.mxu0 0.0
        %3310 = vmatpush1.msra.mxu0 %v3282
        %3311 = vmatprep.subr.mxu0 0.0
        %3312 = vmatpush1.msra.mxu0 %v3283
        %3313 = vmatprep.subr.mxu0 0.0
        %3314 = vmatpush1.msra.mxu0 %v3284
        %3315 = vmatprep.subr.mxu0 0.0
        %3316 = vmatpush1.msra.mxu0 %v3285
        %3317 = vmatprep.subr.mxu0 0.0
        %3318 = vmatpush1.msra.mxu0 %v3286
        %3319 = vmatprep.subr.mxu0 0.0
        %3320 = vmatpush1.msra.mxu0 %v3287
        %3321 = vmatprep.subr.mxu0 0.0
        %3322 = vmatpush1.msra.mxu0 %v3288
        %3323 = vmatprep.subr.mxu0 0.0
        %3324 = vmatpush1.msra.mxu0 %v3289
        %3325 = vmatprep.subr.mxu0 0.0
        %3326 = vmatpush1.msra.mxu0 %v3290
        %3327 = vmatprep.subr.mxu0 0.0
        %3328 = vmatpush1.msra.mxu0 %v3291
        %3329 = vmatprep.subr.mxu0 0.0
        %3330 = vmatpush1.msra.mxu0 %v3292
        %3331 = vmatprep.subr.mxu0 0.0
        %3332 = vmatpush1.msra.mxu0 %v3293
        %3333 = vmatprep.subr.mxu0 0.0
        %3334 = vmatpush1.msra.mxu0 %v3294
        %3335 = vmatprep.subr.mxu0 0.0
        %3336 = vmatpush1.msra.mxu0 0.0
        %3337 = vmatprep.subr.mxu0 0.0
        %3338 = vmatpush1.msra.mxu0 0.0
        %3339 = vmatprep.subr.mxu0 0.0
        %3340 = vmatpush1.msra.mxu0 0.0
        %3341 = vmatprep.subr.mxu0 0.0
        %3342 = vmatpush1.msra.mxu0 0.0
        %3343 = vmatprep.subr.mxu0 0.0
        %3344 = vmatpush1.msra.mxu0 0.0
        %3345 = vmatprep.subr.mxu0 0.0
        %3346 = vmatpush1.msra.mxu0 0.0
        %3347 = vmatprep.subr.mxu0 0.0
        %3348 = vmatpush1.msra.mxu0 0.0
        %3349 = vmatprep.subr.mxu0 0.0
        %3350 = vmatpush1.msra.mxu0 0.0
        %3351 = vmatprep.subr.mxu0 0.0
        %3352 = vmatpush1.msra.mxu0 0.0
        %3353 = vmatprep.subr.mxu0 0.0
        %3354 = vmatpush1.msra.mxu0 0.0
        %3355 = vmatprep.subr.mxu0 0.0
        %3356 = vmatpush1.msra.mxu0 0.0
        %3357 = vmatprep.subr.mxu0 0.0
        %3358 = vmatpush1.msra.mxu0 0.0
        %3359 = vmatprep.subr.mxu0 0.0
        %3360 = vmatpush1.msra.mxu0 0.0
        %3361 = vmatprep.subr.mxu0 0.0
        %3362 = vmatpush1.msra.mxu0 0.0
        %3363 = vmatprep.subr.mxu0 0.0
        %3364 = vmatpush1.msra.mxu0 0.0
        %3365 = vmatprep.subr.mxu0 0.0
        %3366 = vmatpush1.msra.mxu0 0.0
        %3367 = vmatprep.mubr.f32.mxu0 0.0
        %3368 = vmatmul.mubr.f32.gmra.mrb[0].mxu0 %v3246
        %v3369 = vpop.f32.mrb[0].mxu0
        %v3370 = vadd.f32 %v3301, %v3369
        %v3371 = vpop.f32.mrb[0].mxu0
        %3372 = vmatprep.mubr.f32.mxu0 0.0
        %3373 = vmatmul.mubr.f32.gmra.mrb[0].mxu0 %v3247
        %v3374 = vpop.f32.mrb[0].mxu0
        %v3375 = vadd.f32 %v3301, %v3374
        %v3376 = vpop.f32.mrb[0].mxu0
        %3377 = vmatprep.mubr.f32.mxu0 0.0
        %3378 = vmatmul.mubr.f32.gmra.mrb[0].mxu0 %v3248
        %v3379 = vpop.f32.mrb[0].mxu0
        %v3380 = vadd.f32 %v3301, %v3379
        %v3381 = vpop.f32.mrb[0].mxu0
        %3382 = vmatprep.mubr.f32.mxu0 0.0
        %3383 = vmatmul.mubr.f32.gmra.mrb[0].mxu0 %v3249
        %v3384 = vpop.f32.mrb[0].mxu0
        %v3385 = vadd.f32 %v3301, %v3384
        %v3386 = vpop.f32.mrb[0].mxu0
        %3387 = vmatprep.mubr.f32.mxu0 0.0
        %3388 = vmatmul.mubr.f32.gmra.mrb[0].mxu0 %v3250
        %v3389 = vpop.f32.mrb[0].mxu0
        %v3390 = vadd.f32 %v3301, %v3389
        %v3391 = vpop.f32.mrb[0].mxu0
        %3392 = vmatprep.mubr.f32.mxu0 0.0
        %3393 = vmatmul.mubr.f32.gmra.mrb[0].mxu0 %v3251
        %v3394 = vpop.f32.mrb[0].mxu0
        %v3395 = vadd.f32 %v3301, %v3394
        %v3396 = vpop.f32.mrb[0].mxu0
        %3397 = vmatprep.mubr.f32.mxu0 0.0
        %3398 = vmatmul.mubr.f32.gmra.mrb[0].mxu0 %v3252
        %v3399 = vpop.f32.mrb[0].mxu0
        %v3400 = vadd.f32 %v3301, %v3399
        %v3401 = vpop.f32.mrb[0].mxu0
        %3402 = vmatprep.mubr.f32.mxu0 0.0
        %3403 = vmatmul.mubr.f32.gmra.mrb[0].mxu0 %v3253
        %v3404 = vpop.f32.mrb[0].mxu0
        %v3405 = vadd.f32 %v3301, %v3404
        %v3406 = vpop.f32.mrb[0].mxu0
        %3407 = vmatprep.mubr.f32.mxu0 0.0
        %3408 = vmatmul.mubr.f32.gmra.mrb[0].mxu0 %v3254
        %v3409 = vpop.f32.mrb[0].mxu0
        %v3410 = vadd.f32 %v3301, %v3409
        %v3411 = vpop.f32.mrb[0].mxu0
        %3412 = vmatprep.mubr.f32.mxu0 0.0
        %3413 = vmatmul.mubr.f32.gmra.mrb[0].mxu0 %v3255
        %v3414 = vpop.f32.mrb[0].mxu0
        %v3415 = vadd.f32 %v3301, %v3414
        %v3416 = vpop.f32.mrb[0].mxu0
        %3417 = vmatprep.mubr.f32.mxu0 0.0
        %3418 = vmatmul.mubr.f32.gmra.mrb[0].mxu0 %v3256
        %v3419 = vpop.f32.mrb[0].mxu0
        %v3420 = vadd.f32 %v3301, %v3419
        %v3421 = vpop.f32.mrb[0].mxu0
        %3422 = vmatprep.mubr.f32.mxu0 0.0
        %3423 = vmatmul.mubr.f32.gmra.mrb[0].mxu0 %v3257
        %v3424 = vpop.f32.mrb[0].mxu0
        %v3425 = vadd.f32 %v3301, %v3424
        %v3426 = vpop.f32.mrb[0].mxu0
        %3427 = vmatprep.mubr.f32.mxu0 0.0
        %3428 = vmatmul.mubr.f32.gmra.mrb[0].mxu0 %v3258
        %v3429 = vpop.f32.mrb[0].mxu0
        %v3430 = vadd.f32 %v3301, %v3429
        %v3431 = vpop.f32.mrb[0].mxu0
        %3432 = vmatprep.mubr.f32.mxu0 0.0
        %3433 = vmatmul.mubr.f32.gmra.mrb[0].mxu0 %v3259
        %v3434 = vpop.f32.mrb[0].mxu0
        %v3435 = vadd.f32 %v3301, %v3434
        %v3436 = vpop.f32.mrb[0].mxu0
        %3437 = vmatprep.mubr.f32.mxu0 0.0
        %3438 = vmatmul.mubr.f32.gmra.mrb[0].mxu0 %v3260
        %v3439 = vpop.f32.mrb[0].mxu0
        %v3440 = vadd.f32 %v3301, %v3439
        %v3441 = vpop.f32.mrb[0].mxu0
        %3442 = vmatprep.mubr.f32.mxu0 0.0
        %3443 = vmatmul.mubr.f32.gmra.mrb[0].mxu0 %v3261
        %v3444 = vpop.f32.mrb[0].mxu0
        %v3445 = vadd.f32 %v3301, %v3444
        %v3446 = vpop.f32.mrb[0].mxu0
        %3447 = vmatprep.mubr.f32.mxu0 0.0
        %3448 = vmatmul.mubr.f32.gmra.mrb[0].mxu0 %v3262
        %v3449 = vpop.f32.mrb[0].mxu0
        %v3450 = vadd.f32 %v3301, %v3449
        %v3451 = vpop.f32.mrb[0].mxu0
        %3452 = vmatprep.mubr.f32.mxu0 0.0
        %3453 = vmatmul.mubr.f32.gmra.mrb[0].mxu0 %v3263
        %v3454 = vpop.f32.mrb[0].mxu0
        %v3455 = vadd.f32 %v3301, %v3454
        %v3456 = vpop.f32.mrb[0].mxu0
        %3457 = vmatprep.mubr.f32.mxu0 0.0
        %3458 = vmatmul.mubr.f32.gmra.mrb[0].mxu0 %v3264
        %v3459 = vpop.f32.mrb[0].mxu0
        %v3460 = vadd.f32 %v3301, %v3459
        %v3461 = vpop.f32.mrb[0].mxu0
        %3462 = vmatprep.mubr.f32.mxu0 0.0
        %3463 = vmatmul.mubr.f32.gmra.mrb[0].mxu0 %v3265
        %v3464 = vpop.f32.mrb[0].mxu0
        %v3465 = vadd.f32 %v3301, %v3464
        %v3466 = vpop.f32.mrb[0].mxu0
        %3467 = vmatprep.mubr.f32.mxu0 0.0
        %3468 = vmatmul.mubr.f32.gmra.mrb[0].mxu0 %v3266
        %v3469 = vpop.f32.mrb[0].mxu0
        %v3470 = vadd.f32 %v3301, %v3469
        %v3471 = vpop.f32.mrb[0].mxu0
        %3472 = vmatprep.mubr.f32.mxu0 0.0
        %3473 = vmatmul.mubr.f32.gmra.mrb[0].mxu0 %v3267
        %v3474 = vpop.f32.mrb[0].mxu0
        %v3475 = vadd.f32 %v3301, %v3474
        %v3476 = vpop.f32.mrb[0].mxu0
        %3477 = vmatprep.mubr.f32.mxu0 0.0
        %3478 = vmatmul.mubr.f32.gmra.mrb[0].mxu0 %v3268
        %v3479 = vpop.f32.mrb[0].mxu0
        %v3480 = vadd.f32 %v3301, %v3479
        %v3481 = vpop.f32.mrb[0].mxu0
        %3482 = vmatprep.mubr.f32.mxu0 0.0
        %3483 = vmatmul.mubr.f32.gmra.mrb[0].mxu0 %v3269
        %v3484 = vpop.f32.mrb[0].mxu0
        %v3485 = vadd.f32 %v3301, %v3484
        %v3486 = vpop.f32.mrb[0].mxu0
        %3487 = vmatprep.mubr.f32.mxu0 0.0
        %3488 = vmatmul.mubr.f32.gmra.mrb[0].mxu0 %v3270
        %v3489 = vpop.f32.mrb[0].mxu0
        %v3490 = vadd.f32 %v3301, %v3489
        %v3491 = vpop.f32.mrb[0].mxu0
        %3492 = vmatprep.mubr.f32.mxu0 0.0
        %3493 = vmatmul.mubr.f32.gmra.mrb[0].mxu0 %v3271
        %v3494 = vpop.f32.mrb[0].mxu0
        %v3495 = vadd.f32 %v3301, %v3494
        %v3496 = vpop.f32.mrb[0].mxu0
        %3497 = vmatprep.mubr.f32.mxu0 0.0
        %3498 = vmatmul.mubr.f32.gmra.mrb[0].mxu0 %v3272
        %v3499 = vpop.f32.mrb[0].mxu0
        %v3500 = vadd.f32 %v3301, %v3499
        %v3501 = vpop.f32.mrb[0].mxu0
        %3502 = vmatprep.mubr.f32.mxu0 0.0
        %3503 = vmatmul.mubr.f32.gmra.mrb[0].mxu0 %v3273
        %v3504 = vpop.f32.mrb[0].mxu0
        %v3505 = vadd.f32 %v3301, %v3504
        %v3506 = vpop.f32.mrb[0].mxu0
        %3507 = vmatprep.mubr.f32.mxu0 0.0
        %3508 = vmatmul.mubr.f32.gmra.mrb[0].mxu0 %v3274
        %v3509 = vpop.f32.mrb[0].mxu0
        %v3510 = vadd.f32 %v3301, %v3509
        %v3511 = vpop.f32.mrb[0].mxu0
        %3512 = vmatprep.mubr.f32.mxu0 0.0
        %3513 = vmatmul.mubr.f32.gmra.mrb[0].mxu0 %v3275
        %v3514 = vpop.f32.mrb[0].mxu0
        %v3515 = vadd.f32 %v3301, %v3514
        %v3516 = vpop.f32.mrb[0].mxu0
        %3517 = vmatprep.mubr.f32.mxu0 0.0
        %3518 = vmatmul.mubr.f32.gmra.mrb[0].mxu0 %v3276
        %v3519 = vpop.f32.mrb[0].mxu0
        %v3520 = vadd.f32 %v3301, %v3519
        %v3521 = vpop.f32.mrb[0].mxu0
        %3522 = vmatprep.mubr.f32.mxu0 0.0
        %3523 = vmatmul.mubr.f32.gmra.mrb[0].mxu0 %v3277
        %v3524 = vpop.f32.mrb[0].mxu0
        %v3525 = vadd.f32 %v3301, %v3524
        %v3526 = vpop.f32.mrb[0].mxu0
        %3527 = vdwg.mxu0
        %3528 = vst [vmem:[#allocation4 + $0x18] sm:$0xff] %v3370
        %3529 = vst [vmem:[#allocation4 + $0x38] sm:$0xff] %v3375
        %3530 = vst [vmem:[#allocation4 + $0x58] sm:$0xff] %v3380
        %3531 = vst [vmem:[#allocation4 + $0x78] sm:$0xff] %v3385
        %3532 = vst [vmem:[#allocation4 + $0x98] sm:$0xff] %v3390
        %3533 = vst [vmem:[#allocation4 + $0xb8] sm:$0xff] %v3395
        %3534 = vst [vmem:[#allocation4 + $0xd8] sm:$0xff] %v3400
        %3535 = vst [vmem:[#allocation4 + $0xf8] sm:$0xff] %v3405
        %3536 = vst [vmem:[#allocation4 + $0x118] sm:$0xff] %v3410
        %3537 = vst [vmem:[#allocation4 + $0x138] sm:$0xff] %v3415
        %3538 = vst [vmem:[#allocation4 + $0x158] sm:$0xff] %v3420
        %3539 = vst [vmem:[#allocation4 + $0x178] sm:$0xff] %v3425
        %3540 = vst [vmem:[#allocation4 + $0x198] sm:$0xff] %v3430
        %3541 = vst [vmem:[#allocation4 + $0x1b8] sm:$0xff] %v3435
        %3542 = vst [vmem:[#allocation4 + $0x1d8] sm:$0xff] %v3440
        %3543 = vst [vmem:[#allocation4 + $0x1f8] sm:$0xff] %v3445
        %3544 = vst [vmem:[#allocation4 + $0x218] sm:$0xff] %v3450
        %3545 = vst [vmem:[#allocation4 + $0x238] sm:$0xff] %v3455
        %3546 = vst [vmem:[#allocation4 + $0x258] sm:$0xff] %v3460
        %3547 = vst [vmem:[#allocation4 + $0x278] sm:$0xff] %v3465
        %3548 = vst [vmem:[#allocation4 + $0x298] sm:$0xff] %v3470
        %3549 = vst [vmem:[#allocation4 + $0x2b8] sm:$0xff] %v3475
        %3550 = vst [vmem:[#allocation4 + $0x2d8] sm:$0xff] %v3480
        %3551 = vst [vmem:[#allocation4 + $0x2f8] sm:$0xff] %v3485
        %3552 = vst [vmem:[#allocation4 + $0x318] sm:$0xff] %v3490
        %3553 = vst [vmem:[#allocation4 + $0x338] sm:$0xff] %v3495
        %3554 = vst [vmem:[#allocation4 + $0x358] sm:$0xff] %v3500
        %3555 = vst [vmem:[#allocation4 + $0x378] sm:$0xff] %v3505
        %3556 = vst [vmem:[#allocation4 + $0x398] sm:$0xff] %v3510
        %3557 = vst [vmem:[#allocation4 + $0x3b8] sm:$0xff] %v3515
        %3558 = vst [vmem:[#allocation4 + $0x3d8] sm:$0xff] %v3520
        %3559 = vst [vmem:[#allocation4 + $0x3f8] sm:$0xff] %v3525
        %v3560 = vlaneseq
        %v3561 = vshrl.u32 %v3560, 7
        %v3562 = vadd.s32 %v3561, 8
        %v3563 = vld [vmem:[%s488] sm:$0x3]
        %v3564 = vlaneseq
        %v3565 = vshrl.u32 %v3564, 7
        %v3566 = vsub.s32 0, %v3565
        %v3567 = vrot.slane %v3563, %v3566
        %v3568 = vlaneseq
        %v3569 = vshrl.u32 %v3568, 7
        %v3570 = vsub.s32 1, %v3569
        %v3571 = vrot.slane %v3563, %v3570
        %vm3572 = vcmp.eq.s32.totalorder %v3561, %v3567
        %vm3573 = vcmp.eq.s32.totalorder %v3561, %v3571
        %vm3574 = vcmp.eq.s32.totalorder %v3562, %v3567
        %vm3575 = vcmp.eq.s32.totalorder %v3562, %v3571
        %v3576 = vsel %vm3572, 1, 0
        %v3577 = vsel %vm3573, 1, 0
        %v3578 = vsel %vm3574, 1, 0
        %v3579 = vsel %vm3575, 1, 0
        %v3580 = vcvt.s32.f32 %v3576
        %v3581 = vcvt.s32.f32 %v3577
        %v3582 = vcvt.s32.f32 %v3578
        %v3583 = vcvt.s32.f32 %v3579
        %v3584 = vld [vmem:[#allocation2] sm:$0xff]
        %v3585 = vld [vmem:[#allocation2 + $0x8] sm:$0xff]
        %v3586 = vld [vmem:[#allocation2 + $0x10] sm:$0xff]
        %v3587 = vld [vmem:[#allocation2 + $0x18] sm:$0xff]
        %v3588 = vld [vmem:[#allocation2 + $0x20] sm:$0xff]
        %v3589 = vld [vmem:[#allocation2 + $0x28] sm:$0xff]
        %v3590 = vld [vmem:[#allocation2 + $0x30] sm:$0xff]
        %v3591 = vld [vmem:[#allocation2 + $0x38] sm:$0xff]
        %v3592 = vld [vmem:[#allocation4] sm:$0xff]
        %v3593 = vld [vmem:[#allocation4 + $0x8] sm:$0xff]
        %v3594 = vld [vmem:[#allocation4 + $0x10] sm:$0xff]
        %v3595 = vld [vmem:[#allocation4 + $0x18] sm:$0xff]
        %v3596 = vld [vmem:[#allocation4 + $0x20] sm:$0xff]
        %v3597 = vld [vmem:[#allocation4 + $0x28] sm:$0xff]
        %v3598 = vld [vmem:[#allocation4 + $0x30] sm:$0xff]
        %v3599 = vld [vmem:[#allocation4 + $0x38] sm:$0xff]
        %v3600 = vld [vmem:[#allocation4 + $0x40] sm:$0xff]
        %v3601 = vld [vmem:[#allocation4 + $0x48] sm:$0xff]
        %v3602 = vld [vmem:[#allocation4 + $0x50] sm:$0xff]
        %v3603 = vld [vmem:[#allocation4 + $0x58] sm:$0xff]
        %v3604 = vld [vmem:[#allocation4 + $0x60] sm:$0xff]
        %v3605 = vld [vmem:[#allocation4 + $0x68] sm:$0xff]
        %v3606 = vld [vmem:[#allocation4 + $0x70] sm:$0xff]
        %v3607 = vld [vmem:[#allocation4 + $0x78] sm:$0xff]
        %v3608 = vld [vmem:[#allocation4 + $0x80] sm:$0xff]
        %v3609 = vld [vmem:[#allocation4 + $0x88] sm:$0xff]
        %v3610 = vld [vmem:[#allocation4 + $0x90] sm:$0xff]
        %v3611 = vld [vmem:[#allocation4 + $0x98] sm:$0xff]
        %v3612 = vld [vmem:[#allocation4 + $0xa0] sm:$0xff]
        %v3613 = vld [vmem:[#allocation4 + $0xa8] sm:$0xff]
        %v3614 = vld [vmem:[#allocation4 + $0xb0] sm:$0xff]
        %v3615 = vld [vmem:[#allocation4 + $0xb8] sm:$0xff]
        %v3616 = vld [vmem:[#allocation4 + $0xc0] sm:$0xff]
        %v3617 = vld [vmem:[#allocation4 + $0xc8] sm:$0xff]
        %v3618 = vld [vmem:[#allocation4 + $0xd0] sm:$0xff]
        %v3619 = vld [vmem:[#allocation4 + $0xd8] sm:$0xff]
        %v3620 = vld [vmem:[#allocation4 + $0xe0] sm:$0xff]
        %v3621 = vld [vmem:[#allocation4 + $0xe8] sm:$0xff]
        %v3622 = vld [vmem:[#allocation4 + $0xf0] sm:$0xff]
        %v3623 = vld [vmem:[#allocation4 + $0xf8] sm:$0xff]
        %v3624 = vld [vmem:[#allocation4 + $0x100] sm:$0xff]
        %v3625 = vld [vmem:[#allocation4 + $0x108] sm:$0xff]
        %v3626 = vld [vmem:[#allocation4 + $0x110] sm:$0xff]
        %v3627 = vld [vmem:[#allocation4 + $0x118] sm:$0xff]
        %v3628 = vld [vmem:[#allocation4 + $0x120] sm:$0xff]
        %v3629 = vld [vmem:[#allocation4 + $0x128] sm:$0xff]
        %v3630 = vld [vmem:[#allocation4 + $0x130] sm:$0xff]
        %v3631 = vld [vmem:[#allocation4 + $0x138] sm:$0xff]
        %v3632 = vld [vmem:[#allocation4 + $0x140] sm:$0xff]
        %v3633 = vld [vmem:[#allocation4 + $0x148] sm:$0xff]
        %v3634 = vld [vmem:[#allocation4 + $0x150] sm:$0xff]
        %v3635 = vld [vmem:[#allocation4 + $0x158] sm:$0xff]
        %v3636 = vld [vmem:[#allocation4 + $0x160] sm:$0xff]
        %v3637 = vld [vmem:[#allocation4 + $0x168] sm:$0xff]
        %v3638 = vld [vmem:[#allocation4 + $0x170] sm:$0xff]
        %v3639 = vld [vmem:[#allocation4 + $0x178] sm:$0xff]
        %v3640 = vld [vmem:[#allocation4 + $0x180] sm:$0xff]
        %v3641 = vld [vmem:[#allocation4 + $0x188] sm:$0xff]
        %v3642 = vld [vmem:[#allocation4 + $0x190] sm:$0xff]
        %v3643 = vld [vmem:[#allocation4 + $0x198] sm:$0xff]
        %v3644 = vld [vmem:[#allocation4 + $0x1a0] sm:$0xff]
        %v3645 = vld [vmem:[#allocation4 + $0x1a8] sm:$0xff]
        %v3646 = vld [vmem:[#allocation4 + $0x1b0] sm:$0xff]
        %v3647 = vld [vmem:[#allocation4 + $0x1b8] sm:$0xff]
        %v3648 = vld [vmem:[#allocation4 + $0x1c0] sm:$0xff]
        %v3649 = vld [vmem:[#allocation4 + $0x1c8] sm:$0xff]
        %v3650 = vld [vmem:[#allocation4 + $0x1d0] sm:$0xff]
        %v3651 = vld [vmem:[#allocation4 + $0x1d8] sm:$0xff]
        %v3652 = vld [vmem:[#allocation4 + $0x1e0] sm:$0xff]
        %v3653 = vld [vmem:[#allocation4 + $0x1e8] sm:$0xff]
        %v3654 = vld [vmem:[#allocation4 + $0x1f0] sm:$0xff]
        %v3655 = vld [vmem:[#allocation4 + $0x1f8] sm:$0xff]
        %v3656 = vld [vmem:[#allocation4 + $0x200] sm:$0xff]
        %v3657 = vld [vmem:[#allocation4 + $0x208] sm:$0xff]
        %v3658 = vld [vmem:[#allocation4 + $0x210] sm:$0xff]
        %v3659 = vld [vmem:[#allocation4 + $0x218] sm:$0xff]
        %v3660 = vld [vmem:[#allocation4 + $0x220] sm:$0xff]
        %v3661 = vld [vmem:[#allocation4 + $0x228] sm:$0xff]
        %v3662 = vld [vmem:[#allocation4 + $0x230] sm:$0xff]
        %v3663 = vld [vmem:[#allocation4 + $0x238] sm:$0xff]
        %v3664 = vld [vmem:[#allocation4 + $0x240] sm:$0xff]
        %v3665 = vld [vmem:[#allocation4 + $0x248] sm:$0xff]
        %v3666 = vld [vmem:[#allocation4 + $0x250] sm:$0xff]
        %v3667 = vld [vmem:[#allocation4 + $0x258] sm:$0xff]
        %v3668 = vld [vmem:[#allocation4 + $0x260] sm:$0xff]
        %v3669 = vld [vmem:[#allocation4 + $0x268] sm:$0xff]
        %v3670 = vld [vmem:[#allocation4 + $0x270] sm:$0xff]
        %v3671 = vld [vmem:[#allocation4 + $0x278] sm:$0xff]
        %v3672 = vld [vmem:[#allocation4 + $0x280] sm:$0xff]
        %v3673 = vld [vmem:[#allocation4 + $0x288] sm:$0xff]
        %v3674 = vld [vmem:[#allocation4 + $0x290] sm:$0xff]
        %v3675 = vld [vmem:[#allocation4 + $0x298] sm:$0xff]
        %v3676 = vld [vmem:[#allocation4 + $0x2a0] sm:$0xff]
        %v3677 = vld [vmem:[#allocation4 + $0x2a8] sm:$0xff]
        %v3678 = vld [vmem:[#allocation4 + $0x2b0] sm:$0xff]
        %v3679 = vld [vmem:[#allocation4 + $0x2b8] sm:$0xff]
        %v3680 = vld [vmem:[#allocation4 + $0x2c0] sm:$0xff]
        %v3681 = vld [vmem:[#allocation4 + $0x2c8] sm:$0xff]
        %v3682 = vld [vmem:[#allocation4 + $0x2d0] sm:$0xff]
        %v3683 = vld [vmem:[#allocation4 + $0x2d8] sm:$0xff]
        %v3684 = vld [vmem:[#allocation4 + $0x2e0] sm:$0xff]
        %v3685 = vld [vmem:[#allocation4 + $0x2e8] sm:$0xff]
        %v3686 = vld [vmem:[#allocation4 + $0x2f0] sm:$0xff]
        %v3687 = vld [vmem:[#allocation4 + $0x2f8] sm:$0xff]
        %v3688 = vld [vmem:[#allocation4 + $0x300] sm:$0xff]
        %v3689 = vld [vmem:[#allocation4 + $0x308] sm:$0xff]
        %v3690 = vld [vmem:[#allocation4 + $0x310] sm:$0xff]
        %v3691 = vld [vmem:[#allocation4 + $0x318] sm:$0xff]
        %v3692 = vld [vmem:[#allocation4 + $0x320] sm:$0xff]
        %v3693 = vld [vmem:[#allocation4 + $0x328] sm:$0xff]
        %v3694 = vld [vmem:[#allocation4 + $0x330] sm:$0xff]
        %v3695 = vld [vmem:[#allocation4 + $0x338] sm:$0xff]
        %v3696 = vld [vmem:[#allocation4 + $0x340] sm:$0xff]
        %v3697 = vld [vmem:[#allocation4 + $0x348] sm:$0xff]
        %v3698 = vld [vmem:[#allocation4 + $0x350] sm:$0xff]
        %v3699 = vld [vmem:[#allocation4 + $0x358] sm:$0xff]
        %v3700 = vld [vmem:[#allocation4 + $0x360] sm:$0xff]
        %v3701 = vld [vmem:[#allocation4 + $0x368] sm:$0xff]
        %v3702 = vld [vmem:[#allocation4 + $0x370] sm:$0xff]
        %v3703 = vld [vmem:[#allocation4 + $0x378] sm:$0xff]
        %v3704 = vld [vmem:[#allocation4 + $0x380] sm:$0xff]
        %v3705 = vld [vmem:[#allocation4 + $0x388] sm:$0xff]
        %v3706 = vld [vmem:[#allocation4 + $0x390] sm:$0xff]
        %v3707 = vld [vmem:[#allocation4 + $0x398] sm:$0xff]
        %v3708 = vld [vmem:[#allocation4 + $0x3a0] sm:$0xff]
        %v3709 = vld [vmem:[#allocation4 + $0x3a8] sm:$0xff]
        %v3710 = vld [vmem:[#allocation4 + $0x3b0] sm:$0xff]
        %v3711 = vld [vmem:[#allocation4 + $0x3b8] sm:$0xff]
        %v3712 = vld [vmem:[#allocation4 + $0x3c0] sm:$0xff]
        %v3713 = vld [vmem:[#allocation4 + $0x3c8] sm:$0xff]
        %v3714 = vld [vmem:[#allocation4 + $0x3d0] sm:$0xff]
        %v3715 = vld [vmem:[#allocation4 + $0x3d8] sm:$0xff]
        %v3716 = vld [vmem:[#allocation4 + $0x3e0] sm:$0xff]
        %v3717 = vld [vmem:[#allocation4 + $0x3e8] sm:$0xff]
        %v3718 = vld [vmem:[#allocation4 + $0x3f0] sm:$0xff]
        %v3719 = vld [vmem:[#allocation4 + $0x3f8] sm:$0xff]
        %3720 = vmatprep.subr.mxu0 %v3593
        %3721 = vmatpush1.msra.mxu0 %v3592
        %3722 = vmatprep.subr.mxu0 %v3597
        %3723 = vmatpush1.msra.mxu0 %v3596
        %3724 = vmatprep.subr.mxu0 %v3601
        %3725 = vmatpush1.msra.mxu0 %v3600
        %3726 = vmatprep.subr.mxu0 %v3605
        %3727 = vmatpush1.msra.mxu0 %v3604
        %3728 = vmatprep.subr.mxu0 %v3609
        %3729 = vmatpush1.msra.mxu0 %v3608
        %3730 = vmatprep.subr.mxu0 %v3613
        %3731 = vmatpush1.msra.mxu0 %v3612
        %3732 = vmatprep.subr.mxu0 %v3617
        %3733 = vmatpush1.msra.mxu0 %v3616
        %3734 = vmatprep.subr.mxu0 %v3621
        %3735 = vmatpush1.msra.mxu0 %v3620
        %3736 = vmatprep.subr.mxu0 %v3625
        %3737 = vmatpush1.msra.mxu0 %v3624
        %3738 = vmatprep.subr.mxu0 %v3629
        %3739 = vmatpush1.msra.mxu0 %v3628
        %3740 = vmatprep.subr.mxu0 %v3633
        %3741 = vmatpush1.msra.mxu0 %v3632
        %3742 = vmatprep.subr.mxu0 %v3637
        %3743 = vmatpush1.msra.mxu0 %v3636
        %3744 = vmatprep.subr.mxu0 %v3641
        %3745 = vmatpush1.msra.mxu0 %v3640
        %3746 = vmatprep.subr.mxu0 %v3645
        %3747 = vmatpush1.msra.mxu0 %v3644
        %3748 = vmatprep.subr.mxu0 %v3649
        %3749 = vmatpush1.msra.mxu0 %v3648
        %3750 = vmatprep.subr.mxu0 %v3653
        %3751 = vmatpush1.msra.mxu0 %v3652
        %3752 = vmatprep.subr.mxu0 %v3657
        %3753 = vmatpush1.msra.mxu0 %v3656
        %3754 = vmatprep.subr.mxu0 %v3661
        %3755 = vmatpush1.msra.mxu0 %v3660
        %3756 = vmatprep.subr.mxu0 %v3665
        %3757 = vmatpush1.msra.mxu0 %v3664
        %3758 = vmatprep.subr.mxu0 %v3669
        %3759 = vmatpush1.msra.mxu0 %v3668
        %3760 = vmatprep.subr.mxu0 %v3673
        %3761 = vmatpush1.msra.mxu0 %v3672
        %3762 = vmatprep.subr.mxu0 %v3677
        %3763 = vmatpush1.msra.mxu0 %v3676
        %3764 = vmatprep.subr.mxu0 %v3681
        %3765 = vmatpush1.msra.mxu0 %v3680
        %3766 = vmatprep.subr.mxu0 %v3685
        %3767 = vmatpush1.msra.mxu0 %v3684
        %3768 = vmatprep.subr.mxu0 %v3689
        %3769 = vmatpush1.msra.mxu0 %v3688
        %3770 = vmatprep.subr.mxu0 %v3693
        %3771 = vmatpush1.msra.mxu0 %v3692
        %3772 = vmatprep.subr.mxu0 %v3697
        %3773 = vmatpush1.msra.mxu0 %v3696
        %3774 = vmatprep.subr.mxu0 %v3701
        %3775 = vmatpush1.msra.mxu0 %v3700
        %3776 = vmatprep.subr.mxu0 %v3705
        %3777 = vmatpush1.msra.mxu0 %v3704
        %3778 = vmatprep.subr.mxu0 %v3709
        %3779 = vmatpush1.msra.mxu0 %v3708
        %3780 = vmatprep.subr.mxu0 %v3713
        %3781 = vmatpush1.msra.mxu0 %v3712
        %3782 = vmatprep.subr.mxu0 %v3717
        %3783 = vmatpush1.msra.mxu0 %v3716
        %3784 = vmatprep.mubr.f32.mxu0 %v3581
        %3785 = vmatmul.mubr.f32.gmra.mrb[0].mxu0 %v3580
        %v3786 = vpop.f32.mrb[0].mxu0
        %v3787 = vadd.f32 0.0, %v3786
        %v3788 = vpop.f32.mrb[0].mxu0
        %v3789 = vadd.f32 0.0, %v3788
        %3790 = vmatprep.mubr.f32.mxu0 %v3583
        %3791 = vmatmul.mubr.f32.gmra.mrb[0].mxu0 %v3582
        %v3792 = vpop.f32.mrb[0].mxu0
        %v3793 = vadd.f32 0.0, %v3792
        %v3794 = vpop.f32.mrb[0].mxu0
        %v3795 = vadd.f32 0.0, %v3794
        %3796 = vdwg.mxu0
        %3797 = vmatprep.subr.mxu0 %v3595
        %3798 = vmatpush1.msra.mxu0 %v3594
        %3799 = vmatprep.subr.mxu0 %v3599
        %3800 = vmatpush1.msra.mxu0 %v3598
        %3801 = vmatprep.subr.mxu0 %v3603
        %3802 = vmatpush1.msra.mxu0 %v3602
        %3803 = vmatprep.subr.mxu0 %v3607
        %3804 = vmatpush1.msra.mxu0 %v3606
        %3805 = vmatprep.subr.mxu0 %v3611
        %3806 = vmatpush1.msra.mxu0 %v3610
        %3807 = vmatprep.subr.mxu0 %v3615
        %3808 = vmatpush1.msra.mxu0 %v3614
        %3809 = vmatprep.subr.mxu0 %v3619
        %3810 = vmatpush1.msra.mxu0 %v3618
        %3811 = vmatprep.subr.mxu0 %v3623
        %3812 = vmatpush1.msra.mxu0 %v3622
        %3813 = vmatprep.subr.mxu0 %v3627
        %3814 = vmatpush1.msra.mxu0 %v3626
        %3815 = vmatprep.subr.mxu0 %v3631
        %3816 = vmatpush1.msra.mxu0 %v3630
        %3817 = vmatprep.subr.mxu0 %v3635
        %3818 = vmatpush1.msra.mxu0 %v3634
        %3819 = vmatprep.subr.mxu0 %v3639
        %3820 = vmatpush1.msra.mxu0 %v3638
        %3821 = vmatprep.subr.mxu0 %v3643
        %3822 = vmatpush1.msra.mxu0 %v3642
        %3823 = vmatprep.subr.mxu0 %v3647
        %3824 = vmatpush1.msra.mxu0 %v3646
        %3825 = vmatprep.subr.mxu0 %v3651
        %3826 = vmatpush1.msra.mxu0 %v3650
        %3827 = vmatprep.subr.mxu0 %v3655
        %3828 = vmatpush1.msra.mxu0 %v3654
        %3829 = vmatprep.subr.mxu0 %v3659
        %3830 = vmatpush1.msra.mxu0 %v3658
        %3831 = vmatprep.subr.mxu0 %v3663
        %3832 = vmatpush1.msra.mxu0 %v3662
        %3833 = vmatprep.subr.mxu0 %v3667
        %3834 = vmatpush1.msra.mxu0 %v3666
        %3835 = vmatprep.subr.mxu0 %v3671
        %3836 = vmatpush1.msra.mxu0 %v3670
        %3837 = vmatprep.subr.mxu0 %v3675
        %3838 = vmatpush1.msra.mxu0 %v3674
        %3839 = vmatprep.subr.mxu0 %v3679
        %3840 = vmatpush1.msra.mxu0 %v3678
        %3841 = vmatprep.subr.mxu0 %v3683
        %3842 = vmatpush1.msra.mxu0 %v3682
        %3843 = vmatprep.subr.mxu0 %v3687
        %3844 = vmatpush1.msra.mxu0 %v3686
        %3845 = vmatprep.subr.mxu0 %v3691
        %3846 = vmatpush1.msra.mxu0 %v3690
        %3847 = vmatprep.subr.mxu0 %v3695
        %3848 = vmatpush1.msra.mxu0 %v3694
        %3849 = vmatprep.subr.mxu0 %v3699
        %3850 = vmatpush1.msra.mxu0 %v3698
        %3851 = vmatprep.subr.mxu0 %v3703
        %3852 = vmatpush1.msra.mxu0 %v3702
        %3853 = vmatprep.subr.mxu0 %v3707
        %3854 = vmatpush1.msra.mxu0 %v3706
        %3855 = vmatprep.subr.mxu0 %v3711
        %3856 = vmatpush1.msra.mxu0 %v3710
        %3857 = vmatprep.subr.mxu0 %v3715
        %3858 = vmatpush1.msra.mxu0 %v3714
        %3859 = vmatprep.subr.mxu0 %v3719
        %3860 = vmatpush1.msra.mxu0 %v3718
        %3861 = vmatprep.mubr.f32.mxu0 %v3581
        %3862 = vmatmul.mubr.f32.gmra.mrb[0].mxu0 %v3580
        %v3863 = vpop.f32.mrb[0].mxu0
        %v3864 = vadd.f32 0.0, %v3863
        %v3865 = vpop.f32.mrb[0].mxu0
        %v3866 = vadd.f32 0.0, %v3865
        %3867 = vmatprep.mubr.f32.mxu0 %v3583
        %3868 = vmatmul.mubr.f32.gmra.mrb[0].mxu0 %v3582
        %v3869 = vpop.f32.mrb[0].mxu0
        %v3870 = vadd.f32 0.0, %v3869
        %v3871 = vpop.f32.mrb[0].mxu0
        %v3872 = vadd.f32 0.0, %v3871
        %3873 = vdwg.mxu0
        %v3874 = vadd.f32 %v3584, %v3787
        %v3875 = vadd.f32 %v3585, %v3789
        %v3876 = vadd.f32 %v3586, %v3864
        %v3877 = vadd.f32 %v3587, %v3866
        %v3878 = vadd.f32 %v3588, %v3793
        %v3879 = vadd.f32 %v3589, %v3795
        %v3880 = vadd.f32 %v3590, %v3870
        %v3881 = vadd.f32 %v3591, %v3872
        %3882 = vst [vmem:[#allocation2] sm:$0xff] %v3874
        %3883 = vst [vmem:[#allocation2 + $0x8] sm:$0xff] %v3875
        %3884 = vst [vmem:[#allocation2 + $0x10] sm:$0xff] %v3876
        %3885 = vst [vmem:[#allocation2 + $0x18] sm:$0xff] %v3877
        %3886 = vst [vmem:[#allocation2 + $0x20] sm:$0xff] %v3878
        %3887 = vst [vmem:[#allocation2 + $0x28] sm:$0xff] %v3879
        %3888 = vst [vmem:[#allocation2 + $0x30] sm:$0xff] %v3880
        %3889 = vst [vmem:[#allocation2 + $0x38] sm:$0xff] %v3881
        // Predicated region
        $region73: #{dimenet_forward.1} parent=67 // pred_check
          %p3890 = pneg %p504
        $region74: #{dimenet_forward.1} parent=67 // pred_check_branch
          %3892 = sbr.rel (%p3890) target = $region76
        $region75: #{dimenet_forward.1} parent=67 // pred_region
          %v3893 = vld [vmem:[%s495] sm:$0xff]
          %v3894 = vld [vmem:[%s495 + $0x8] sm:$0xff]
          %v3895 = vld [vmem:[#allocation2] sm:$0xff]
          %v3896 = vld [vmem:[#allocation2 + $0x8] sm:$0xff]
          %v3897 = vld [vmem:[#allocation2 + $0x10] sm:$0xff]
          %v3898 = vld [vmem:[#allocation2 + $0x18] sm:$0xff]
          %v3899 = vld [vmem:[#allocation2 + $0x20] sm:$0xff]
          %v3900 = vld [vmem:[#allocation2 + $0x28] sm:$0xff]
          %v3901 = vld [vmem:[#allocation2 + $0x30] sm:$0xff]
          %v3902 = vld [vmem:[#allocation2 + $0x38] sm:$0xff]
          %v3903 = vld [vmem:[%s8] sm:$0xff]
          %v3904 = vld [vmem:[%s8 + $0x8] sm:$0xff]
          %v3905 = vld [vmem:[%s8 + $0x10] sm:$0xff]
          %v3906 = vld [vmem:[%s8 + $0x18] sm:$0xff]
          %v3907 = vld [vmem:[%s8 + $0x20] sm:$0xff]
          %v3908 = vld [vmem:[%s8 + $0x28] sm:$0xff]
          %v3909 = vld [vmem:[%s8 + $0x30] sm:$0xff]
          %v3910 = vld [vmem:[%s8 + $0x38] sm:$0xff]
          %v3911 = vld [vmem:[%s8 + $0x40] sm:$0xff]
          %v3912 = vld [vmem:[%s8 + $0x48] sm:$0xff]
          %v3913 = vld [vmem:[%s8 + $0x50] sm:$0xff]
          %v3914 = vld [vmem:[%s8 + $0x58] sm:$0xff]
          %v3915 = vld [vmem:[%s8 + $0x60] sm:$0xff]
          %v3916 = vld [vmem:[%s8 + $0x68] sm:$0xff]
          %v3917 = vld [vmem:[%s8 + $0x70] sm:$0xff]
          %v3918 = vld [vmem:[%s8 + $0x78] sm:$0xff]
          %v3919 = vld [vmem:[%s9] sm:$0x1]
          %v3921 = vlaneseq
          %v3922 = vshrl.u32 %v3921, 7
          %v3923 = vsub.s32 0, %v3922
          %v3924 = vrot.slane %v3919, %v3923
          %3926 = vmatprep.subr.mxu0 0.0
          %3927 = vmatpush1.msra.mxu0 %v3903
          %3928 = vmatprep.subr.mxu0 0.0
          %3929 = vmatpush1.msra.mxu0 %v3904
          %3930 = vmatprep.subr.mxu0 0.0
          %3931 = vmatpush1.msra.mxu0 %v3905
          %3932 = vmatprep.subr.mxu0 0.0
          %3933 = vmatpush1.msra.mxu0 %v3906
          %3934 = vmatprep.subr.mxu0 0.0
          %3935 = vmatpush1.msra.mxu0 %v3907
          %3936 = vmatprep.subr.mxu0 0.0
          %3937 = vmatpush1.msra.mxu0 %v3908
          %3938 = vmatprep.subr.mxu0 0.0
          %3939 = vmatpush1.msra.mxu0 %v3909
          %3940 = vmatprep.subr.mxu0 0.0
          %3941 = vmatpush1.msra.mxu0 %v3910
          %3942 = vmatprep.subr.mxu0 0.0
          %3943 = vmatpush1.msra.mxu0 %v3911
          %3944 = vmatprep.subr.mxu0 0.0
          %3945 = vmatpush1.msra.mxu0 %v3912
          %3946 = vmatprep.subr.mxu0 0.0
          %3947 = vmatpush1.msra.mxu0 %v3913
          %3948 = vmatprep.subr.mxu0 0.0
          %3949 = vmatpush1.msra.mxu0 %v3914
          %3950 = vmatprep.subr.mxu0 0.0
          %3951 = vmatpush1.msra.mxu0 %v3915
          %3952 = vmatprep.subr.mxu0 0.0
          %3953 = vmatpush1.msra.mxu0 %v3916
          %3954 = vmatprep.subr.mxu0 0.0
          %3955 = vmatpush1.msra.mxu0 %v3917
          %3956 = vmatprep.subr.mxu0 0.0
          %3957 = vmatpush1.msra.mxu0 %v3918
          %3958 = vmatprep.subr.mxu0 0.0
          %3959 = vmatpush1.msra.mxu0 0.0
          %3960 = vmatprep.subr.mxu0 0.0
          %3961 = vmatpush1.msra.mxu0 0.0
          %3962 = vmatprep.subr.mxu0 0.0
          %3963 = vmatpush1.msra.mxu0 0.0
          %3964 = vmatprep.subr.mxu0 0.0
          %3965 = vmatpush1.msra.mxu0 0.0
          %3966 = vmatprep.subr.mxu0 0.0
          %3967 = vmatpush1.msra.mxu0 0.0
          %3968 = vmatprep.subr.mxu0 0.0
          %3969 = vmatpush1.msra.mxu0 0.0
          %3970 = vmatprep.subr.mxu0 0.0
          %3971 = vmatpush1.msra.mxu0 0.0
          %3972 = vmatprep.subr.mxu0 0.0
          %3973 = vmatpush1.msra.mxu0 0.0
          %3974 = vmatprep.subr.mxu0 0.0
          %3975 = vmatpush1.msra.mxu0 0.0
          %3976 = vmatprep.subr.mxu0 0.0
          %3977 = vmatpush1.msra.mxu0 0.0
          %3978 = vmatprep.subr.mxu0 0.0
          %3979 = vmatpush1.msra.mxu0 0.0
          %3980 = vmatprep.subr.mxu0 0.0
          %3981 = vmatpush1.msra.mxu0 0.0
          %3982 = vmatprep.subr.mxu0 0.0
          %3983 = vmatpush1.msra.mxu0 0.0
          %3984 = vmatprep.subr.mxu0 0.0
          %3985 = vmatpush1.msra.mxu0 0.0
          %3986 = vmatprep.subr.mxu0 0.0
          %3987 = vmatpush1.msra.mxu0 0.0
          %3988 = vmatprep.subr.mxu0 0.0
          %3989 = vmatpush1.msra.mxu0 0.0
          %3990 = vmatprep.mubr.f32.mxu0 0.0
          %3991 = vmatmul.mubr.f32.gmra.mrb[0].mxu0 %v3895
          %v3992 = vpop.f32.mrb[0].mxu0
          %v3993 = vadd.f32 %v3924, %v3992
          %v3994 = vpop.f32.mrb[0].mxu0
          %3995 = vmatprep.mubr.f32.mxu0 0.0
          %3996 = vmatmul.mubr.f32.gmra.mrb[0].mxu0 %v3899
          %v3997 = vpop.f32.mrb[0].mxu0
          %v3998 = vadd.f32 %v3924, %v3997
          %v3999 = vpop.f32.mrb[0].mxu0
          %4000 = vdwg.mxu0
          %v4001 = vsub.f32 0.0, %v3993
          %v4002 = vsub.f32 0.0, %v3998
          %v4003 = vmul.f32 %v4001, 1.442695
          %v4004 = vpow.pop %v4003
          %v4005 = vmul.f32 %v4002, 1.442695
          %v4006 = vpow.pop %v4005
          %v4007 = vadd.f32 %v4004, 1.0
          %v4008 = vadd.f32 %v4006, 1.0
          %v4009 = vrcp.pop %v4007
          %v4010 = vmul.f32 1.0, %v4009
          %v4011 = vrcp.pop %v4008
          %v4012 = vmul.f32 1.0, %v4011
          %v4013 = vmul.f32 %v3993, %v4010
          %v4014 = vmul.f32 %v3998, %v4012
          %v4015 = vld [vmem:[%s10] sm:$0xff]
          %v4016 = vld [vmem:[%s10 + $0x8] sm:$0xff]
          %v4017 = vld [vmem:[%s10 + $0x10] sm:$0xff]
          %v4018 = vld [vmem:[%s10 + $0x18] sm:$0xff]
          %v4019 = vld [vmem:[%s10 + $0x20] sm:$0xff]
          %v4020 = vld [vmem:[%s10 + $0x28] sm:$0xff]
          %v4021 = vld [vmem:[%s10 + $0x30] sm:$0xff]
          %v4022 = vld [vmem:[%s10 + $0x38] sm:$0xff]
          %v4023 = vld [vmem:[%s10 + $0x40] sm:$0xff]
          %v4024 = vld [vmem:[%s10 + $0x48] sm:$0xff]
          %v4025 = vld [vmem:[%s10 + $0x50] sm:$0xff]
          %v4026 = vld [vmem:[%s10 + $0x58] sm:$0xff]
          %v4027 = vld [vmem:[%s10 + $0x60] sm:$0xff]
          %v4028 = vld [vmem:[%s10 + $0x68] sm:$0xff]
          %v4029 = vld [vmem:[%s10 + $0x70] sm:$0xff]
          %v4030 = vld [vmem:[%s10 + $0x78] sm:$0xff]
          %4031 = vmatprep.subr.mxu0 0.0
          %4032 = vmatpush1.msra.mxu0 %v4015
          %4033 = vmatprep.subr.mxu0 0.0
          %4034 = vmatpush1.msra.mxu0 %v4016
          %4035 = vmatprep.subr.mxu0 0.0
          %4036 = vmatpush1.msra.mxu0 %v4017
          %4037 = vmatprep.subr.mxu0 0.0
          %4038 = vmatpush1.msra.mxu0 %v4018
          %4039 = vmatprep.subr.mxu0 0.0
          %4040 = vmatpush1.msra.mxu0 %v4019
          %4041 = vmatprep.subr.mxu0 0.0
          %4042 = vmatpush1.msra.mxu0 %v4020
          %4043 = vmatprep.subr.mxu0 0.0
          %4044 = vmatpush1.msra.mxu0 %v4021
          %4045 = vmatprep.subr.mxu0 0.0
          %4046 = vmatpush1.msra.mxu0 %v4022
          %4047 = vmatprep.subr.mxu0 0.0
          %4048 = vmatpush1.msra.mxu0 %v4023
          %4049 = vmatprep.subr.mxu0 0.0
          %4050 = vmatpush1.msra.mxu0 %v4024
          %4051 = vmatprep.subr.mxu0 0.0
          %4052 = vmatpush1.msra.mxu0 %v4025
          %4053 = vmatprep.subr.mxu0 0.0
          %4054 = vmatpush1.msra.mxu0 %v4026
          %4055 = vmatprep.subr.mxu0 0.0
          %4056 = vmatpush1.msra.mxu0 %v4027
          %4057 = vmatprep.subr.mxu0 0.0
          %4058 = vmatpush1.msra.mxu0 %v4028
          %4059 = vmatprep.subr.mxu0 0.0
          %4060 = vmatpush1.msra.mxu0 %v4029
          %4061 = vmatprep.subr.mxu0 0.0
          %4062 = vmatpush1.msra.mxu0 %v4030
          %4063 = vmatprep.subr.mxu0 0.0
          %4064 = vmatpush1.msra.mxu0 0.0
          %4065 = vmatprep.subr.mxu0 0.0
          %4066 = vmatpush1.msra.mxu0 0.0
          %4067 = vmatprep.subr.mxu0 0.0
          %4068 = vmatpush1.msra.mxu0 0.0
          %4069 = vmatprep.subr.mxu0 0.0
          %4070 = vmatpush1.msra.mxu0 0.0
          %4071 = vmatprep.subr.mxu0 0.0
          %4072 = vmatpush1.msra.mxu0 0.0
          %4073 = vmatprep.subr.mxu0 0.0
          %4074 = vmatpush1.msra.mxu0 0.0
          %4075 = vmatprep.subr.mxu0 0.0
          %4076 = vmatpush1.msra.mxu0 0.0
          %4077 = vmatprep.subr.mxu0 0.0
          %4078 = vmatpush1.msra.mxu0 0.0
          %4079 = vmatprep.subr.mxu0 0.0
          %4080 = vmatpush1.msra.mxu0 0.0
          %4081 = vmatprep.subr.mxu0 0.0
          %4082 = vmatpush1.msra.mxu0 0.0
          %4083 = vmatprep.subr.mxu0 0.0
          %4084 = vmatpush1.msra.mxu0 0.0
          %4085 = vmatprep.subr.mxu0 0.0
          %4086 = vmatpush1.msra.mxu0 0.0
          %4087 = vmatprep.subr.mxu0 0.0
          %4088 = vmatpush1.msra.mxu0 0.0
          %4089 = vmatprep.subr.mxu0 0.0
          %4090 = vmatpush1.msra.mxu0 0.0
          %4091 = vmatprep.subr.mxu0 0.0
          %4092 = vmatpush1.msra.mxu0 0.0
          %4093 = vmatprep.subr.mxu0 0.0
          %4094 = vmatpush1.msra.mxu0 0.0
          %4095 = vmatprep.mubr.f32.mxu0 0.0
          %4096 = vmatmul.mubr.f32.gmra.mrb[0].mxu0 %v4013
          %v4097 = vpop.f32.mrb[0].mxu0
          %v4098 = vadd.f32 0.0, %v4097
          %v4099 = vpop.f32.mrb[0].mxu0
          %4100 = vmatprep.mubr.f32.mxu0 0.0
          %4101 = vmatmul.mubr.f32.gmra.mrb[0].mxu0 %v4014
          %v4102 = vpop.f32.mrb[0].mxu0
          %v4103 = vadd.f32 0.0, %v4102
          %v4104 = vpop.f32.mrb[0].mxu0
          %4105 = vdwg.mxu0
          %v4106 = vadd.f32 %v3893, %v4098
          %v4107 = vadd.f32 %v3894, %v4103
          %v4108 = vld [vmem:[%s11] sm:$0x1]
          %v4110 = vlaneseq
          %v4111 = vshrl.u32 %v4110, 7
          %v4112 = vsub.s32 0, %v4111
          %v4113 = vrot.slane %v4108, %v4112
          %v4115 = vadd.f32 %v4106, %v4113
          %v4116 = vadd.f32 %v4107, %v4113
          %s4117 = scalar_lea.vmem %s8, 128
          %v4118 = vld [vmem:[%s4117] sm:$0xff]
          %v4119 = vld [vmem:[%s4117 + $0x8] sm:$0xff]
          %v4120 = vld [vmem:[%s4117 + $0x10] sm:$0xff]
          %v4121 = vld [vmem:[%s4117 + $0x18] sm:$0xff]
          %v4122 = vld [vmem:[%s4117 + $0x20] sm:$0xff]
          %v4123 = vld [vmem:[%s4117 + $0x28] sm:$0xff]
          %v4124 = vld [vmem:[%s4117 + $0x30] sm:$0xff]
          %v4125 = vld [vmem:[%s4117 + $0x38] sm:$0xff]
          %v4126 = vld [vmem:[%s4117 + $0x40] sm:$0xff]
          %v4127 = vld [vmem:[%s4117 + $0x48] sm:$0xff]
          %v4128 = vld [vmem:[%s4117 + $0x50] sm:$0xff]
          %v4129 = vld [vmem:[%s4117 + $0x58] sm:$0xff]
          %v4130 = vld [vmem:[%s4117 + $0x60] sm:$0xff]
          %v4131 = vld [vmem:[%s4117 + $0x68] sm:$0xff]
          %v4132 = vld [vmem:[%s4117 + $0x70] sm:$0xff]
          %v4133 = vld [vmem:[%s4117 + $0x78] sm:$0xff]
          %s4134 = scalar_lea.vmem %s9, 1
          %v4135 = vld [vmem:[%s4134] sm:$0x1]
          %v4137 = vlaneseq
          %v4138 = vshrl.u32 %v4137, 7
          %v4139 = vsub.s32 0, %v4138
          %v4140 = vrot.slane %v4135, %v4139
          %4142 = vmatprep.subr.mxu0 0.0
          %4143 = vmatpush1.msra.mxu0 %v4118
          %4144 = vmatprep.subr.mxu0 0.0
          %4145 = vmatpush1.msra.mxu0 %v4119
          %4146 = vmatprep.subr.mxu0 0.0
          %4147 = vmatpush1.msra.mxu0 %v4120
          %4148 = vmatprep.subr.mxu0 0.0
          %4149 = vmatpush1.msra.mxu0 %v4121
          %4150 = vmatprep.subr.mxu0 0.0
          %4151 = vmatpush1.msra.mxu0 %v4122
          %4152 = vmatprep.subr.mxu0 0.0
          %4153 = vmatpush1.msra.mxu0 %v4123
          %4154 = vmatprep.subr.mxu0 0.0
          %4155 = vmatpush1.msra.mxu0 %v4124
          %4156 = vmatprep.subr.mxu0 0.0
          %4157 = vmatpush1.msra.mxu0 %v4125
          %4158 = vmatprep.subr.mxu0 0.0
          %4159 = vmatpush1.msra.mxu0 %v4126
          %4160 = vmatprep.subr.mxu0 0.0
          %4161 = vmatpush1.msra.mxu0 %v4127
          %4162 = vmatprep.subr.mxu0 0.0
          %4163 = vmatpush1.msra.mxu0 %v4128
          %4164 = vmatprep.subr.mxu0 0.0
          %4165 = vmatpush1.msra.mxu0 %v4129
          %4166 = vmatprep.subr.mxu0 0.0
          %4167 = vmatpush1.msra.mxu0 %v4130
          %4168 = vmatprep.subr.mxu0 0.0
          %4169 = vmatpush1.msra.mxu0 %v4131
          %4170 = vmatprep.subr.mxu0 0.0
          %4171 = vmatpush1.msra.mxu0 %v4132
          %4172 = vmatprep.subr.mxu0 0.0
          %4173 = vmatpush1.msra.mxu0 %v4133
          %4174 = vmatprep.subr.mxu0 0.0
          %4175 = vmatpush1.msra.mxu0 0.0
          %4176 = vmatprep.subr.mxu0 0.0
          %4177 = vmatpush1.msra.mxu0 0.0
          %4178 = vmatprep.subr.mxu0 0.0
          %4179 = vmatpush1.msra.mxu0 0.0
          %4180 = vmatprep.subr.mxu0 0.0
          %4181 = vmatpush1.msra.mxu0 0.0
          %4182 = vmatprep.subr.mxu0 0.0
          %4183 = vmatpush1.msra.mxu0 0.0
          %4184 = vmatprep.subr.mxu0 0.0
          %4185 = vmatpush1.msra.mxu0 0.0
          %4186 = vmatprep.subr.mxu0 0.0
          %4187 = vmatpush1.msra.mxu0 0.0
          %4188 = vmatprep.subr.mxu0 0.0
          %4189 = vmatpush1.msra.mxu0 0.0
          %4190 = vmatprep.subr.mxu0 0.0
          %4191 = vmatpush1.msra.mxu0 0.0
          %4192 = vmatprep.subr.mxu0 0.0
          %4193 = vmatpush1.msra.mxu0 0.0
          %4194 = vmatprep.subr.mxu0 0.0
          %4195 = vmatpush1.msra.mxu0 0.0
          %4196 = vmatprep.subr.mxu0 0.0
          %4197 = vmatpush1.msra.mxu0 0.0
          %4198 = vmatprep.subr.mxu0 0.0
          %4199 = vmatpush1.msra.mxu0 0.0
          %4200 = vmatprep.subr.mxu0 0.0
          %4201 = vmatpush1.msra.mxu0 0.0
          %4202 = vmatprep.subr.mxu0 0.0
          %4203 = vmatpush1.msra.mxu0 0.0
          %4204 = vmatprep.subr.mxu0 0.0
          %4205 = vmatpush1.msra.mxu0 0.0
          %4206 = vmatprep.mubr.f32.mxu0 0.0
          %4207 = vmatmul.mubr.f32.gmra.mrb[0].mxu0 %v3896
          %v4208 = vpop.f32.mrb[0].mxu0
          %v4209 = vadd.f32 %v4140, %v4208
          %v4210 = vpop.f32.mrb[0].mxu0
          %4211 = vmatprep.mubr.f32.mxu0 0.0
          %4212 = vmatmul.mubr.f32.gmra.mrb[0].mxu0 %v3900
          %v4213 = vpop.f32.mrb[0].mxu0
          %v4214 = vadd.f32 %v4140, %v4213
          %v4215 = vpop.f32.mrb[0].mxu0
          %4216 = vdwg.mxu0
          %v4217 = vsub.f32 0.0, %v4209
          %v4218 = vsub.f32 0.0, %v4214
          %v4219 = vmul.f32 %v4217, 1.442695
          %v4220 = vpow.pop %v4219
          %v4221 = vmul.f32 %v4218, 1.442695
          %v4222 = vpow.pop %v4221
          %v4223 = vadd.f32 %v4220, 1.0
          %v4224 = vadd.f32 %v4222, 1.0
          %v4225 = vrcp.pop %v4223
          %v4226 = vmul.f32 1.0, %v4225
          %v4227 = vrcp.pop %v4224
          %v4228 = vmul.f32 1.0, %v4227
          %v4229 = vmul.f32 %v4209, %v4226
          %v4230 = vmul.f32 %v4214, %v4228
          %s4231 = scalar_lea.vmem %s10, 128
          %v4232 = vld [vmem:[%s4231] sm:$0xff]
          %v4233 = vld [vmem:[%s4231 + $0x8] sm:$0xff]
          %v4234 = vld [vmem:[%s4231 + $0x10] sm:$0xff]
          %v4235 = vld [vmem:[%s4231 + $0x18] sm:$0xff]
          %v4236 = vld [vmem:[%s4231 + $0x20] sm:$0xff]
          %v4237 = vld [vmem:[%s4231 + $0x28] sm:$0xff]
          %v4238 = vld [vmem:[%s4231 + $0x30] sm:$0xff]
          %v4239 = vld [vmem:[%s4231 + $0x38] sm:$0xff]
          %v4240 = vld [vmem:[%s4231 + $0x40] sm:$0xff]
          %v4241 = vld [vmem:[%s4231 + $0x48] sm:$0xff]
          %v4242 = vld [vmem:[%s4231 + $0x50] sm:$0xff]
          %v4243 = vld [vmem:[%s4231 + $0x58] sm:$0xff]
          %v4244 = vld [vmem:[%s4231 + $0x60] sm:$0xff]
          %v4245 = vld [vmem:[%s4231 + $0x68] sm:$0xff]
          %v4246 = vld [vmem:[%s4231 + $0x70] sm:$0xff]
          %v4247 = vld [vmem:[%s4231 + $0x78] sm:$0xff]
          %4248 = vmatprep.subr.mxu0 0.0
          %4249 = vmatpush1.msra.mxu0 %v4232
          %4250 = vmatprep.subr.mxu0 0.0
          %4251 = vmatpush1.msra.mxu0 %v4233
          %4252 = vmatprep.subr.mxu0 0.0
          %4253 = vmatpush1.msra.mxu0 %v4234
          %4254 = vmatprep.subr.mxu0 0.0
          %4255 = vmatpush1.msra.mxu0 %v4235
          %4256 = vmatprep.subr.mxu0 0.0
          %4257 = vmatpush1.msra.mxu0 %v4236
          %4258 = vmatprep.subr.mxu0 0.0
          %4259 = vmatpush1.msra.mxu0 %v4237
          %4260 = vmatprep.subr.mxu0 0.0
          %4261 = vmatpush1.msra.mxu0 %v4238
          %4262 = vmatprep.subr.mxu0 0.0
          %4263 = vmatpush1.msra.mxu0 %v4239
          %4264 = vmatprep.subr.mxu0 0.0
          %4265 = vmatpush1.msra.mxu0 %v4240
          %4266 = vmatprep.subr.mxu0 0.0
          %4267 = vmatpush1.msra.mxu0 %v4241
          %4268 = vmatprep.subr.mxu0 0.0
          %4269 = vmatpush1.msra.mxu0 %v4242
          %4270 = vmatprep.subr.mxu0 0.0
          %4271 = vmatpush1.msra.mxu0 %v4243
          %4272 = vmatprep.subr.mxu0 0.0
          %4273 = vmatpush1.msra.mxu0 %v4244
          %4274 = vmatprep.subr.mxu0 0.0
          %4275 = vmatpush1.msra.mxu0 %v4245
          %4276 = vmatprep.subr.mxu0 0.0
          %4277 = vmatpush1.msra.mxu0 %v4246
          %4278 = vmatprep.subr.mxu0 0.0
          %4279 = vmatpush1.msra.mxu0 %v4247
          %4280 = vmatprep.subr.mxu0 0.0
          %4281 = vmatpush1.msra.mxu0 0.0
          %4282 = vmatprep.subr.mxu0 0.0
          %4283 = vmatpush1.msra.mxu0 0.0
          %4284 = vmatprep.subr.mxu0 0.0
          %4285 = vmatpush1.msra.mxu0 0.0
          %4286 = vmatprep.subr.mxu0 0.0
          %4287 = vmatpush1.msra.mxu0 0.0
          %4288 = vmatprep.subr.mxu0 0.0
          %4289 = vmatpush1.msra.mxu0 0.0
          %4290 = vmatprep.subr.mxu0 0.0
          %4291 = vmatpush1.msra.mxu0 0.0
          %4292 = vmatprep.subr.mxu0 0.0
          %4293 = vmatpush1.msra.mxu0 0.0
          %4294 = vmatprep.subr.mxu0 0.0
          %4295 = vmatpush1.msra.mxu0 0.0
          %4296 = vmatprep.subr.mxu0 0.0
          %4297 = vmatpush1.msra.mxu0 0.0
          %4298 = vmatprep.subr.mxu0 0.0
          %4299 = vmatpush1.msra.mxu0 0.0
          %4300 = vmatprep.subr.mxu0 0.0
          %4301 = vmatpush1.msra.mxu0 0.0
          %4302 = vmatprep.subr.mxu0 0.0
          %4303 = vmatpush1.msra.mxu0 0.0
          %4304 = vmatprep.subr.mxu0 0.0
          %4305 = vmatpush1.msra.mxu0 0.0
          %4306 = vmatprep.subr.mxu0 0.0
          %4307 = vmatpush1.msra.mxu0 0.0
          %4308 = vmatprep.subr.mxu0 0.0
          %4309 = vmatpush1.msra.mxu0 0.0
          %4310 = vmatprep.subr.mxu0 0.0
          %4311 = vmatpush1.msra.mxu0 0.0
          %4312 = vmatprep.mubr.f32.mxu0 0.0
          %4313 = vmatmul.mubr.f32.gmra.mrb[0].mxu0 %v4229
          %v4314 = vpop.f32.mrb[0].mxu0
          %v4315 = vadd.f32 0.0, %v4314
          %v4316 = vpop.f32.mrb[0].mxu0
          %4317 = vmatprep.mubr.f32.mxu0 0.0
          %4318 = vmatmul.mubr.f32.gmra.mrb[0].mxu0 %v4230
          %v4319 = vpop.f32.mrb[0].mxu0
          %v4320 = vadd.f32 0.0, %v4319
          %v4321 = vpop.f32.mrb[0].mxu0
          %4322 = vdwg.mxu0
          %v4323 = vadd.f32 %v4115, %v4315
          %v4324 = vadd.f32 %v4116, %v4320
          %s4325 = scalar_lea.vmem %s11, 1
          %v4326 = vld [vmem:[%s4325] sm:$0x1]
          %v4328 = vlaneseq
          %v4329 = vshrl.u32 %v4328, 7
          %v4330 = vsub.s32 0, %v4329
          %v4331 = vrot.slane %v4326, %v4330
          %v4333 = vadd.f32 %v4323, %v4331
          %v4334 = vadd.f32 %v4324, %v4331
          %s4335 = scalar_lea.vmem %s8, 256
          %v4336 = vld [vmem:[%s4335] sm:$0xff]
          %v4337 = vld [vmem:[%s4335 + $0x8] sm:$0xff]
          %v4338 = vld [vmem:[%s4335 + $0x10] sm:$0xff]
          %v4339 = vld [vmem:[%s4335 + $0x18] sm:$0xff]
          %v4340 = vld [vmem:[%s4335 + $0x20] sm:$0xff]
          %v4341 = vld [vmem:[%s4335 + $0x28] sm:$0xff]
          %v4342 = vld [vmem:[%s4335 + $0x30] sm:$0xff]
          %v4343 = vld [vmem:[%s4335 + $0x38] sm:$0xff]
          %v4344 = vld [vmem:[%s4335 + $0x40] sm:$0xff]
          %v4345 = vld [vmem:[%s4335 + $0x48] sm:$0xff]
          %v4346 = vld [vmem:[%s4335 + $0x50] sm:$0xff]
          %v4347 = vld [vmem:[%s4335 + $0x58] sm:$0xff]
          %v4348 = vld [vmem:[%s4335 + $0x60] sm:$0xff]
          %v4349 = vld [vmem:[%s4335 + $0x68] sm:$0xff]
          %v4350 = vld [vmem:[%s4335 + $0x70] sm:$0xff]
          %v4351 = vld [vmem:[%s4335 + $0x78] sm:$0xff]
          %s4352 = scalar_lea.vmem %s9, 2
          %v4353 = vld [vmem:[%s4352] sm:$0x1]
          %v4355 = vlaneseq
          %v4356 = vshrl.u32 %v4355, 7
          %v4357 = vsub.s32 0, %v4356
          %v4358 = vrot.slane %v4353, %v4357
          %4360 = vmatprep.subr.mxu0 0.0
          %4361 = vmatpush1.msra.mxu0 %v4336
          %4362 = vmatprep.subr.mxu0 0.0
          %4363 = vmatpush1.msra.mxu0 %v4337
          %4364 = vmatprep.subr.mxu0 0.0
          %4365 = vmatpush1.msra.mxu0 %v4338
          %4366 = vmatprep.subr.mxu0 0.0
          %4367 = vmatpush1.msra.mxu0 %v4339
          %4368 = vmatprep.subr.mxu0 0.0
          %4369 = vmatpush1.msra.mxu0 %v4340
          %4370 = vmatprep.subr.mxu0 0.0
          %4371 = vmatpush1.msra.mxu0 %v4341
          %4372 = vmatprep.subr.mxu0 0.0
          %4373 = vmatpush1.msra.mxu0 %v4342
          %4374 = vmatprep.subr.mxu0 0.0
          %4375 = vmatpush1.msra.mxu0 %v4343
          %4376 = vmatprep.subr.mxu0 0.0
          %4377 = vmatpush1.msra.mxu0 %v4344
          %4378 = vmatprep.subr.mxu0 0.0
          %4379 = vmatpush1.msra.mxu0 %v4345
          %4380 = vmatprep.subr.mxu0 0.0
          %4381 = vmatpush1.msra.mxu0 %v4346
          %4382 = vmatprep.subr.mxu0 0.0
          %4383 = vmatpush1.msra.mxu0 %v4347
          %4384 = vmatprep.subr.mxu0 0.0
          %4385 = vmatpush1.msra.mxu0 %v4348
          %4386 = vmatprep.subr.mxu0 0.0
          %4387 = vmatpush1.msra.mxu0 %v4349
          %4388 = vmatprep.subr.mxu0 0.0
          %4389 = vmatpush1.msra.mxu0 %v4350
          %4390 = vmatprep.subr.mxu0 0.0
          %4391 = vmatpush1.msra.mxu0 %v4351
          %4392 = vmatprep.subr.mxu0 0.0
          %4393 = vmatpush1.msra.mxu0 0.0
          %4394 = vmatprep.subr.mxu0 0.0
          %4395 = vmatpush1.msra.mxu0 0.0
          %4396 = vmatprep.subr.mxu0 0.0
          %4397 = vmatpush1.msra.mxu0 0.0
          %4398 = vmatprep.subr.mxu0 0.0
          %4399 = vmatpush1.msra.mxu0 0.0
          %4400 = vmatprep.subr.mxu0 0.0
          %4401 = vmatpush1.msra.mxu0 0.0
          %4402 = vmatprep.subr.mxu0 0.0
          %4403 = vmatpush1.msra.mxu0 0.0
          %4404 = vmatprep.subr.mxu0 0.0
          %4405 = vmatpush1.msra.mxu0 0.0
          %4406 = vmatprep.subr.mxu0 0.0
          %4407 = vmatpush1.msra.mxu0 0.0
          %4408 = vmatprep.subr.mxu0 0.0
          %4409 = vmatpush1.msra.mxu0 0.0
          %4410 = vmatprep.subr.mxu0 0.0
          %4411 = vmatpush1.msra.mxu0 0.0
          %4412 = vmatprep.subr.mxu0 0.0
          %4413 = vmatpush1.msra.mxu0 0.0
          %4414 = vmatprep.subr.mxu0 0.0
          %4415 = vmatpush1.msra.mxu0 0.0
          %4416 = vmatprep.subr.mxu0 0.0
          %4417 = vmatpush1.msra.mxu0 0.0
          %4418 = vmatprep.subr.mxu0 0.0
          %4419 = vmatpush1.msra.mxu0 0.0
          %4420 = vmatprep.subr.mxu0 0.0
          %4421 = vmatpush1.msra.mxu0 0.0
          %4422 = vmatprep.subr.mxu0 0.0
          %4423 = vmatpush1.msra.mxu0 0.0
          %4424 = vmatprep.mubr.f32.mxu0 0.0
          %4425 = vmatmul.mubr.f32.gmra.mrb[0].mxu0 %v3897
          %v4426 = vpop.f32.mrb[0].mxu0
          %v4427 = vadd.f32 %v4358, %v4426
          %v4428 = vpop.f32.mrb[0].mxu0
          %4429 = vmatprep.mubr.f32.mxu0 0.0
          %4430 = vmatmul.mubr.f32.gmra.mrb[0].mxu0 %v3901
          %v4431 = vpop.f32.mrb[0].mxu0
          %v4432 = vadd.f32 %v4358, %v4431
          %v4433 = vpop.f32.mrb[0].mxu0
          %4434 = vdwg.mxu0
          %v4435 = vsub.f32 0.0, %v4427
          %v4436 = vsub.f32 0.0, %v4432
          %v4437 = vmul.f32 %v4435, 1.442695
          %v4438 = vpow.pop %v4437
          %v4439 = vmul.f32 %v4436, 1.442695
          %v4440 = vpow.pop %v4439
          %v4441 = vadd.f32 %v4438, 1.0
          %v4442 = vadd.f32 %v4440, 1.0
          %v4443 = vrcp.pop %v4441
          %v4444 = vmul.f32 1.0, %v4443
          %v4445 = vrcp.pop %v4442
          %v4446 = vmul.f32 1.0, %v4445
          %v4447 = vmul.f32 %v4427, %v4444
          %v4448 = vmul.f32 %v4432, %v4446
          %s4449 = scalar_lea.vmem %s10, 256
          %v4450 = vld [vmem:[%s4449] sm:$0xff]
          %v4451 = vld [vmem:[%s4449 + $0x8] sm:$0xff]
          %v4452 = vld [vmem:[%s4449 + $0x10] sm:$0xff]
          %v4453 = vld [vmem:[%s4449 + $0x18] sm:$0xff]
          %v4454 = vld [vmem:[%s4449 + $0x20] sm:$0xff]
          %v4455 = vld [vmem:[%s4449 + $0x28] sm:$0xff]
          %v4456 = vld [vmem:[%s4449 + $0x30] sm:$0xff]
          %v4457 = vld [vmem:[%s4449 + $0x38] sm:$0xff]
          %v4458 = vld [vmem:[%s4449 + $0x40] sm:$0xff]
          %v4459 = vld [vmem:[%s4449 + $0x48] sm:$0xff]
          %v4460 = vld [vmem:[%s4449 + $0x50] sm:$0xff]
          %v4461 = vld [vmem:[%s4449 + $0x58] sm:$0xff]
          %v4462 = vld [vmem:[%s4449 + $0x60] sm:$0xff]
          %v4463 = vld [vmem:[%s4449 + $0x68] sm:$0xff]
          %v4464 = vld [vmem:[%s4449 + $0x70] sm:$0xff]
          %v4465 = vld [vmem:[%s4449 + $0x78] sm:$0xff]
          %4466 = vmatprep.subr.mxu0 0.0
          %4467 = vmatpush1.msra.mxu0 %v4450
          %4468 = vmatprep.subr.mxu0 0.0
          %4469 = vmatpush1.msra.mxu0 %v4451
          %4470 = vmatprep.subr.mxu0 0.0
          %4471 = vmatpush1.msra.mxu0 %v4452
          %4472 = vmatprep.subr.mxu0 0.0
          %4473 = vmatpush1.msra.mxu0 %v4453
          %4474 = vmatprep.subr.mxu0 0.0
          %4475 = vmatpush1.msra.mxu0 %v4454
          %4476 = vmatprep.subr.mxu0 0.0
          %4477 = vmatpush1.msra.mxu0 %v4455
          %4478 = vmatprep.subr.mxu0 0.0
          %4479 = vmatpush1.msra.mxu0 %v4456
          %4480 = vmatprep.subr.mxu0 0.0
          %4481 = vmatpush1.msra.mxu0 %v4457
          %4482 = vmatprep.subr.mxu0 0.0
          %4483 = vmatpush1.msra.mxu0 %v4458
          %4484 = vmatprep.subr.mxu0 0.0
          %4485 = vmatpush1.msra.mxu0 %v4459
          %4486 = vmatprep.subr.mxu0 0.0
          %4487 = vmatpush1.msra.mxu0 %v4460
          %4488 = vmatprep.subr.mxu0 0.0
          %4489 = vmatpush1.msra.mxu0 %v4461
          %4490 = vmatprep.subr.mxu0 0.0
          %4491 = vmatpush1.msra.mxu0 %v4462
          %4492 = vmatprep.subr.mxu0 0.0
          %4493 = vmatpush1.msra.mxu0 %v4463
          %4494 = vmatprep.subr.mxu0 0.0
          %4495 = vmatpush1.msra.mxu0 %v4464
          %4496 = vmatprep.subr.mxu0 0.0
          %4497 = vmatpush1.msra.mxu0 %v4465
          %4498 = vmatprep.subr.mxu0 0.0
          %4499 = vmatpush1.msra.mxu0 0.0
          %4500 = vmatprep.subr.mxu0 0.0
          %4501 = vmatpush1.msra.mxu0 0.0
          %4502 = vmatprep.subr.mxu0 0.0
          %4503 = vmatpush1.msra.mxu0 0.0
          %4504 = vmatprep.subr.mxu0 0.0
          %4505 = vmatpush1.msra.mxu0 0.0
          %4506 = vmatprep.subr.mxu0 0.0
          %4507 = vmatpush1.msra.mxu0 0.0
          %4508 = vmatprep.subr.mxu0 0.0
          %4509 = vmatpush1.msra.mxu0 0.0
          %4510 = vmatprep.subr.mxu0 0.0
          %4511 = vmatpush1.msra.mxu0 0.0
          %4512 = vmatprep.subr.mxu0 0.0
          %4513 = vmatpush1.msra.mxu0 0.0
          %4514 = vmatprep.subr.mxu0 0.0
          %4515 = vmatpush1.msra.mxu0 0.0
          %4516 = vmatprep.subr.mxu0 0.0
          %4517 = vmatpush1.msra.mxu0 0.0
          %4518 = vmatprep.subr.mxu0 0.0
          %4519 = vmatpush1.msra.mxu0 0.0
          %4520 = vmatprep.subr.mxu0 0.0
          %4521 = vmatpush1.msra.mxu0 0.0
          %4522 = vmatprep.subr.mxu0 0.0
          %4523 = vmatpush1.msra.mxu0 0.0
          %4524 = vmatprep.subr.mxu0 0.0
          %4525 = vmatpush1.msra.mxu0 0.0
          %4526 = vmatprep.subr.mxu0 0.0
          %4527 = vmatpush1.msra.mxu0 0.0
          %4528 = vmatprep.subr.mxu0 0.0
          %4529 = vmatpush1.msra.mxu0 0.0
          %4530 = vmatprep.mubr.f32.mxu0 0.0
          %4531 = vmatmul.mubr.f32.gmra.mrb[0].mxu0 %v4447
          %v4532 = vpop.f32.mrb[0].mxu0
          %v4533 = vadd.f32 0.0, %v4532
          %v4534 = vpop.f32.mrb[0].mxu0
          %4535 = vmatprep.mubr.f32.mxu0 0.0
          %4536 = vmatmul.mubr.f32.gmra.mrb[0].mxu0 %v4448
          %v4537 = vpop.f32.mrb[0].mxu0
          %v4538 = vadd.f32 0.0, %v4537
          %v4539 = vpop.f32.mrb[0].mxu0
          %4540 = vdwg.mxu0
          %v4541 = vadd.f32 %v4333, %v4533
          %v4542 = vadd.f32 %v4334, %v4538
          %s4543 = scalar_lea.vmem %s11, 2
          %v4544 = vld [vmem:[%s4543] sm:$0x1]
          %v4546 = vlaneseq
          %v4547 = vshrl.u32 %v4546, 7
          %v4548 = vsub.s32 0, %v4547
          %v4549 = vrot.slane %v4544, %v4548
          %v4551 = vadd.f32 %v4541, %v4549
          %v4552 = vadd.f32 %v4542, %v4549
          %s4553 = scalar_lea.vmem %s8, 384
          %v4554 = vld [vmem:[%s4553] sm:$0xff]
          %v4555 = vld [vmem:[%s4553 + $0x8] sm:$0xff]
          %v4556 = vld [vmem:[%s4553 + $0x10] sm:$0xff]
          %v4557 = vld [vmem:[%s4553 + $0x18] sm:$0xff]
          %v4558 = vld [vmem:[%s4553 + $0x20] sm:$0xff]
          %v4559 = vld [vmem:[%s4553 + $0x28] sm:$0xff]
          %v4560 = vld [vmem:[%s4553 + $0x30] sm:$0xff]
          %v4561 = vld [vmem:[%s4553 + $0x38] sm:$0xff]
          %v4562 = vld [vmem:[%s4553 + $0x40] sm:$0xff]
          %v4563 = vld [vmem:[%s4553 + $0x48] sm:$0xff]
          %v4564 = vld [vmem:[%s4553 + $0x50] sm:$0xff]
          %v4565 = vld [vmem:[%s4553 + $0x58] sm:$0xff]
          %v4566 = vld [vmem:[%s4553 + $0x60] sm:$0xff]
          %v4567 = vld [vmem:[%s4553 + $0x68] sm:$0xff]
          %v4568 = vld [vmem:[%s4553 + $0x70] sm:$0xff]
          %v4569 = vld [vmem:[%s4553 + $0x78] sm:$0xff]
          %s4570 = scalar_lea.vmem %s9, 3
          %v4571 = vld [vmem:[%s4570] sm:$0x1]
          %v4573 = vlaneseq
          %v4574 = vshrl.u32 %v4573, 7
          %v4575 = vsub.s32 0, %v4574
          %v4576 = vrot.slane %v4571, %v4575
          %4578 = vmatprep.subr.mxu0 0.0
          %4579 = vmatpush1.msra.mxu0 %v4554
          %4580 = vmatprep.subr.mxu0 0.0
          %4581 = vmatpush1.msra.mxu0 %v4555
          %4582 = vmatprep.subr.mxu0 0.0
          %4583 = vmatpush1.msra.mxu0 %v4556
          %4584 = vmatprep.subr.mxu0 0.0
          %4585 = vmatpush1.msra.mxu0 %v4557
          %4586 = vmatprep.subr.mxu0 0.0
          %4587 = vmatpush1.msra.mxu0 %v4558
          %4588 = vmatprep.subr.mxu0 0.0
          %4589 = vmatpush1.msra.mxu0 %v4559
          %4590 = vmatprep.subr.mxu0 0.0
          %4591 = vmatpush1.msra.mxu0 %v4560
          %4592 = vmatprep.subr.mxu0 0.0
          %4593 = vmatpush1.msra.mxu0 %v4561
          %4594 = vmatprep.subr.mxu0 0.0
          %4595 = vmatpush1.msra.mxu0 %v4562
          %4596 = vmatprep.subr.mxu0 0.0
          %4597 = vmatpush1.msra.mxu0 %v4563
          %4598 = vmatprep.subr.mxu0 0.0
          %4599 = vmatpush1.msra.mxu0 %v4564
          %4600 = vmatprep.subr.mxu0 0.0
          %4601 = vmatpush1.msra.mxu0 %v4565
          %4602 = vmatprep.subr.mxu0 0.0
          %4603 = vmatpush1.msra.mxu0 %v4566
          %4604 = vmatprep.subr.mxu0 0.0
          %4605 = vmatpush1.msra.mxu0 %v4567
          %4606 = vmatprep.subr.mxu0 0.0
          %4607 = vmatpush1.msra.mxu0 %v4568
          %4608 = vmatprep.subr.mxu0 0.0
          %4609 = vmatpush1.msra.mxu0 %v4569
          %4610 = vmatprep.subr.mxu0 0.0
          %4611 = vmatpush1.msra.mxu0 0.0
          %4612 = vmatprep.subr.mxu0 0.0
          %4613 = vmatpush1.msra.mxu0 0.0
          %4614 = vmatprep.subr.mxu0 0.0
          %4615 = vmatpush1.msra.mxu0 0.0
          %4616 = vmatprep.subr.mxu0 0.0
          %4617 = vmatpush1.msra.mxu0 0.0
          %4618 = vmatprep.subr.mxu0 0.0
          %4619 = vmatpush1.msra.mxu0 0.0
          %4620 = vmatprep.subr.mxu0 0.0
          %4621 = vmatpush1.msra.mxu0 0.0
          %4622 = vmatprep.subr.mxu0 0.0
          %4623 = vmatpush1.msra.mxu0 0.0
          %4624 = vmatprep.subr.mxu0 0.0
          %4625 = vmatpush1.msra.mxu0 0.0
          %4626 = vmatprep.subr.mxu0 0.0
          %4627 = vmatpush1.msra.mxu0 0.0
          %4628 = vmatprep.subr.mxu0 0.0
          %4629 = vmatpush1.msra.mxu0 0.0
          %4630 = vmatprep.subr.mxu0 0.0
          %4631 = vmatpush1.msra.mxu0 0.0
          %4632 = vmatprep.subr.mxu0 0.0
          %4633 = vmatpush1.msra.mxu0 0.0
          %4634 = vmatprep.subr.mxu0 0.0
          %4635 = vmatpush1.msra.mxu0 0.0
          %4636 = vmatprep.subr.mxu0 0.0
          %4637 = vmatpush1.msra.mxu0 0.0
          %4638 = vmatprep.subr.mxu0 0.0
          %4639 = vmatpush1.msra.mxu0 0.0
          %4640 = vmatprep.subr.mxu0 0.0
          %4641 = vmatpush1.msra.mxu0 0.0
          %4642 = vmatprep.mubr.f32.mxu0 0.0
          %4643 = vmatmul.mubr.f32.gmra.mrb[0].mxu0 %v3898
          %v4644 = vpop.f32.mrb[0].mxu0
          %v4645 = vadd.f32 %v4576, %v4644
          %v4646 = vpop.f32.mrb[0].mxu0
          %4647 = vmatprep.mubr.f32.mxu0 0.0
          %4648 = vmatmul.mubr.f32.gmra.mrb[0].mxu0 %v3902
          %v4649 = vpop.f32.mrb[0].mxu0
          %v4650 = vadd.f32 %v4576, %v4649
          %v4651 = vpop.f32.mrb[0].mxu0
          %4652 = vdwg.mxu0
          %v4653 = vsub.f32 0.0, %v4645
          %v4654 = vsub.f32 0.0, %v4650
          %v4655 = vmul.f32 %v4653, 1.442695
          %v4656 = vpow.pop %v4655
          %v4657 = vmul.f32 %v4654, 1.442695
          %v4658 = vpow.pop %v4657
          %v4659 = vadd.f32 %v4656, 1.0
          %v4660 = vadd.f32 %v4658, 1.0
          %v4661 = vrcp.pop %v4659
          %v4662 = vmul.f32 1.0, %v4661
          %v4663 = vrcp.pop %v4660
          %v4664 = vmul.f32 1.0, %v4663
          %v4665 = vmul.f32 %v4645, %v4662
          %v4666 = vmul.f32 %v4650, %v4664
          %s4667 = scalar_lea.vmem %s10, 384
          %v4668 = vld [vmem:[%s4667] sm:$0xff]
          %v4669 = vld [vmem:[%s4667 + $0x8] sm:$0xff]
          %v4670 = vld [vmem:[%s4667 + $0x10] sm:$0xff]
          %v4671 = vld [vmem:[%s4667 + $0x18] sm:$0xff]
          %v4672 = vld [vmem:[%s4667 + $0x20] sm:$0xff]
          %v4673 = vld [vmem:[%s4667 + $0x28] sm:$0xff]
          %v4674 = vld [vmem:[%s4667 + $0x30] sm:$0xff]
          %v4675 = vld [vmem:[%s4667 + $0x38] sm:$0xff]
          %v4676 = vld [vmem:[%s4667 + $0x40] sm:$0xff]
          %v4677 = vld [vmem:[%s4667 + $0x48] sm:$0xff]
          %v4678 = vld [vmem:[%s4667 + $0x50] sm:$0xff]
          %v4679 = vld [vmem:[%s4667 + $0x58] sm:$0xff]
          %v4680 = vld [vmem:[%s4667 + $0x60] sm:$0xff]
          %v4681 = vld [vmem:[%s4667 + $0x68] sm:$0xff]
          %v4682 = vld [vmem:[%s4667 + $0x70] sm:$0xff]
          %v4683 = vld [vmem:[%s4667 + $0x78] sm:$0xff]
          %4684 = vmatprep.subr.mxu0 0.0
          %4685 = vmatpush1.msra.mxu0 %v4668
          %4686 = vmatprep.subr.mxu0 0.0
          %4687 = vmatpush1.msra.mxu0 %v4669
          %4688 = vmatprep.subr.mxu0 0.0
          %4689 = vmatpush1.msra.mxu0 %v4670
          %4690 = vmatprep.subr.mxu0 0.0
          %4691 = vmatpush1.msra.mxu0 %v4671
          %4692 = vmatprep.subr.mxu0 0.0
          %4693 = vmatpush1.msra.mxu0 %v4672
          %4694 = vmatprep.subr.mxu0 0.0
          %4695 = vmatpush1.msra.mxu0 %v4673
          %4696 = vmatprep.subr.mxu0 0.0
          %4697 = vmatpush1.msra.mxu0 %v4674
          %4698 = vmatprep.subr.mxu0 0.0
          %4699 = vmatpush1.msra.mxu0 %v4675
          %4700 = vmatprep.subr.mxu0 0.0
          %4701 = vmatpush1.msra.mxu0 %v4676
          %4702 = vmatprep.subr.mxu0 0.0
          %4703 = vmatpush1.msra.mxu0 %v4677
          %4704 = vmatprep.subr.mxu0 0.0
          %4705 = vmatpush1.msra.mxu0 %v4678
          %4706 = vmatprep.subr.mxu0 0.0
          %4707 = vmatpush1.msra.mxu0 %v4679
          %4708 = vmatprep.subr.mxu0 0.0
          %4709 = vmatpush1.msra.mxu0 %v4680
          %4710 = vmatprep.subr.mxu0 0.0
          %4711 = vmatpush1.msra.mxu0 %v4681
          %4712 = vmatprep.subr.mxu0 0.0
          %4713 = vmatpush1.msra.mxu0 %v4682
          %4714 = vmatprep.subr.mxu0 0.0
          %4715 = vmatpush1.msra.mxu0 %v4683
          %4716 = vmatprep.subr.mxu0 0.0
          %4717 = vmatpush1.msra.mxu0 0.0
          %4718 = vmatprep.subr.mxu0 0.0
          %4719 = vmatpush1.msra.mxu0 0.0
          %4720 = vmatprep.subr.mxu0 0.0
          %4721 = vmatpush1.msra.mxu0 0.0
          %4722 = vmatprep.subr.mxu0 0.0
          %4723 = vmatpush1.msra.mxu0 0.0
          %4724 = vmatprep.subr.mxu0 0.0
          %4725 = vmatpush1.msra.mxu0 0.0
          %4726 = vmatprep.subr.mxu0 0.0
          %4727 = vmatpush1.msra.mxu0 0.0
          %4728 = vmatprep.subr.mxu0 0.0
          %4729 = vmatpush1.msra.mxu0 0.0
          %4730 = vmatprep.subr.mxu0 0.0
          %4731 = vmatpush1.msra.mxu0 0.0
          %4732 = vmatprep.subr.mxu0 0.0
          %4733 = vmatpush1.msra.mxu0 0.0
          %4734 = vmatprep.subr.mxu0 0.0
          %4735 = vmatpush1.msra.mxu0 0.0
          %4736 = vmatprep.subr.mxu0 0.0
          %4737 = vmatpush1.msra.mxu0 0.0
          %4738 = vmatprep.subr.mxu0 0.0
          %4739 = vmatpush1.msra.mxu0 0.0
          %4740 = vmatprep.subr.mxu0 0.0
          %4741 = vmatpush1.msra.mxu0 0.0
          %4742 = vmatprep.subr.mxu0 0.0
          %4743 = vmatpush1.msra.mxu0 0.0
          %4744 = vmatprep.subr.mxu0 0.0
          %4745 = vmatpush1.msra.mxu0 0.0
          %4746 = vmatprep.subr.mxu0 0.0
          %4747 = vmatpush1.msra.mxu0 0.0
          %4748 = vmatprep.mubr.f32.mxu0 0.0
          %4749 = vmatmul.mubr.f32.gmra.mrb[0].mxu0 %v4665
          %v4750 = vpop.f32.mrb[0].mxu0
          %v4751 = vadd.f32 0.0, %v4750
          %v4752 = vpop.f32.mrb[0].mxu0
          %4753 = vmatprep.mubr.f32.mxu0 0.0
          %4754 = vmatmul.mubr.f32.gmra.mrb[0].mxu0 %v4666
          %v4755 = vpop.f32.mrb[0].mxu0
          %v4756 = vadd.f32 0.0, %v4755
          %v4757 = vpop.f32.mrb[0].mxu0
          %4758 = vdwg.mxu0
          %v4759 = vadd.f32 %v4551, %v4751
          %v4760 = vadd.f32 %v4552, %v4756
          %s4761 = scalar_lea.vmem %s11, 3
          %v4762 = vld [vmem:[%s4761] sm:$0x1]
          %v4764 = vlaneseq
          %v4765 = vshrl.u32 %v4764, 7
          %v4766 = vsub.s32 0, %v4765
          %v4767 = vrot.slane %v4762, %v4766
          %v4769 = vadd.f32 %v4759, %v4767
          %v4770 = vadd.f32 %v4760, %v4767
          %v4771 = vld [vmem:[%s501] sm:$0xff]
          %v4772 = vld [vmem:[%s501 + $0x8] sm:$0xff]
          %4774 = vset.pattern.permute.xlu0 0
          %4775 = vperm.xlu0 %4774, %v4771
          %v4776 = vpop.permute.xlu0 %4775
          %4779 = vset.pattern.permute.xlu0 0
          %4780 = vperm.xlu0 %4779, %v4772
          %v4781 = vpop.permute.xlu0 %4780
          %v4783 = vmul.f32 %v4769, %v4776
          %v4784 = vmul.f32 %v4770, %v4781
          %4785 = vst [vmem:[%s475] sm:$0xff] %v4783
          %4786 = vst [vmem:[%s475 + $0x8] sm:$0xff] %v4784
        $region76: #{dimenet_forward.1} parent=67 // pred_fallthru
          _
        %s4787 = sand.u32 %s322, 1
        %s4788 = scalar_lea.sflag [#allocation6], %s4787
        %s4789 = sand.u32 %s322, 1
        %s4790 = smul.addr %s4789, 16
        %s4791 = scalar_lea.vmem [#allocation5], %s4790
        // Predicated region
        $region77: #{dimenet_forward.1} parent=67 // pred_check
          %p4792 = pneg %p332
        $region78: #{dimenet_forward.1} parent=67 // pred_check_branch
          %4794 = sbr.rel (%p4792) target = $region80
        $region79: #{dimenet_forward.1} parent=67 // pred_region
          %s4795 = smul.u32 2, %s30
          %s4797 = ssub.s32 256, 256
          %4798 = vsyncadd %s4788, %s4797
          %s4799 = smul.addr %s4795, 128
          %s4800 = scalar_lea.hbm %s12, %s4799
          %s4801 = sshll.u32 %s4791, 4
          %s4802 = int_to_ptr.vmem [resolvable:$true] %s4801
          %4807 = dma.vmem_to_hbm [thread:$0]  %s4802, 256, %s4800, %s4788, 128, 128, 8
        $region80: #{dimenet_forward.1} parent=67 // pred_fallthru
          _
      $region68: #{dimenet_forward.1} parent=5 // pred_fallthru
        _
      %p4808 = scmp.le.s32.totalorder 2, %s21
      // Predicated region
      $region81: #{dimenet_forward.1} parent=5 // pred_check
        %p4809 = pneg %p4808
      $region82: #{dimenet_forward.1} parent=5 // pred_check_branch
        %4811 = sbr.rel (%p4809) target = $region84
      $region83: #{dimenet_forward.1} parent=5 // pred_region
        %s4812 = ssub.s32 %s21, 2
        // Predicated region
        $region85: #{dimenet_forward.1} parent=83 // pred_check
          %p4813 = pneg %p338
        $region86: #{dimenet_forward.1} parent=83 // pred_check_branch
          %4815 = sbr.rel (%p4813) target = $region88
        $region87: #{dimenet_forward.1} parent=83 // pred_region
          %s4816 = sand.u32 %s323, 1
          %s4817 = scalar_lea.sflag [#allocation6], %s4816
          %s4818 = sand.u32 %s323, 1
          %s4819 = smul.addr %s4818, 16
          %s4820 = scalar_lea.vmem [#allocation5], %s4819
          %4821 = dma.done %s4817, 256
        $region88: #{dimenet_forward.1} parent=83 // pred_fallthru
          _
      $region84: #{dimenet_forward.1} parent=5 // pred_fallthru
        _
    $region6: #{dimenet_forward.1} parent=1 // loop_footer
      %s25 = sadd.s32 1, %s21
    $region7: #{dimenet_forward.1} parent=1 // loop_footer_branch
      %20 = sbr.rel target = $region3
    $region8: #{dimenet_forward.1} parent=1 // loop_exit
      _
    %4822 = vsyncpa [#allocation6], 1
    %s4823 = scalar_lea.sflag [#allocation6], 1
    %4824 = vsyncpa %s4823, 1

</llo_original>
